<compile_context>
chip_gen: v5e
topology: v5e:2x2
jax: 0.10.0
libtpu: 0.0.40
codegen_flags: <defaults>
</compile_context>

<pallas_src>
import math
from functools import partial

import jax
import jax.numpy as jnp
import numpy as np
from jax import lax
from jax.experimental import pallas as pl
from jax.experimental.pallas import tpu as pltpu

_ACT_GAIN = math.sqrt(2.0)
_NEG_SLOPE = 0.2
_VMEM_LIMIT = 64 * 1024 * 1024          # explicit scoped-VMEM cap (safe on v5e/v6e/v7x)
_TILE_BUDGET = 12 * 1024 * 1024         # per-step double-buffered working-set budget


def _lrelu(v):
    # LeakyReLU(0.2) followed by the fused sqrt(2) gain (_FusedAct).
    return jnp.where(v >= 0, v, v * _NEG_SLOPE) * _ACT_GAIN


# ----------------------------------------------------------------------------- kernels
def _conv3x3_taps_kernel(x_ref, w_ref, b_ref, o_ref, *, W, act):
    """Implicit-im2col 3x3 conv on one row-tile of one batch element.

    x_ref: (3, Cin, (TH+2)*W)  dx-shifted, row-flattened padded input slab
    w_ref: (3, 3, Cout, Cin)   ELR-scaled taps [ky, kx]
    b_ref: (Cout, 1)
    o_ref: (Cout, TH*W)
    """
    tn = o_ref.shape[-1]
    acc = jnp.zeros(o_ref.shape, jnp.float32)
    for ky in range(3):
        for kx in range(3):
            tap = x_ref[kx, :, ky * W: ky * W + tn].astype(jnp.float32)
            acc = acc + jnp.dot(w_ref[ky, kx].astype(jnp.float32), tap,
                                preferred_element_type=jnp.float32)
    acc = acc + b_ref[...].astype(jnp.float32)
    if act:
        acc = _lrelu(acc)
    o_ref[...] = acc.astype(o_ref.dtype)


def _gemm_bias_act_kernel(p_ref, w_ref, b_ref, o_ref, *, act):
    """o = act(W @ p + b) on one lane tile.  p:(K,TN), w:(Cout,K), b:(Cout,1)."""
    acc = jnp.dot(w_ref[...].astype(jnp.float32), p_ref[...].astype(jnp.float32),
                  preferred_element_type=jnp.float32)
    acc = acc + b_ref[...].astype(jnp.float32)
    if act:
        acc = _lrelu(acc)
    o_ref[...] = acc.astype(o_ref.dtype)


def _block_tail_kernel(p_ref, xs_ref, w2_ref, ws_ref, b2_ref, o_ref):
    """DiscBlock tail (batch folded into lanes): conv2@even-pixels + 1x1 skip + add.

    p_ref : (9*Cmid, TN)  stride-2 patches of conv1 output
    xs_ref: (Cin, TN)     block input subsampled by 2
    w2_ref: (Cout, 9*Cmid), ws_ref: (Cout, Cin), b2_ref: (Cout, 1), o_ref: (Cout, TN)
    """
    h = jnp.dot(w2_ref[...].astype(jnp.float32), p_ref[...].astype(jnp.float32),
                preferred_element_type=jnp.float32)
    h = h + b2_ref[...].astype(jnp.float32)
    s = jnp.dot(ws_ref[...].astype(jnp.float32), xs_ref[...].astype(jnp.float32),
                preferred_element_type=jnp.float32)
    o_ref[...] = (h + s).astype(o_ref.dtype)


def _epilogue_kernel(x_ref, avg_ref, pat_ref, a_ref, wm_ref, bep_ref,
                     w1_ref, b1_ref, w2_ref, b2_ref, o_ref, *, eps):
    """Fused DiscEpilogue: MBSD + Conv3x3 + lrelu + flatten + fc1 + lrelu + fc2.

    Batch lives on the lane axis throughout (no in-kernel transposes).
    x_ref  : (C*P, B)       feature map, rows = (c, p)
    avg_ref: (B, B)         constant group-averaging matrix (MBSD groups)
    pat_ref: (P, 9C, B)     per-pixel im2col patches of the C regular channels
    a_ref  : (Cout, P)      per-pixel conv weight column for the constant std channel
    wm_ref : (Cout, 9C)     ELR-scaled conv weight (regular channels)
    bep_ref: (Cout, 1)      conv bias
    w1_ref : (P, N1, Cout)  ELR-scaled fc1 weight, per-pixel slices
    b1_ref : (N1, 1), w2_ref: (1, N1), b2_ref: (1, 1), o_ref: (1, B)
    """
    x = x_ref[...].astype(jnp.float32)                       # (CP, B)
    avg = avg_ref[...].astype(jnp.float32)                   # (B, B)
    # MiniBatchStdDev: per-batch scalar stat via a constant averaging GEMM.
    mu = jnp.dot(x, avg, preferred_element_type=jnp.float32)
    d = x - mu
    var = jnp.dot(d * d, avg, preferred_element_type=jnp.float32)
    sd = jnp.sqrt(var + eps)
    cp = x.shape[0]
    s = jnp.sum(sd, axis=0, keepdims=True) * (1.0 / cp)      # (1, B)

    npix = pat_ref.shape[0]
    n1 = b1_ref.shape[0]
    nb = x.shape[1]
    wm = wm_ref[...].astype(jnp.float32)
    acc1 = jnp.zeros((n1, nb), jnp.float32)
    for p in range(npix):
        g = jnp.dot(wm, pat_ref[p].astype(jnp.float32),
                    preferred_element_type=jnp.float32)       # (Cout, B)
        g = g + a_ref[:, p:p + 1].astype(jnp.float32) * s     # std-channel contribution
        g = g + bep_ref[...].astype(jnp.float32)
        g = _lrelu(g)
        acc1 = acc1 + jnp.dot(w1_ref[p].astype(jnp.float32), g,
                              preferred_element_type=jnp.float32)
    h1 = _lrelu(acc1 + b1_ref[...].astype(jnp.float32))
    out = jnp.dot(w2_ref[...].astype(jnp.float32), h1,
                  preferred_element_type=jnp.float32)
    out = out + b2_ref[...].astype(jnp.float32)
    o_ref[...] = out.astype(o_ref.dtype)


# ------------------------------------------------------------------------- helpers
def _im2col_3x3(x, stride=1):
    """x: (B,C,H,W) -> (B, 9C, (H//stride)*(W//stride)) patches for 3x3/pad=1 conv
    evaluated at every `stride`-th output pixel (layout only, left to XLA)."""
    B, C, H, W = x.shape
    xp = jnp.pad(x, ((0, 0), (0, 0), (1, 1), (1, 1)))
    taps = []
    for dy in range(3):
        for dx in range(3):
            taps.append(xp[:, :, dy:dy + H:stride, dx:dx + W:stride])
    p = jnp.concatenate(taps, axis=1)
    Ho, Wo = H // stride, W // stride
    return p.reshape(B, 9 * C, Ho * Wo)


def _pick_row_tile(H, W, cin, cout, budget=_TILE_BUDGET):
    """Largest row tile TH (divisor of H, TH*W lane-aligned) fitting the VMEM budget."""
    valid = [th for th in range(1, H + 1)
             if H % th == 0 and (th == H or (th * W) % 128 == 0)]
    valid.sort(reverse=True)
    for th in valid:
        need = 4 * 2 * (3 * cin * (th + 2) * W + cout * th * W)   # f32, double-buffered
        if need <= budget:
            return th
    return valid[-1]


def _pick_lane_tile(nf, bytes_per_lane, budget=_TILE_BUDGET):
    """Lane-tile size for folded GEMMs: full when small, else a 128-multiple."""
    if nf <= 1024:
        return nf
    cap = (budget // max(1, 2 * bytes_per_lane)) // 128 * 128
    cap = max(128, cap)
    return int(min(cap, (nf // 128) * 128))


def _inimage_mask(hb, wb):
    """(9, hb*wb) 0/1 mask: tap t=(ky,kx) lands inside the image at pixel p=(y,x)."""
    m = np.zeros((9, hb * wb), np.float32)
    for ky in range(3):
        for kx in range(3):
            for y in range(hb):
                for x in range(wb):
                    if 0 <= y + ky - 1 < hb and 0 <= x + kx - 1 < wb:
                        m[ky * 3 + kx, y * wb + x] = 1.0
    return jnp.asarray(m)


# ------------------------------------------------------------------------- wrappers
def _conv3x3_taps(x, w, b, scale, act):
    """Implicit-im2col path (large feature maps): 3 dx-shifted slabs, row tiling."""
    B, Cin, H, W = x.shape
    Cout = w.shape[0]
    th = _pick_row_tile(H, W, Cin, Cout)
    nt = H // th
    Lh = (th + 2) * W

    xp = jnp.pad(x, ((0, 0), (0, 0), (1, 1), (1, 1)))                 # (B,Cin,H+2,W+2)
    xdx = jnp.stack([xp[:, :, :, dx:dx + W] for dx in range(3)], axis=1)  # (B,3,Cin,H+2,W)
    slabs = jnp.stack([xdx[:, :, :, t * th:t * th + th + 2, :] for t in range(nt)],
                      axis=1)                                          # (B,nt,3,Cin,th+2,W)
    slabs = slabs.reshape(B * nt, 3, Cin, Lh)

    wk = jnp.transpose(w, (2, 3, 0, 1)) * scale                        # (3,3,Cout,Cin)
    b2 = b.reshape(Cout, 1)

    out = pl.pallas_call(
        partial(_conv3x3_taps_kernel, W=W, act=act),
        out_shape=jax.ShapeDtypeStruct((B, Cout, H * W), x.dtype),
        grid=(B, nt),
        in_specs=[
            pl.BlockSpec((None, 3, Cin, Lh), lambda bi, ti: (bi * nt + ti, 0, 0, 0)),
            pl.BlockSpec((3, 3, Cout, Cin), lambda bi, ti: (0, 0, 0, 0)),
            pl.BlockSpec((Cout, 1), lambda bi, ti: (0, 0)),
        ],
        out_specs=pl.BlockSpec((None, Cout, th * W), lambda bi, ti: (bi, 0, ti)),
        compiler_params=pltpu.CompilerParams(
            dimension_semantics=("parallel", "parallel"),
            vmem_limit_bytes=_VMEM_LIMIT),
    )(slabs, wk, b2)
    return out.reshape(B, Cout, H, W)


def _conv3x3_folded(x, w, b, scale, act):
    """Small-spatial path: wrapper im2col, batch folded into the lane axis."""
    B, Cin, H, W = x.shape
    Cout = w.shape[0]
    N = H * W
    Nf = B * N
    K = 9 * Cin
    p = _im2col_3x3(x, stride=1)                                       # (B, K, N)
    p = jnp.transpose(p, (1, 0, 2)).reshape(K, Nf)
    w9 = jnp.transpose(w, (0, 2, 3, 1)).reshape(Cout, K) * scale
    b2 = b.reshape(Cout, 1)
    tn = _pick_lane_tile(Nf, 4 * (K + Cout))
    out = pl.pallas_call(
        partial(_gemm_bias_act_kernel, act=act),
        out_shape=jax.ShapeDtypeStruct((Cout, Nf), x.dtype),
        grid=(pl.cdiv(Nf, tn),),
        in_specs=[
            pl.BlockSpec((K, tn), lambda n: (0, n)),
            pl.BlockSpec((Cout, K), lambda n: (0, 0)),
            pl.BlockSpec((Cout, 1), lambda n: (0, 0)),
        ],
        out_specs=pl.BlockSpec((Cout, tn), lambda n: (0, n)),
        compiler_params=pltpu.CompilerParams(
            dimension_semantics=("parallel",), vmem_limit_bytes=_VMEM_LIMIT),
    )(p, w9, b2)
    return out.reshape(Cout, B, N).transpose(1, 0, 2).reshape(B, Cout, H, W)


def conv3x3_act(x, w, b, *, act):
    """ELR Conv2d(Cin, Cout, 3, 1, 1) (+ optional lrelu*sqrt(2))."""
    _, Cin, H, W = x.shape
    scale = 1.0 / math.sqrt(Cin * 9)
    if H * W >= 256:
        return _conv3x3_taps(x, w, b, scale, act)
    return _conv3x3_folded(x, w, b, scale, act)


def disc_block_tail(h1, x_in, w2, b2, ws):
    """Fused: conv2(h1)[:, :, ::2, ::2] + skip(x_in)[:, :, ::2, ::2] (batch folded)."""
    B, Cmid, H, W = h1.shape
    Cin = x_in.shape[1]
    Cout = w2.shape[0]
    Ho, Wo = H // 2, W // 2
    Nd = Ho * Wo
    Nf = B * Nd
    Km = 9 * Cmid

    p = _im2col_3x3(h1, stride=2)                                      # (B, Km, Nd)
    p = jnp.transpose(p, (1, 0, 2)).reshape(Km, Nf)
    xs = x_in[:, :, ::2, ::2].reshape(B, Cin, Nd)
    xs = jnp.transpose(xs, (1, 0, 2)).reshape(Cin, Nf)

    w2f = jnp.transpose(w2, (0, 2, 3, 1)).reshape(Cout, Km) * (1.0 / math.sqrt(Cmid * 9))
    wsf = ws.reshape(Cout, Cin) * (1.0 / math.sqrt(Cin))
    b2r = b2.reshape(Cout, 1)

    tn = _pick_lane_tile(Nf, 4 * (Km + Cin + Cout))
    out = pl.pallas_call(
        _block_tail_kernel,
        out_shape=jax.ShapeDtypeStruct((Cout, Nf), h1.dtype),
        grid=(pl.cdiv(Nf, tn),),
        in_specs=[
            pl.BlockSpec((Km, tn), lambda n: (0, n)),
            pl.BlockSpec((Cin, tn), lambda n: (0, n)),
            pl.BlockSpec((Cout, Km), lambda n: (0, 0)),
            pl.BlockSpec((Cout, Cin), lambda n: (0, 0)),
            pl.BlockSpec((Cout, 1), lambda n: (0, 0)),
        ],
        out_specs=pl.BlockSpec((Cout, tn), lambda n: (0, n)),
        compiler_params=pltpu.CompilerParams(
            dimension_semantics=("parallel",), vmem_limit_bytes=_VMEM_LIMIT),
    )(p, xs, w2f, wsf, b2r)
    return out.reshape(Cout, B, Nd).transpose(1, 0, 2).reshape(B, Cout, Ho, Wo)


def disc_epilogue(h, w_ep, b_ep, w1, b1, w2, b2, *, bottom, mbsd_groups, eps=1e-4):
    """Fused epilogue: MBSD + Conv3x3 + lrelu + (identity GAP) + flatten + fc1 + fc2."""
    B, C, H, W = h.shape
    # AdaptiveAvgPool2d(bottom): identity because final spatial == bottom by construction.
    assert H == bottom and W == bottom
    P = H * W
    Cout = w_ep.shape[0]
    N1 = w1.shape[0]

    groups = mbsd_groups if B % mbsd_groups == 0 else B
    M = B // groups
    idx = jnp.arange(B)
    avg = ((idx[:, None] % M) == (idx[None, :] % M)).astype(jnp.float32) / groups  # (B,B)

    xT = h.reshape(B, C * P).T                                          # (C*P, B)
    pat = _im2col_3x3(h, stride=1)                                      # (B, 9C, P)
    patT = jnp.transpose(pat, (2, 1, 0))                                # (P, 9C, B)

    scale_ep = 1.0 / math.sqrt((C + 1) * 9)
    w_main = jnp.transpose(w_ep[:, :C], (0, 2, 3, 1)).reshape(Cout, 9 * C) * scale_ep
    w_std = w_ep[:, C, :, :].reshape(Cout, 9)
    a_mat = (w_std @ _inimage_mask(H, W)) * scale_ep                    # (Cout, P)
    bep = b_ep.reshape(Cout, 1)

    scale1 = 1.0 / math.sqrt(C * P)
    w1r = jnp.transpose((w1 * scale1).reshape(N1, Cout, P), (2, 0, 1))  # (P, N1, Cout)
    b1r = b1.reshape(N1, 1)
    scale2 = 1.0 / math.sqrt(N1)
    w2r = (w2 * scale2).reshape(1, N1)
    b2r = b2.reshape(1, 1)

    out = pl.pallas_call(
        partial(_epilogue_kernel, eps=eps),
        out_shape=jax.ShapeDtypeStruct((1, B), h.dtype),
        grid=(1,),
        in_specs=[
            pl.BlockSpec((C * P, B), lambda i: (0, 0)),
            pl.BlockSpec((B, B), lambda i: (0, 0)),
            pl.BlockSpec((P, 9 * C, B), lambda i: (0, 0, 0)),
            pl.BlockSpec((Cout, P), lambda i: (0, 0)),
            pl.BlockSpec((Cout, 9 * C), lambda i: (0, 0)),
            pl.BlockSpec((Cout, 1), lambda i: (0, 0)),
            pl.BlockSpec((P, N1, Cout), lambda i: (0, 0, 0)),
            pl.BlockSpec((N1, 1), lambda i: (0, 0)),
            pl.BlockSpec((1, N1), lambda i: (0, 0)),
            pl.BlockSpec((1, 1), lambda i: (0, 0)),
        ],
        out_specs=pl.BlockSpec((1, B), lambda i: (0, 0)),
        compiler_params=pltpu.CompilerParams(
            dimension_semantics=("arbitrary",), vmem_limit_bytes=_VMEM_LIMIT),
    )(xT, avg, patT, a_mat, w_main, bep, w1r, b1r, w2r, b2r)
    return out.T                                                         # (B, 1)


# ------------------------------------------------------------------ model params/forward
def init_params(key, *, image_size, bottom, in_channels, channels, max_channels):
    num_downs = int(math.log2(image_size) - math.log2(bottom))
    keys = iter(jax.random.split(key, 2 + 5 * num_downs + 2 + 4))

    def nrm(shape, s=1.0):
        return jax.random.normal(next(keys), shape, dtype=jnp.float32) * s

    params = {}
    och = channels
    params["in_w"] = nrm((och, in_channels, 3, 3))
    params["in_b"] = nrm((och,), 0.1)
    blocks = []
    ch = channels
    for _ in range(num_downs):
        ch *= 2
        ich, och = och, min(max_channels, ch)
        blocks.append(dict(
            w1=nrm((och, ich, 3, 3)), b1=nrm((och,), 0.1),
            w2=nrm((och, och, 3, 3)), b2=nrm((och,), 0.1),
            ws=nrm((och, ich, 1, 1)),
        ))
    params["blocks"] = blocks
    params["ep_w"] = nrm((och, och + 1, 3, 3))
    params["ep_b"] = nrm((och,), 0.1)
    params["fc1_w"] = nrm((och, och * bottom * bottom))
    params["fc1_b"] = nrm((och,), 0.1)
    params["fc2_w"] = nrm((1, och))
    params["fc2_b"] = nrm((1,), 0.1)
    return params


def discriminator_forward(params, x, *, bottom=2, mbsd_groups=4):
    # For bf16 on v6e/v7x, cast params and x to bfloat16 before calling; kernels keep
    # f32 accumulation and store in the activation dtype.
    h = conv3x3_act(x, params["in_w"], params["in_b"], act=True)
    for blk in params["blocks"]:
        h1 = conv3x3_act(h, blk["w1"], blk["b1"], act=True)
        h = disc_block_tail(h1, h, blk["w2"], blk["b2"], blk["ws"])
    out = disc_epilogue(h, params["ep_w"], params["ep_b"],
                        params["fc1_w"], params["fc1_b"],
                        params["fc2_w"], params["fc2_b"],
                        bottom=bottom, mbsd_groups=mbsd_groups)
    return out


# ----------------------------------------------------------------- pure-JAX reference
def _ref_forward(params, x, *, bottom=2, mbsd_groups=4, eps=1e-4):
    P = jax.lax.Precision.HIGHEST

    def conv(x, w, b, pad, act):
        s = 1.0 / math.sqrt(w[0].size)
        y = lax.conv_general_dilated(x * s, w, (1, 1), pad,
                                     dimension_numbers=("NCHW", "OIHW", "NCHW"),
                                     precision=P)
        if b is not None:
            y = y + b.reshape(1, -1, 1, 1)
        if act:
            y = jnp.where(y >= 0, y, 0.2 * y) * math.sqrt(2.0)
        return y

    def lin(x, w, b, act):
        s = 1.0 / math.sqrt(w.shape[1])
        y = jnp.dot(x * s, w.T, precision=P) + b
        if act:
            y = jnp.where(y >= 0, y, 0.2 * y) * math.sqrt(2.0)
        return y

    h = conv(x, params["in_w"], params["in_b"], "SAME", True)
    for blk in params["blocks"]:
        m = conv(h, blk["w1"], blk["b1"], "SAME", True)
        m = conv(m, blk["w2"], blk["b2"], "SAME", False)
        s = conv(h, blk["ws"], None, "VALID", False)
        h = m[:, :, ::2, ::2] + s[:, :, ::2, ::2]
    B, C, H, W = h.shape
    g = mbsd_groups if B % mbsd_groups == 0 else B
    y = h.reshape(g, B // g, C, H, W)
    y = y - y.mean(axis=0, keepdims=True)
    y = (y ** 2).mean(axis=0)
    y = jnp.sqrt(y + eps)
    y = y.mean(axis=(1, 2, 3), keepdims=True)
    y = jnp.tile(y, (g, 1, H, W))
    h = jnp.concatenate([h, y], axis=1)
    h = conv(h, params["ep_w"], params["ep_b"], "SAME", True)
    h = h.reshape(B, -1)
    h = lin(h, params["fc1_w"], params["fc1_b"], True)
    return lin(h, params["fc2_w"], params["fc2_b"], False)


if __name__ == "__main__":
    key = jax.random.PRNGKey(0)
    kp, kx = jax.random.split(key)

    # Small config: image 16x16, bottom 2 -> 3 DiscBlocks, channels 4->8->16->32.
    # Exercises every kernel: taps-conv (16x16 layers), folded conv (8x8/4x4 layers),
    # fused block tail, fused epilogue.
    IMAGE, BOTTOM, IN_CH, CH, MAX_CH, MBSD_G = 16, 2, 3, 4, 32, 4
    B = 2

    params = init_params(kp, image_size=IMAGE, bottom=BOTTOM, in_channels=IN_CH,
                         channels=CH, max_channels=MAX_CH)
    x = jax.random.normal(kx, (B, IN_CH, IMAGE, IMAGE), dtype=jnp.float32)

    fwd = jax.jit(partial(discriminator_forward, bottom=BOTTOM, mbsd_groups=MBSD_G))
    out = jax.block_until_ready(fwd(params, x))

    ref = jax.block_until_ready(
        _ref_forward(params, x, bottom=BOTTOM, mbsd_groups=MBSD_G))

    assert out.shape == (B, 1)
    assert out.dtype == jnp.float32
    assert bool(jnp.all(jnp.isfinite(out)))
    assert bool(jnp.allclose(out, ref, rtol=1e-2, atol=1e-2)), (out, ref)

    print("KERNEL_OK")
</pallas_src>

<mosaic_0001>
module attributes {stable_mosaic.version = 11 : i64} {
  func.func @_conv3x3_taps_kernel(%arg0: i32, %arg1: i32, %arg2: memref<1x3x3x288xf32, #tpu.memory_space<vmem>>, %arg3: memref<3x3x4x3xf32, #tpu.memory_space<vmem>>, %arg4: memref<4x1xf32, #tpu.memory_space<vmem>>, %arg5: memref<1x4x256xf32, #tpu.memory_space<vmem>>) attributes {dimension_semantics = [#tpu.dimension_semantics<parallel>, #tpu.dimension_semantics<parallel>], iteration_bounds = array<i64: 2, 1>, scalar_prefetch = 0 : i64, scratch_operands = 0 : i64, tpu.core_type = #tpu.core_type<tc>, window_params = [{transform_indices = @transform_0, window_bounds = array<i64: 1, 3, 3, 288>}, {pipeline_mode = #tpu.pipeline_mode<synchronous>, transform_indices = @transform_1, window_bounds = array<i64: 3, 3, 4, 3>}, {pipeline_mode = #tpu.pipeline_mode<synchronous>, transform_indices = @transform_2, window_bounds = array<i64: 4, 1>}, {transform_indices = @transform_3, window_bounds = array<i64: 1, 4, 256>}]} {
    %cst = arith.constant 0.000000e+00 : f32
    %0 = vector.broadcast %cst : f32 to vector<4x256xf32>
    %c0 = arith.constant 0 : index
    %c0_0 = arith.constant 0 : index
    %c0_1 = arith.constant 0 : index
    %c0_2 = arith.constant 0 : index
    %1 = vector.load %arg2[%c0, %c0_0, %c0_1, %c0_2] : memref<1x3x3x288xf32, #tpu.memory_space<vmem>>, vector<1x1x3x256xf32>
    %2 = vector.shape_cast %1 : vector<1x1x3x256xf32> to vector<3x256xf32>
    %c0_3 = arith.constant 0 : index
    %c0_4 = arith.constant 0 : index
    %c0_5 = arith.constant 0 : index
    %c0_6 = arith.constant 0 : index
    %3 = vector.load %arg3[%c0_3, %c0_4, %c0_5, %c0_6] : memref<3x3x4x3xf32, #tpu.memory_space<vmem>>, vector<1x1x4x3xf32>
    %4 = vector.shape_cast %3 : vector<1x1x4x3xf32> to vector<4x3xf32>
    %cst_7 = arith.constant dense<0.000000e+00> : vector<4x256xf32>
    %5 = tpu.matmul %4, %2, %cst_7 {dimension_numbers = #tpu.dot_dimension_numbers<[1], [0], [0], [1], [0, 0, 1, 1], [], []>} : vector<4x3xf32>, vector<3x256xf32>, vector<4x256xf32> -> vector<4x256xf32>
    %6 = arith.addf %0, %5 : vector<4x256xf32>
    %c0_8 = arith.constant 0 : index
    %c1 = arith.constant 1 : index
    %c0_9 = arith.constant 0 : index
    %c0_10 = arith.constant 0 : index
    %7 = vector.load %arg2[%c0_8, %c1, %c0_9, %c0_10] : memref<1x3x3x288xf32, #tpu.memory_space<vmem>>, vector<1x1x3x256xf32>
    %8 = vector.shape_cast %7 : vector<1x1x3x256xf32> to vector<3x256xf32>
    %c0_11 = arith.constant 0 : index
    %c1_12 = arith.constant 1 : index
    %c0_13 = arith.constant 0 : index
    %c0_14 = arith.constant 0 : index
    %9 = vector.load %arg3[%c0_11, %c1_12, %c0_13, %c0_14] : memref<3x3x4x3xf32, #tpu.memory_space<vmem>>, vector<1x1x4x3xf32>
    %10 = vector.shape_cast %9 : vector<1x1x4x3xf32> to vector<4x3xf32>
    %cst_15 = arith.constant dense<0.000000e+00> : vector<4x256xf32>
    %11 = tpu.matmul %10, %8, %cst_15 {dimension_numbers = #tpu.dot_dimension_numbers<[1], [0], [0], [1], [0, 0, 1, 1], [], []>} : vector<4x3xf32>, vector<3x256xf32>, vector<4x256xf32> -> vector<4x256xf32>
    %12 = arith.addf %6, %11 : vector<4x256xf32>
    %c0_16 = arith.constant 0 : index
    %c2 = arith.constant 2 : index
    %c0_17 = arith.constant 0 : index
    %c0_18 = arith.constant 0 : index
    %13 = vector.load %arg2[%c0_16, %c2, %c0_17, %c0_18] : memref<1x3x3x288xf32, #tpu.memory_space<vmem>>, vector<1x1x3x256xf32>
    %14 = vector.shape_cast %13 : vector<1x1x3x256xf32> to vector<3x256xf32>
    %c0_19 = arith.constant 0 : index
    %c2_20 = arith.constant 2 : index
    %c0_21 = arith.constant 0 : index
    %c0_22 = arith.constant 0 : index
    %15 = vector.load %arg3[%c0_19, %c2_20, %c0_21, %c0_22] : memref<3x3x4x3xf32, #tpu.memory_space<vmem>>, vector<1x1x4x3xf32>
    %16 = vector.shape_cast %15 : vector<1x1x4x3xf32> to vector<4x3xf32>
    %cst_23 = arith.constant dense<0.000000e+00> : vector<4x256xf32>
    %17 = tpu.matmul %16, %14, %cst_23 {dimension_numbers = #tpu.dot_dimension_numbers<[1], [0], [0], [1], [0, 0, 1, 1], [], []>} : vector<4x3xf32>, vector<3x256xf32>, vector<4x256xf32> -> vector<4x256xf32>
    %18 = arith.addf %12, %17 : vector<4x256xf32>
    %c0_24 = arith.constant 0 : index
    %c0_25 = arith.constant 0 : index
    %c0_26 = arith.constant 0 : index
    %c16 = arith.constant 16 : index
    %19 = vector.load %arg2[%c0_24, %c0_25, %c0_26, %c16] : memref<1x3x3x288xf32, #tpu.memory_space<vmem>>, vector<1x1x3x256xf32>
    %20 = vector.shape_cast %19 : vector<1x1x3x256xf32> to vector<3x256xf32>
    %c1_27 = arith.constant 1 : index
    %c0_28 = arith.constant 0 : index
    %c0_29 = arith.constant 0 : index
    %c0_30 = arith.constant 0 : index
    %21 = vector.load %arg3[%c1_27, %c0_28, %c0_29, %c0_30] : memref<3x3x4x3xf32, #tpu.memory_space<vmem>>, vector<1x1x4x3xf32>
    %22 = vector.shape_cast %21 : vector<1x1x4x3xf32> to vector<4x3xf32>
    %cst_31 = arith.constant dense<0.000000e+00> : vector<4x256xf32>
    %23 = tpu.matmul %22, %20, %cst_31 {dimension_numbers = #tpu.dot_dimension_numbers<[1], [0], [0], [1], [0, 0, 1, 1], [], []>} : vector<4x3xf32>, vector<3x256xf32>, vector<4x256xf32> -> vector<4x256xf32>
    %24 = arith.addf %18, %23 : vector<4x256xf32>
    %c0_32 = arith.constant 0 : index
    %c1_33 = arith.constant 1 : index
    %c0_34 = arith.constant 0 : index
    %c16_35 = arith.constant 16 : index
    %25 = vector.load %arg2[%c0_32, %c1_33, %c0_34, %c16_35] : memref<1x3x3x288xf32, #tpu.memory_space<vmem>>, vector<1x1x3x256xf32>
    %26 = vector.shape_cast %25 : vector<1x1x3x256xf32> to vector<3x256xf32>
    %c1_36 = arith.constant 1 : index
    %c1_37 = arith.constant 1 : index
    %c0_38 = arith.constant 0 : index
    %c0_39 = arith.constant 0 : index
    %27 = vector.load %arg3[%c1_36, %c1_37, %c0_38, %c0_39] : memref<3x3x4x3xf32, #tpu.memory_space<vmem>>, vector<1x1x4x3xf32>
    %28 = vector.shape_cast %27 : vector<1x1x4x3xf32> to vector<4x3xf32>
    %cst_40 = arith.constant dense<0.000000e+00> : vector<4x256xf32>
    %29 = tpu.matmul %28, %26, %cst_40 {dimension_numbers = #tpu.dot_dimension_numbers<[1], [0], [0], [1], [0, 0, 1, 1], [], []>} : vector<4x3xf32>, vector<3x256xf32>, vector<4x256xf32> -> vector<4x256xf32>
    %30 = arith.addf %24, %29 : vector<4x256xf32>
    %c0_41 = arith.constant 0 : index
    %c2_42 = arith.constant 2 : index
    %c0_43 = arith.constant 0 : index
    %c16_44 = arith.constant 16 : index
    %31 = vector.load %arg2[%c0_41, %c2_42, %c0_43, %c16_44] : memref<1x3x3x288xf32, #tpu.memory_space<vmem>>, vector<1x1x3x256xf32>
    %32 = vector.shape_cast %31 : vector<1x1x3x256xf32> to vector<3x256xf32>
    %c1_45 = arith.constant 1 : index
    %c2_46 = arith.constant 2 : index
    %c0_47 = arith.constant 0 : index
    %c0_48 = arith.constant 0 : index
    %33 = vector.load %arg3[%c1_45, %c2_46, %c0_47, %c0_48] : memref<3x3x4x3xf32, #tpu.memory_space<vmem>>, vector<1x1x4x3xf32>
    %34 = vector.shape_cast %33 : vector<1x1x4x3xf32> to vector<4x3xf32>
    %cst_49 = arith.constant dense<0.000000e+00> : vector<4x256xf32>
    %35 = tpu.matmul %34, %32, %cst_49 {dimension_numbers = #tpu.dot_dimension_numbers<[1], [0], [0], [1], [0, 0, 1, 1], [], []>} : vector<4x3xf32>, vector<3x256xf32>, vector<4x256xf32> -> vector<4x256xf32>
    %36 = arith.addf %30, %35 : vector<4x256xf32>
    %c0_50 = arith.constant 0 : index
    %c0_51 = arith.constant 0 : index
    %c0_52 = arith.constant 0 : index
    %c32 = arith.constant 32 : index
    %37 = vector.load %arg2[%c0_50, %c0_51, %c0_52, %c32] : memref<1x3x3x288xf32, #tpu.memory_space<vmem>>, vector<1x1x3x256xf32>
    %38 = vector.shape_cast %37 : vector<1x1x3x256xf32> to vector<3x256xf32>
    %c2_53 = arith.constant 2 : index
    %c0_54 = arith.constant 0 : index
    %c0_55 = arith.constant 0 : index
    %c0_56 = arith.constant 0 : index
    %39 = vector.load %arg3[%c2_53, %c0_54, %c0_55, %c0_56] : memref<3x3x4x3xf32, #tpu.memory_space<vmem>>, vector<1x1x4x3xf32>
    %40 = vector.shape_cast %39 : vector<1x1x4x3xf32> to vector<4x3xf32>
    %cst_57 = arith.constant dense<0.000000e+00> : vector<4x256xf32>
    %41 = tpu.matmul %40, %38, %cst_57 {dimension_numbers = #tpu.dot_dimension_numbers<[1], [0], [0], [1], [0, 0, 1, 1], [], []>} : vector<4x3xf32>, vector<3x256xf32>, vector<4x256xf32> -> vector<4x256xf32>
    %42 = arith.addf %36, %41 : vector<4x256xf32>
    %c0_58 = arith.constant 0 : index
    %c1_59 = arith.constant 1 : index
    %c0_60 = arith.constant 0 : index
    %c32_61 = arith.constant 32 : index
    %43 = vector.load %arg2[%c0_58, %c1_59, %c0_60, %c32_61] : memref<1x3x3x288xf32, #tpu.memory_space<vmem>>, vector<1x1x3x256xf32>
    %44 = vector.shape_cast %43 : vector<1x1x3x256xf32> to vector<3x256xf32>
    %c2_62 = arith.constant 2 : index
    %c1_63 = arith.constant 1 : index
    %c0_64 = arith.constant 0 : index
    %c0_65 = arith.constant 0 : index
    %45 = vector.load %arg3[%c2_62, %c1_63, %c0_64, %c0_65] : memref<3x3x4x3xf32, #tpu.memory_space<vmem>>, vector<1x1x4x3xf32>
    %46 = vector.shape_cast %45 : vector<1x1x4x3xf32> to vector<4x3xf32>
    %cst_66 = arith.constant dense<0.000000e+00> : vector<4x256xf32>
    %47 = tpu.matmul %46, %44, %cst_66 {dimension_numbers = #tpu.dot_dimension_numbers<[1], [0], [0], [1], [0, 0, 1, 1], [], []>} : vector<4x3xf32>, vector<3x256xf32>, vector<4x256xf32> -> vector<4x256xf32>
    %48 = arith.addf %42, %47 : vector<4x256xf32>
    %c0_67 = arith.constant 0 : index
    %c2_68 = arith.constant 2 : index
    %c0_69 = arith.constant 0 : index
    %c32_70 = arith.constant 32 : index
    %49 = vector.load %arg2[%c0_67, %c2_68, %c0_69, %c32_70] : memref<1x3x3x288xf32, #tpu.memory_space<vmem>>, vector<1x1x3x256xf32>
    %50 = vector.shape_cast %49 : vector<1x1x3x256xf32> to vector<3x256xf32>
    %c2_71 = arith.constant 2 : index
    %c2_72 = arith.constant 2 : index
    %c0_73 = arith.constant 0 : index
    %c0_74 = arith.constant 0 : index
    %51 = vector.load %arg3[%c2_71, %c2_72, %c0_73, %c0_74] : memref<3x3x4x3xf32, #tpu.memory_space<vmem>>, vector<1x1x4x3xf32>
    %52 = vector.shape_cast %51 : vector<1x1x4x3xf32> to vector<4x3xf32>
    %cst_75 = arith.constant dense<0.000000e+00> : vector<4x256xf32>
    %53 = tpu.matmul %52, %50, %cst_75 {dimension_numbers = #tpu.dot_dimension_numbers<[1], [0], [0], [1], [0, 0, 1, 1], [], []>} : vector<4x3xf32>, vector<3x256xf32>, vector<4x256xf32> -> vector<4x256xf32>
    %54 = arith.addf %48, %53 : vector<4x256xf32>
    %c0_76 = arith.constant 0 : index
    %c0_77 = arith.constant 0 : index
    %55 = vector.load %arg4[%c0_76, %c0_77] : memref<4x1xf32, #tpu.memory_space<vmem>>, vector<4x1xf32>
    %56 = vector.broadcast %55 : vector<4x1xf32> to vector<4x256xf32>
    %57 = arith.addf %54, %56 : vector<4x256xf32>
    %cst_78 = arith.constant 0.000000e+00 : f32
    %58 = vector.broadcast %cst_78 : f32 to vector<4x256xf32>
    %59 = arith.cmpf oge, %57, %58 : vector<4x256xf32>
    %cst_79 = arith.constant 2.000000e-01 : f32
    %60 = vector.broadcast %cst_79 : f32 to vector<4x256xf32>
    %61 = arith.mulf %57, %60 : vector<4x256xf32>
    %62 = arith.select %59, %57, %61 : vector<4x256xi1>, vector<4x256xf32>
    %cst_80 = arith.constant 1.41421354 : f32
    %63 = vector.broadcast %cst_80 : f32 to vector<4x256xf32>
    %64 = arith.mulf %62, %63 : vector<4x256xf32>
    %c0_81 = arith.constant 0 : index
    %c0_82 = arith.constant 0 : index
    %c0_83 = arith.constant 0 : index
    %65 = vector.load %arg5[%c0_81, %c0_82, %c0_83] : memref<1x4x256xf32, #tpu.memory_space<vmem>>, vector<1x4x256xf32>
    %66 = vector.shape_cast %65 : vector<1x4x256xf32> to vector<4x256xf32>
    %67 = vector.shape_cast %64 : vector<4x256xf32> to vector<1x4x256xf32>
    tpu.vector_store %arg5[%c0_81, %c0_82, %c0_83], %67 {strides = array<i32>} : memref<1x4x256xf32, #tpu.memory_space<vmem>>, vector<1x4x256xf32>,
    return
  }
  func.func @transform_0(%arg0: i32, %arg1: i32) -> (i32, i32, i32, i32) {
    %c1_i32 = arith.constant 1 : i32
    %0 = arith.muli %arg0, %c1_i32 : i32
    %1 = arith.addi %0, %arg1 : i32
    %c0_i32 = arith.constant 0 : i32
    %c0_i32_0 = arith.constant 0 : i32
    %c0_i32_1 = arith.constant 0 : i32
    %c0_i32_2 = arith.constant 0 : i32
    return %1, %c0_i32, %c0_i32_0, %c0_i32_1 : i32, i32, i32, i32
  }
  func.func @transform_1(%arg0: i32, %arg1: i32) -> (i32, i32, i32, i32) {
    %c0_i32 = arith.constant 0 : i32
    %c0_i32_0 = arith.constant 0 : i32
    %c0_i32_1 = arith.constant 0 : i32
    %c0_i32_2 = arith.constant 0 : i32
    %c0_i32_3 = arith.constant 0 : i32
    return %c0_i32, %c0_i32_0, %c0_i32_1, %c0_i32_2 : i32, i32, i32, i32
  }
  func.func @transform_2(%arg0: i32, %arg1: i32) -> (i32, i32) {
    %c0_i32 = arith.constant 0 : i32
    %c0_i32_0 = arith.constant 0 : i32
    %c0_i32_1 = arith.constant 0 : i32
    return %c0_i32, %c0_i32_0 : i32, i32
  }
  func.func @transform_3(%arg0: i32, %arg1: i32) -> (i32, i32, i32) {
    %c0_i32 = arith.constant 0 : i32
    %c0_i32_0 = arith.constant 0 : i32
    return %arg0, %c0_i32, %arg1 : i32, i32, i32
  }
}

module attributes {stable_mosaic.version = 11 : i64} {
  func.func @_conv3x3_taps_kernel(%arg0: i32, %arg1: i32, %arg2: memref<1x3x4x288xf32, #tpu.memory_space<vmem>>, %arg3: memref<3x3x8x4xf32, #tpu.memory_space<vmem>>, %arg4: memref<8x1xf32, #tpu.memory_space<vmem>>, %arg5: memref<1x8x256xf32, #tpu.memory_space<vmem>>) attributes {dimension_semantics = [#tpu.dimension_semantics<parallel>, #tpu.dimension_semantics<parallel>], iteration_bounds = array<i64: 2, 1>, scalar_prefetch = 0 : i64, scratch_operands = 0 : i64, tpu.core_type = #tpu.core_type<tc>, window_params = [{transform_indices = @transform_0, window_bounds = array<i64: 1, 3, 4, 288>}, {pipeline_mode = #tpu.pipeline_mode<synchronous>, transform_indices = @transform_1, window_bounds = array<i64: 3, 3, 8, 4>}, {pipeline_mode = #tpu.pipeline_mode<synchronous>, transform_indices = @transform_2, window_bounds = array<i64: 8, 1>}, {transform_indices = @transform_3, window_bounds = array<i64: 1, 8, 256>}]} {
    %cst = arith.constant 0.000000e+00 : f32
    %0 = vector.broadcast %cst : f32 to vector<8x256xf32>
    %c0 = arith.constant 0 : index
    %c0_0 = arith.constant 0 : index
    %c0_1 = arith.constant 0 : index
    %c0_2 = arith.constant 0 : index
    %1 = vector.load %arg2[%c0, %c0_0, %c0_1, %c0_2] : memref<1x3x4x288xf32, #tpu.memory_space<vmem>>, vector<1x1x4x256xf32>
    %2 = vector.shape_cast %1 : vector<1x1x4x256xf32> to vector<4x256xf32>
    %c0_3 = arith.constant 0 : index
    %c0_4 = arith.constant 0 : index
    %c0_5 = arith.constant 0 : index
    %c0_6 = arith.constant 0 : index
    %3 = vector.load %arg3[%c0_3, %c0_4, %c0_5, %c0_6] : memref<3x3x8x4xf32, #tpu.memory_space<vmem>>, vector<1x1x8x4xf32>
    %4 = vector.shape_cast %3 : vector<1x1x8x4xf32> to vector<8x4xf32>
    %cst_7 = arith.constant dense<0.000000e+00> : vector<8x256xf32>
    %5 = tpu.matmul %4, %2, %cst_7 {dimension_numbers = #tpu.dot_dimension_numbers<[1], [0], [0], [1], [0, 0, 1, 1], [], []>} : vector<8x4xf32>, vector<4x256xf32>, vector<8x256xf32> -> vector<8x256xf32>
    %6 = arith.addf %0, %5 : vector<8x256xf32>
    %c0_8 = arith.constant 0 : index
    %c1 = arith.constant 1 : index
    %c0_9 = arith.constant 0 : index
    %c0_10 = arith.constant 0 : index
    %7 = vector.load %arg2[%c0_8, %c1, %c0_9, %c0_10] : memref<1x3x4x288xf32, #tpu.memory_space<vmem>>, vector<1x1x4x256xf32>
    %8 = vector.shape_cast %7 : vector<1x1x4x256xf32> to vector<4x256xf32>
    %c0_11 = arith.constant 0 : index
    %c1_12 = arith.constant 1 : index
    %c0_13 = arith.constant 0 : index
    %c0_14 = arith.constant 0 : index
    %9 = vector.load %arg3[%c0_11, %c1_12, %c0_13, %c0_14] : memref<3x3x8x4xf32, #tpu.memory_space<vmem>>, vector<1x1x8x4xf32>
    %10 = vector.shape_cast %9 : vector<1x1x8x4xf32> to vector<8x4xf32>
    %cst_15 = arith.constant dense<0.000000e+00> : vector<8x256xf32>
    %11 = tpu.matmul %10, %8, %cst_15 {dimension_numbers = #tpu.dot_dimension_numbers<[1], [0], [0], [1], [0, 0, 1, 1], [], []>} : vector<8x4xf32>, vector<4x256xf32>, vector<8x256xf32> -> vector<8x256xf32>
    %12 = arith.addf %6, %11 : vector<8x256xf32>
    %c0_16 = arith.constant 0 : index
    %c2 = arith.constant 2 : index
    %c0_17 = arith.constant 0 : index
    %c0_18 = arith.constant 0 : index
    %13 = vector.load %arg2[%c0_16, %c2, %c0_17, %c0_18] : memref<1x3x4x288xf32, #tpu.memory_space<vmem>>, vector<1x1x4x256xf32>
    %14 = vector.shape_cast %13 : vector<1x1x4x256xf32> to vector<4x256xf32>
    %c0_19 = arith.constant 0 : index
    %c2_20 = arith.constant 2 : index
    %c0_21 = arith.constant 0 : index
    %c0_22 = arith.constant 0 : index
    %15 = vector.load %arg3[%c0_19, %c2_20, %c0_21, %c0_22] : memref<3x3x8x4xf32, #tpu.memory_space<vmem>>, vector<1x1x8x4xf32>
    %16 = vector.shape_cast %15 : vector<1x1x8x4xf32> to vector<8x4xf32>
    %cst_23 = arith.constant dense<0.000000e+00> : vector<8x256xf32>
    %17 = tpu.matmul %16, %14, %cst_23 {dimension_numbers = #tpu.dot_dimension_numbers<[1], [0], [0], [1], [0, 0, 1, 1], [], []>} : vector<8x4xf32>, vector<4x256xf32>, vector<8x256xf32> -> vector<8x256xf32>
    %18 = arith.addf %12, %17 : vector<8x256xf32>
    %c0_24 = arith.constant 0 : index
    %c0_25 = arith.constant 0 : index
    %c0_26 = arith.constant 0 : index
    %c16 = arith.constant 16 : index
    %19 = vector.load %arg2[%c0_24, %c0_25, %c0_26, %c16] : memref<1x3x4x288xf32, #tpu.memory_space<vmem>>, vector<1x1x4x256xf32>
    %20 = vector.shape_cast %19 : vector<1x1x4x256xf32> to vector<4x256xf32>
    %c1_27 = arith.constant 1 : index
    %c0_28 = arith.constant 0 : index
    %c0_29 = arith.constant 0 : index
    %c0_30 = arith.constant 0 : index
    %21 = vector.load %arg3[%c1_27, %c0_28, %c0_29, %c0_30] : memref<3x3x8x4xf32, #tpu.memory_space<vmem>>, vector<1x1x8x4xf32>
    %22 = vector.shape_cast %21 : vector<1x1x8x4xf32> to vector<8x4xf32>
    %cst_31 = arith.constant dense<0.000000e+00> : vector<8x256xf32>
    %23 = tpu.matmul %22, %20, %cst_31 {dimension_numbers = #tpu.dot_dimension_numbers<[1], [0], [0], [1], [0, 0, 1, 1], [], []>} : vector<8x4xf32>, vector<4x256xf32>, vector<8x256xf32> -> vector<8x256xf32>
    %24 = arith.addf %18, %23 : vector<8x256xf32>
    %c0_32 = arith.constant 0 : index
    %c1_33 = arith.constant 1 : index
    %c0_34 = arith.constant 0 : index
    %c16_35 = arith.constant 16 : index
    %25 = vector.load %arg2[%c0_32, %c1_33, %c0_34, %c16_35] : memref<1x3x4x288xf32, #tpu.memory_space<vmem>>, vector<1x1x4x256xf32>
    %26 = vector.shape_cast %25 : vector<1x1x4x256xf32> to vector<4x256xf32>
    %c1_36 = arith.constant 1 : index
    %c1_37 = arith.constant 1 : index
    %c0_38 = arith.constant 0 : index
    %c0_39 = arith.constant 0 : index
    %27 = vector.load %arg3[%c1_36, %c1_37, %c0_38, %c0_39] : memref<3x3x8x4xf32, #tpu.memory_space<vmem>>, vector<1x1x8x4xf32>
    %28 = vector.shape_cast %27 : vector<1x1x8x4xf32> to vector<8x4xf32>
    %cst_40 = arith.constant dense<0.000000e+00> : vector<8x256xf32>
    %29 = tpu.matmul %28, %26, %cst_40 {dimension_numbers = #tpu.dot_dimension_numbers<[1], [0], [0], [1], [0, 0, 1, 1], [], []>} : vector<8x4xf32>, vector<4x256xf32>, vector<8x256xf32> -> vector<8x256xf32>
    %30 = arith.addf %24, %29 : vector<8x256xf32>
    %c0_41 = arith.constant 0 : index
    %c2_42 = arith.constant 2 : index
    %c0_43 = arith.constant 0 : index
    %c16_44 = arith.constant 16 : index
    %31 = vector.load %arg2[%c0_41, %c2_42, %c0_43, %c16_44] : memref<1x3x4x288xf32, #tpu.memory_space<vmem>>, vector<1x1x4x256xf32>
    %32 = vector.shape_cast %31 : vector<1x1x4x256xf32> to vector<4x256xf32>
    %c1_45 = arith.constant 1 : index
    %c2_46 = arith.constant 2 : index
    %c0_47 = arith.constant 0 : index
    %c0_48 = arith.constant 0 : index
    %33 = vector.load %arg3[%c1_45, %c2_46, %c0_47, %c0_48] : memref<3x3x8x4xf32, #tpu.memory_space<vmem>>, vector<1x1x8x4xf32>
    %34 = vector.shape_cast %33 : vector<1x1x8x4xf32> to vector<8x4xf32>
    %cst_49 = arith.constant dense<0.000000e+00> : vector<8x256xf32>
    %35 = tpu.matmul %34, %32, %cst_49 {dimension_numbers = #tpu.dot_dimension_numbers<[1], [0], [0], [1], [0, 0, 1, 1], [], []>} : vector<8x4xf32>, vector<4x256xf32>, vector<8x256xf32> -> vector<8x256xf32>
    %36 = arith.addf %30, %35 : vector<8x256xf32>
    %c0_50 = arith.constant 0 : index
    %c0_51 = arith.constant 0 : index
    %c0_52 = arith.constant 0 : index
    %c32 = arith.constant 32 : index
    %37 = vector.load %arg2[%c0_50, %c0_51, %c0_52, %c32] : memref<1x3x4x288xf32, #tpu.memory_space<vmem>>, vector<1x1x4x256xf32>
    %38 = vector.shape_cast %37 : vector<1x1x4x256xf32> to vector<4x256xf32>
    %c2_53 = arith.constant 2 : index
    %c0_54 = arith.constant 0 : index
    %c0_55 = arith.constant 0 : index
    %c0_56 = arith.constant 0 : index
    %39 = vector.load %arg3[%c2_53, %c0_54, %c0_55, %c0_56] : memref<3x3x8x4xf32, #tpu.memory_space<vmem>>, vector<1x1x8x4xf32>
    %40 = vector.shape_cast %39 : vector<1x1x8x4xf32> to vector<8x4xf32>
    %cst_57 = arith.constant dense<0.000000e+00> : vector<8x256xf32>
    %41 = tpu.matmul %40, %38, %cst_57 {dimension_numbers = #tpu.dot_dimension_numbers<[1], [0], [0], [1], [0, 0, 1, 1], [], []>} : vector<8x4xf32>, vector<4x256xf32>, vector<8x256xf32> -> vector<8x256xf32>
    %42 = arith.addf %36, %41 : vector<8x256xf32>
    %c0_58 = arith.constant 0 : index
    %c1_59 = arith.constant 1 : index
    %c0_60 = arith.constant 0 : index
    %c32_61 = arith.constant 32 : index
    %43 = vector.load %arg2[%c0_58, %c1_59, %c0_60, %c32_61] : memref<1x3x4x288xf32, #tpu.memory_space<vmem>>, vector<1x1x4x256xf32>
    %44 = vector.shape_cast %43 : vector<1x1x4x256xf32> to vector<4x256xf32>
    %c2_62 = arith.constant 2 : index
    %c1_63 = arith.constant 1 : index
    %c0_64 = arith.constant 0 : index
    %c0_65 = arith.constant 0 : index
    %45 = vector.load %arg3[%c2_62, %c1_63, %c0_64, %c0_65] : memref<3x3x8x4xf32, #tpu.memory_space<vmem>>, vector<1x1x8x4xf32>
    %46 = vector.shape_cast %45 : vector<1x1x8x4xf32> to vector<8x4xf32>
    %cst_66 = arith.constant dense<0.000000e+00> : vector<8x256xf32>
    %47 = tpu.matmul %46, %44, %cst_66 {dimension_numbers = #tpu.dot_dimension_numbers<[1], [0], [0], [1], [0, 0, 1, 1], [], []>} : vector<8x4xf32>, vector<4x256xf32>, vector<8x256xf32> -> vector<8x256xf32>
    %48 = arith.addf %42, %47 : vector<8x256xf32>
    %c0_67 = arith.constant 0 : index
    %c2_68 = arith.constant 2 : index
    %c0_69 = arith.constant 0 : index
    %c32_70 = arith.constant 32 : index
    %49 = vector.load %arg2[%c0_67, %c2_68, %c0_69, %c32_70] : memref<1x3x4x288xf32, #tpu.memory_space<vmem>>, vector<1x1x4x256xf32>
    %50 = vector.shape_cast %49 : vector<1x1x4x256xf32> to vector<4x256xf32>
    %c2_71 = arith.constant 2 : index
    %c2_72 = arith.constant 2 : index
    %c0_73 = arith.constant 0 : index
    %c0_74 = arith.constant 0 : index
    %51 = vector.load %arg3[%c2_71, %c2_72, %c0_73, %c0_74] : memref<3x3x8x4xf32, #tpu.memory_space<vmem>>, vector<1x1x8x4xf32>
    %52 = vector.shape_cast %51 : vector<1x1x8x4xf32> to vector<8x4xf32>
    %cst_75 = arith.constant dense<0.000000e+00> : vector<8x256xf32>
    %53 = tpu.matmul %52, %50, %cst_75 {dimension_numbers = #tpu.dot_dimension_numbers<[1], [0], [0], [1], [0, 0, 1, 1], [], []>} : vector<8x4xf32>, vector<4x256xf32>, vector<8x256xf32> -> vector<8x256xf32>
    %54 = arith.addf %48, %53 : vector<8x256xf32>
    %c0_76 = arith.constant 0 : index
    %c0_77 = arith.constant 0 : index
    %55 = vector.load %arg4[%c0_76, %c0_77] : memref<8x1xf32, #tpu.memory_space<vmem>>, vector<8x1xf32>
    %56 = vector.broadcast %55 : vector<8x1xf32> to vector<8x256xf32>
    %57 = arith.addf %54, %56 : vector<8x256xf32>
    %cst_78 = arith.constant 0.000000e+00 : f32
    %58 = vector.broadcast %cst_78 : f32 to vector<8x256xf32>
    %59 = arith.cmpf oge, %57, %58 : vector<8x256xf32>
    %cst_79 = arith.constant 2.000000e-01 : f32
    %60 = vector.broadcast %cst_79 : f32 to vector<8x256xf32>
    %61 = arith.mulf %57, %60 : vector<8x256xf32>
    %62 = arith.select %59, %57, %61 : vector<8x256xi1>, vector<8x256xf32>
    %cst_80 = arith.constant 1.41421354 : f32
    %63 = vector.broadcast %cst_80 : f32 to vector<8x256xf32>
    %64 = arith.mulf %62, %63 : vector<8x256xf32>
    %c0_81 = arith.constant 0 : index
    %c0_82 = arith.constant 0 : index
    %c0_83 = arith.constant 0 : index
    %65 = vector.load %arg5[%c0_81, %c0_82, %c0_83] : memref<1x8x256xf32, #tpu.memory_space<vmem>>, vector<1x8x256xf32>
    %66 = vector.shape_cast %65 : vector<1x8x256xf32> to vector<8x256xf32>
    %67 = vector.shape_cast %64 : vector<8x256xf32> to vector<1x8x256xf32>
    tpu.vector_store %arg5[%c0_81, %c0_82, %c0_83], %67 {strides = array<i32>} : memref<1x8x256xf32, #tpu.memory_space<vmem>>, vector<1x8x256xf32>,
    return
  }
  func.func @transform_0(%arg0: i32, %arg1: i32) -> (i32, i32, i32, i32) {
    %c1_i32 = arith.constant 1 : i32
    %0 = arith.muli %arg0, %c1_i32 : i32
    %1 = arith.addi %0, %arg1 : i32
    %c0_i32 = arith.constant 0 : i32
    %c0_i32_0 = arith.constant 0 : i32
    %c0_i32_1 = arith.constant 0 : i32
    %c0_i32_2 = arith.constant 0 : i32
    return %1, %c0_i32, %c0_i32_0, %c0_i32_1 : i32, i32, i32, i32
  }
  func.func @transform_1(%arg0: i32, %arg1: i32) -> (i32, i32, i32, i32) {
    %c0_i32 = arith.constant 0 : i32
    %c0_i32_0 = arith.constant 0 : i32
    %c0_i32_1 = arith.constant 0 : i32
    %c0_i32_2 = arith.constant 0 : i32
    %c0_i32_3 = arith.constant 0 : i32
    return %c0_i32, %c0_i32_0, %c0_i32_1, %c0_i32_2 : i32, i32, i32, i32
  }
  func.func @transform_2(%arg0: i32, %arg1: i32) -> (i32, i32) {
    %c0_i32 = arith.constant 0 : i32
    %c0_i32_0 = arith.constant 0 : i32
    %c0_i32_1 = arith.constant 0 : i32
    return %c0_i32, %c0_i32_0 : i32, i32
  }
  func.func @transform_3(%arg0: i32, %arg1: i32) -> (i32, i32, i32) {
    %c0_i32 = arith.constant 0 : i32
    %c0_i32_0 = arith.constant 0 : i32
    return %arg0, %c0_i32, %arg1 : i32, i32, i32
  }
}

module attributes {stable_mosaic.version = 11 : i64} {
  func.func @_block_tail_kernel(%arg0: i32, %arg1: memref<72x128xf32, #tpu.memory_space<vmem>>, %arg2: memref<4x128xf32, #tpu.memory_space<vmem>>, %arg3: memref<8x72xf32, #tpu.memory_space<vmem>>, %arg4: memref<8x4xf32, #tpu.memory_space<vmem>>, %arg5: memref<8x1xf32, #tpu.memory_space<vmem>>, %arg6: memref<8x128xf32, #tpu.memory_space<vmem>>) attributes {dimension_semantics = [#tpu.dimension_semantics<parallel>], iteration_bounds = array<i64: 1>, scalar_prefetch = 0 : i64, scratch_operands = 0 : i64, tpu.core_type = #tpu.core_type<tc>, window_params = [{transform_indices = @transform_0, window_bounds = array<i64: 72, 128>}, {transform_indices = @transform_1, window_bounds = array<i64: 4, 128>}, {pipeline_mode = #tpu.pipeline_mode<synchronous>, transform_indices = @transform_2, window_bounds = array<i64: 8, 72>}, {pipeline_mode = #tpu.pipeline_mode<synchronous>, transform_indices = @transform_3, window_bounds = array<i64: 8, 4>}, {pipeline_mode = #tpu.pipeline_mode<synchronous>, transform_indices = @transform_4, window_bounds = array<i64: 8, 1>}, {transform_indices = @transform_5, window_bounds = array<i64: 8, 128>}]} {
    %c0 = arith.constant 0 : index
    %c0_0 = arith.constant 0 : index
    %0 = vector.load %arg3[%c0, %c0_0] : memref<8x72xf32, #tpu.memory_space<vmem>>, vector<8x72xf32>
    %c0_1 = arith.constant 0 : index
    %c0_2 = arith.constant 0 : index
    %1 = vector.load %arg1[%c0_1, %c0_2] : memref<72x128xf32, #tpu.memory_space<vmem>>, vector<72x128xf32>
    %cst = arith.constant dense<0.000000e+00> : vector<8x128xf32>
    %2 = tpu.matmul %0, %1, %cst {dimension_numbers = #tpu.dot_dimension_numbers<[1], [0], [0], [1], [0, 0, 1, 1], [], []>} : vector<8x72xf32>, vector<72x128xf32>, vector<8x128xf32> -> vector<8x128xf32>
    %c0_3 = arith.constant 0 : index
    %c0_4 = arith.constant 0 : index
    %3 = vector.load %arg5[%c0_3, %c0_4] : memref<8x1xf32, #tpu.memory_space<vmem>>, vector<8x1xf32>
    %4 = vector.broadcast %3 : vector<8x1xf32> to vector<8x128xf32>
    %5 = arith.addf %2, %4 : vector<8x128xf32>
    %c0_5 = arith.constant 0 : index
    %c0_6 = arith.constant 0 : index
    %6 = vector.load %arg4[%c0_5, %c0_6] : memref<8x4xf32, #tpu.memory_space<vmem>>, vector<8x4xf32>
    %c0_7 = arith.constant 0 : index
    %c0_8 = arith.constant 0 : index
    %7 = vector.load %arg2[%c0_7, %c0_8] : memref<4x128xf32, #tpu.memory_space<vmem>>, vector<4x128xf32>
    %cst_9 = arith.constant dense<0.000000e+00> : vector<8x128xf32>
    %8 = tpu.matmul %6, %7, %cst_9 {dimension_numbers = #tpu.dot_dimension_numbers<[1], [0], [0], [1], [0, 0, 1, 1], [], []>} : vector<8x4xf32>, vector<4x128xf32>, vector<8x128xf32> -> vector<8x128xf32>
    %9 = arith.addf %5, %8 : vector<8x128xf32>
    %c0_10 = arith.constant 0 : index
    %c0_11 = arith.constant 0 : index
    %10 = vector.load %arg6[%c0_10, %c0_11] : memref<8x128xf32, #tpu.memory_space<vmem>>, vector<8x128xf32>
    tpu.vector_store %arg6[%c0_10, %c0_11], %9 {strides = array<i32>} : memref<8x128xf32, #tpu.memory_space<vmem>>, vector<8x128xf32>,
    return
  }
  func.func @transform_0(%arg0: i32) -> (i32, i32) {
    %c0_i32 = arith.constant 0 : i32
    %c0_i32_0 = arith.constant 0 : i32
    return %c0_i32, %arg0 : i32, i32
  }
  func.func @transform_1(%arg0: i32) -> (i32, i32) {
    %c0_i32 = arith.constant 0 : i32
    %c0_i32_0 = arith.constant 0 : i32
    return %c0_i32, %arg0 : i32, i32
  }
  func.func @transform_2(%arg0: i32) -> (i32, i32) {
    %c0_i32 = arith.constant 0 : i32
    %c0_i32_0 = arith.constant 0 : i32
    %c0_i32_1 = arith.constant 0 : i32
    return %c0_i32, %c0_i32_0 : i32, i32
  }
  func.func @transform_3(%arg0: i32) -> (i32, i32) {
    %c0_i32 = arith.constant 0 : i32
    %c0_i32_0 = arith.constant 0 : i32
    %c0_i32_1 = arith.constant 0 : i32
    return %c0_i32, %c0_i32_0 : i32, i32
  }
  func.func @transform_4(%arg0: i32) -> (i32, i32) {
    %c0_i32 = arith.constant 0 : i32
    %c0_i32_0 = arith.constant 0 : i32
    %c0_i32_1 = arith.constant 0 : i32
    return %c0_i32, %c0_i32_0 : i32, i32
  }
  func.func @transform_5(%arg0: i32) -> (i32, i32) {
    %c0_i32 = arith.constant 0 : i32
    %c0_i32_0 = arith.constant 0 : i32
    return %c0_i32, %arg0 : i32, i32
  }
}

module attributes {stable_mosaic.version = 11 : i64} {
  func.func @_gemm_bias_act_kernel(%arg0: i32, %arg1: memref<72x128xf32, #tpu.memory_space<vmem>>, %arg2: memref<16x72xf32, #tpu.memory_space<vmem>>, %arg3: memref<16x1xf32, #tpu.memory_space<vmem>>, %arg4: memref<16x128xf32, #tpu.memory_space<vmem>>) attributes {dimension_semantics = [#tpu.dimension_semantics<parallel>], iteration_bounds = array<i64: 1>, scalar_prefetch = 0 : i64, scratch_operands = 0 : i64, tpu.core_type = #tpu.core_type<tc>, window_params = [{transform_indices = @transform_0, window_bounds = array<i64: 72, 128>}, {pipeline_mode = #tpu.pipeline_mode<synchronous>, transform_indices = @transform_1, window_bounds = array<i64: 16, 72>}, {pipeline_mode = #tpu.pipeline_mode<synchronous>, transform_indices = @transform_2, window_bounds = array<i64: 16, 1>}, {transform_indices = @transform_3, window_bounds = array<i64: 16, 128>}]} {
    %c0 = arith.constant 0 : index
    %c0_0 = arith.constant 0 : index
    %0 = vector.load %arg2[%c0, %c0_0] : memref<16x72xf32, #tpu.memory_space<vmem>>, vector<16x72xf32>
    %c0_1 = arith.constant 0 : index
    %c0_2 = arith.constant 0 : index
    %1 = vector.load %arg1[%c0_1, %c0_2] : memref<72x128xf32, #tpu.memory_space<vmem>>, vector<72x128xf32>
    %cst = arith.constant dense<0.000000e+00> : vector<16x128xf32>
    %2 = tpu.matmul %0, %1, %cst {dimension_numbers = #tpu.dot_dimension_numbers<[1], [0], [0], [1], [0, 0, 1, 1], [], []>} : vector<16x72xf32>, vector<72x128xf32>, vector<16x128xf32> -> vector<16x128xf32>
    %c0_3 = arith.constant 0 : index
    %c0_4 = arith.constant 0 : index
    %3 = vector.load %arg3[%c0_3, %c0_4] : memref<16x1xf32, #tpu.memory_space<vmem>>, vector<16x1xf32>
    %4 = vector.broadcast %3 : vector<16x1xf32> to vector<16x128xf32>
    %5 = arith.addf %2, %4 : vector<16x128xf32>
    %cst_5 = arith.constant 0.000000e+00 : f32
    %6 = vector.broadcast %cst_5 : f32 to vector<16x128xf32>
    %7 = arith.cmpf oge, %5, %6 : vector<16x128xf32>
    %cst_6 = arith.constant 2.000000e-01 : f32
    %8 = vector.broadcast %cst_6 : f32 to vector<16x128xf32>
    %9 = arith.mulf %5, %8 : vector<16x128xf32>
    %10 = arith.select %7, %5, %9 : vector<16x128xi1>, vector<16x128xf32>
    %cst_7 = arith.constant 1.41421354 : f32
    %11 = vector.broadcast %cst_7 : f32 to vector<16x128xf32>
    %12 = arith.mulf %10, %11 : vector<16x128xf32>
    %c0_8 = arith.constant 0 : index
    %c0_9 = arith.constant 0 : index
    %13 = vector.load %arg4[%c0_8, %c0_9] : memref<16x128xf32, #tpu.memory_space<vmem>>, vector<16x128xf32>
    tpu.vector_store %arg4[%c0_8, %c0_9], %12 {strides = array<i32>} : memref<16x128xf32, #tpu.memory_space<vmem>>, vector<16x128xf32>,
    return
  }
  func.func @transform_0(%arg0: i32) -> (i32, i32) {
    %c0_i32 = arith.constant 0 : i32
    %c0_i32_0 = arith.constant 0 : i32
    return %c0_i32, %arg0 : i32, i32
  }
  func.func @transform_1(%arg0: i32) -> (i32, i32) {
    %c0_i32 = arith.constant 0 : i32
    %c0_i32_0 = arith.constant 0 : i32
    %c0_i32_1 = arith.constant 0 : i32
    return %c0_i32, %c0_i32_0 : i32, i32
  }
  func.func @transform_2(%arg0: i32) -> (i32, i32) {
    %c0_i32 = arith.constant 0 : i32
    %c0_i32_0 = arith.constant 0 : i32
    %c0_i32_1 = arith.constant 0 : i32
    return %c0_i32, %c0_i32_0 : i32, i32
  }
  func.func @transform_3(%arg0: i32) -> (i32, i32) {
    %c0_i32 = arith.constant 0 : i32
    %c0_i32_0 = arith.constant 0 : i32
    return %c0_i32, %arg0 : i32, i32
  }
}

module attributes {stable_mosaic.version = 11 : i64} {
  func.func @_block_tail_kernel(%arg0: i32, %arg1: memref<144x32xf32, #tpu.memory_space<vmem>>, %arg2: memref<8x32xf32, #tpu.memory_space<vmem>>, %arg3: memref<16x144xf32, #tpu.memory_space<vmem>>, %arg4: memref<16x8xf32, #tpu.memory_space<vmem>>, %arg5: memref<16x1xf32, #tpu.memory_space<vmem>>, %arg6: memref<16x32xf32, #tpu.memory_space<vmem>>) attributes {dimension_semantics = [#tpu.dimension_semantics<parallel>], iteration_bounds = array<i64: 1>, scalar_prefetch = 0 : i64, scratch_operands = 0 : i64, tpu.core_type = #tpu.core_type<tc>, window_params = [{transform_indices = @transform_0, window_bounds = array<i64: 144, 32>}, {transform_indices = @transform_1, window_bounds = array<i64: 8, 32>}, {pipeline_mode = #tpu.pipeline_mode<synchronous>, transform_indices = @transform_2, window_bounds = array<i64: 16, 144>}, {pipeline_mode = #tpu.pipeline_mode<synchronous>, transform_indices = @transform_3, window_bounds = array<i64: 16, 8>}, {pipeline_mode = #tpu.pipeline_mode<synchronous>, transform_indices = @transform_4, window_bounds = array<i64: 16, 1>}, {transform_indices = @transform_5, window_bounds = array<i64: 16, 32>}]} {
    %c0 = arith.constant 0 : index
    %c0_0 = arith.constant 0 : index
    %0 = vector.load %arg3[%c0, %c0_0] : memref<16x144xf32, #tpu.memory_space<vmem>>, vector<16x144xf32>
    %c0_1 = arith.constant 0 : index
    %c0_2 = arith.constant 0 : index
    %1 = vector.load %arg1[%c0_1, %c0_2] : memref<144x32xf32, #tpu.memory_space<vmem>>, vector<144x32xf32>
    %cst = arith.constant dense<0.000000e+00> : vector<16x32xf32>
    %2 = tpu.matmul %0, %1, %cst {dimension_numbers = #tpu.dot_dimension_numbers<[1], [0], [0], [1], [0, 0, 1, 1], [], []>} : vector<16x144xf32>, vector<144x32xf32>, vector<16x32xf32> -> vector<16x32xf32>
    %c0_3 = arith.constant 0 : index
    %c0_4 = arith.constant 0 : index
    %3 = vector.load %arg5[%c0_3, %c0_4] : memref<16x1xf32, #tpu.memory_space<vmem>>, vector<16x1xf32>
    %4 = vector.broadcast %3 : vector<16x1xf32> to vector<16x32xf32>
    %5 = arith.addf %2, %4 : vector<16x32xf32>
    %c0_5 = arith.constant 0 : index
    %c0_6 = arith.constant 0 : index
    %6 = vector.load %arg4[%c0_5, %c0_6] : memref<16x8xf32, #tpu.memory_space<vmem>>, vector<16x8xf32>
    %c0_7 = arith.constant 0 : index
    %c0_8 = arith.constant 0 : index
    %7 = vector.load %arg2[%c0_7, %c0_8] : memref<8x32xf32, #tpu.memory_space<vmem>>, vector<8x32xf32>
    %cst_9 = arith.constant dense<0.000000e+00> : vector<16x32xf32>
    %8 = tpu.matmul %6, %7, %cst_9 {dimension_numbers = #tpu.dot_dimension_numbers<[1], [0], [0], [1], [0, 0, 1, 1], [], []>} : vector<16x8xf32>, vector<8x32xf32>, vector<16x32xf32> -> vector<16x32xf32>
    %9 = arith.addf %5, %8 : vector<16x32xf32>
    %c0_10 = arith.constant 0 : index
    %c0_11 = arith.constant 0 : index
    %10 = vector.load %arg6[%c0_10, %c0_11] : memref<16x32xf32, #tpu.memory_space<vmem>>, vector<16x32xf32>
    tpu.vector_store %arg6[%c0_10, %c0_11], %9 {strides = array<i32>} : memref<16x32xf32, #tpu.memory_space<vmem>>, vector<16x32xf32>,
    return
  }
  func.func @transform_0(%arg0: i32) -> (i32, i32) {
    %c0_i32 = arith.constant 0 : i32
    %c0_i32_0 = arith.constant 0 : i32
    return %c0_i32, %arg0 : i32, i32
  }
  func.func @transform_1(%arg0: i32) -> (i32, i32) {
    %c0_i32 = arith.constant 0 : i32
    %c0_i32_0 = arith.constant 0 : i32
    return %c0_i32, %arg0 : i32, i32
  }
  func.func @transform_2(%arg0: i32) -> (i32, i32) {
    %c0_i32 = arith.constant 0 : i32
    %c0_i32_0 = arith.constant 0 : i32
    %c0_i32_1 = arith.constant 0 : i32
    return %c0_i32, %c0_i32_0 : i32, i32
  }
  func.func @transform_3(%arg0: i32) -> (i32, i32) {
    %c0_i32 = arith.constant 0 : i32
    %c0_i32_0 = arith.constant 0 : i32
    %c0_i32_1 = arith.constant 0 : i32
    return %c0_i32, %c0_i32_0 : i32, i32
  }
  func.func @transform_4(%arg0: i32) -> (i32, i32) {
    %c0_i32 = arith.constant 0 : i32
    %c0_i32_0 = arith.constant 0 : i32
    %c0_i32_1 = arith.constant 0 : i32
    return %c0_i32, %c0_i32_0 : i32, i32
  }
  func.func @transform_5(%arg0: i32) -> (i32, i32) {
    %c0_i32 = arith.constant 0 : i32
    %c0_i32_0 = arith.constant 0 : i32
    return %c0_i32, %arg0 : i32, i32
  }
}

module attributes {stable_mosaic.version = 11 : i64} {
  func.func @_gemm_bias_act_kernel(%arg0: i32, %arg1: memref<144x32xf32, #tpu.memory_space<vmem>>, %arg2: memref<32x144xf32, #tpu.memory_space<vmem>>, %arg3: memref<32x1xf32, #tpu.memory_space<vmem>>, %arg4: memref<32x32xf32, #tpu.memory_space<vmem>>) attributes {dimension_semantics = [#tpu.dimension_semantics<parallel>], iteration_bounds = array<i64: 1>, scalar_prefetch = 0 : i64, scratch_operands = 0 : i64, tpu.core_type = #tpu.core_type<tc>, window_params = [{transform_indices = @transform_0, window_bounds = array<i64: 144, 32>}, {pipeline_mode = #tpu.pipeline_mode<synchronous>, transform_indices = @transform_1, window_bounds = array<i64: 32, 144>}, {pipeline_mode = #tpu.pipeline_mode<synchronous>, transform_indices = @transform_2, window_bounds = array<i64: 32, 1>}, {transform_indices = @transform_3, window_bounds = array<i64: 32, 32>}]} {
    %c0 = arith.constant 0 : index
    %c0_0 = arith.constant 0 : index
    %0 = vector.load %arg2[%c0, %c0_0] : memref<32x144xf32, #tpu.memory_space<vmem>>, vector<32x144xf32>
    %c0_1 = arith.constant 0 : index
    %c0_2 = arith.constant 0 : index
    %1 = vector.load %arg1[%c0_1, %c0_2] : memref<144x32xf32, #tpu.memory_space<vmem>>, vector<144x32xf32>
    %cst = arith.constant dense<0.000000e+00> : vector<32x32xf32>
    %2 = tpu.matmul %0, %1, %cst {dimension_numbers = #tpu.dot_dimension_numbers<[1], [0], [0], [1], [0, 0, 1, 1], [], []>} : vector<32x144xf32>, vector<144x32xf32>, vector<32x32xf32> -> vector<32x32xf32>
    %c0_3 = arith.constant 0 : index
    %c0_4 = arith.constant 0 : index
    %3 = vector.load %arg3[%c0_3, %c0_4] : memref<32x1xf32, #tpu.memory_space<vmem>>, vector<32x1xf32>
    %4 = vector.broadcast %3 : vector<32x1xf32> to vector<32x32xf32>
    %5 = arith.addf %2, %4 : vector<32x32xf32>
    %cst_5 = arith.constant 0.000000e+00 : f32
    %6 = vector.broadcast %cst_5 : f32 to vector<32x32xf32>
    %7 = arith.cmpf oge, %5, %6 : vector<32x32xf32>
    %cst_6 = arith.constant 2.000000e-01 : f32
    %8 = vector.broadcast %cst_6 : f32 to vector<32x32xf32>
    %9 = arith.mulf %5, %8 : vector<32x32xf32>
    %10 = arith.select %7, %5, %9 : vector<32x32xi1>, vector<32x32xf32>
    %cst_7 = arith.constant 1.41421354 : f32
    %11 = vector.broadcast %cst_7 : f32 to vector<32x32xf32>
    %12 = arith.mulf %10, %11 : vector<32x32xf32>
    %c0_8 = arith.constant 0 : index
    %c0_9 = arith.constant 0 : index
    %13 = vector.load %arg4[%c0_8, %c0_9] : memref<32x32xf32, #tpu.memory_space<vmem>>, vector<32x32xf32>
    tpu.vector_store %arg4[%c0_8, %c0_9], %12 {strides = array<i32>} : memref<32x32xf32, #tpu.memory_space<vmem>>, vector<32x32xf32>,
    return
  }
  func.func @transform_0(%arg0: i32) -> (i32, i32) {
    %c0_i32 = arith.constant 0 : i32
    %c0_i32_0 = arith.constant 0 : i32
    return %c0_i32, %arg0 : i32, i32
  }
  func.func @transform_1(%arg0: i32) -> (i32, i32) {
    %c0_i32 = arith.constant 0 : i32
    %c0_i32_0 = arith.constant 0 : i32
    %c0_i32_1 = arith.constant 0 : i32
    return %c0_i32, %c0_i32_0 : i32, i32
  }
  func.func @transform_2(%arg0: i32) -> (i32, i32) {
    %c0_i32 = arith.constant 0 : i32
    %c0_i32_0 = arith.constant 0 : i32
    %c0_i32_1 = arith.constant 0 : i32
    return %c0_i32, %c0_i32_0 : i32, i32
  }
  func.func @transform_3(%arg0: i32) -> (i32, i32) {
    %c0_i32 = arith.constant 0 : i32
    %c0_i32_0 = arith.constant 0 : i32
    return %c0_i32, %arg0 : i32, i32
  }
}

module attributes {stable_mosaic.version = 11 : i64} {
  func.func @_block_tail_kernel(%arg0: i32, %arg1: memref<288x8xf32, #tpu.memory_space<vmem>>, %arg2: memref<16x8xf32, #tpu.memory_space<vmem>>, %arg3: memref<32x288xf32, #tpu.memory_space<vmem>>, %arg4: memref<32x16xf32, #tpu.memory_space<vmem>>, %arg5: memref<32x1xf32, #tpu.memory_space<vmem>>, %arg6: memref<32x8xf32, #tpu.memory_space<vmem>>) attributes {dimension_semantics = [#tpu.dimension_semantics<parallel>], iteration_bounds = array<i64: 1>, scalar_prefetch = 0 : i64, scratch_operands = 0 : i64, tpu.core_type = #tpu.core_type<tc>, window_params = [{transform_indices = @transform_0, window_bounds = array<i64: 288, 8>}, {transform_indices = @transform_1, window_bounds = array<i64: 16, 8>}, {pipeline_mode = #tpu.pipeline_mode<synchronous>, transform_indices = @transform_2, window_bounds = array<i64: 32, 288>}, {pipeline_mode = #tpu.pipeline_mode<synchronous>, transform_indices = @transform_3, window_bounds = array<i64: 32, 16>}, {pipeline_mode = #tpu.pipeline_mode<synchronous>, transform_indices = @transform_4, window_bounds = array<i64: 32, 1>}, {transform_indices = @transform_5, window_bounds = array<i64: 32, 8>}]} {
    %c0 = arith.constant 0 : index
    %c0_0 = arith.constant 0 : index
    %0 = vector.load %arg3[%c0, %c0_0] : memref<32x288xf32, #tpu.memory_space<vmem>>, vector<32x288xf32>
    %c0_1 = arith.constant 0 : index
    %c0_2 = arith.constant 0 : index
    %1 = vector.load %arg1[%c0_1, %c0_2] : memref<288x8xf32, #tpu.memory_space<vmem>>, vector<288x8xf32>
    %cst = arith.constant dense<0.000000e+00> : vector<32x8xf32>
    %2 = tpu.matmul %0, %1, %cst {dimension_numbers = #tpu.dot_dimension_numbers<[1], [0], [0], [1], [0, 0, 1, 1], [], []>} : vector<32x288xf32>, vector<288x8xf32>, vector<32x8xf32> -> vector<32x8xf32>
    %c0_3 = arith.constant 0 : index
    %c0_4 = arith.constant 0 : index
    %3 = vector.load %arg5[%c0_3, %c0_4] : memref<32x1xf32, #tpu.memory_space<vmem>>, vector<32x1xf32>
    %4 = vector.broadcast %3 : vector<32x1xf32> to vector<32x8xf32>
    %5 = arith.addf %2, %4 : vector<32x8xf32>
    %c0_5 = arith.constant 0 : index
    %c0_6 = arith.constant 0 : index
    %6 = vector.load %arg4[%c0_5, %c0_6] : memref<32x16xf32, #tpu.memory_space<vmem>>, vector<32x16xf32>
    %c0_7 = arith.constant 0 : index
    %c0_8 = arith.constant 0 : index
    %7 = vector.load %arg2[%c0_7, %c0_8] : memref<16x8xf32, #tpu.memory_space<vmem>>, vector<16x8xf32>
    %cst_9 = arith.constant dense<0.000000e+00> : vector<32x8xf32>
    %8 = tpu.matmul %6, %7, %cst_9 {dimension_numbers = #tpu.dot_dimension_numbers<[1], [0], [0], [1], [0, 0, 1, 1], [], []>} : vector<32x16xf32>, vector<16x8xf32>, vector<32x8xf32> -> vector<32x8xf32>
    %9 = arith.addf %5, %8 : vector<32x8xf32>
    %c0_10 = arith.constant 0 : index
    %c0_11 = arith.constant 0 : index
    %10 = vector.load %arg6[%c0_10, %c0_11] : memref<32x8xf32, #tpu.memory_space<vmem>>, vector<32x8xf32>
    tpu.vector_store %arg6[%c0_10, %c0_11], %9 {strides = array<i32>} : memref<32x8xf32, #tpu.memory_space<vmem>>, vector<32x8xf32>,
    return
  }
  func.func @transform_0(%arg0: i32) -> (i32, i32) {
    %c0_i32 = arith.constant 0 : i32
    %c0_i32_0 = arith.constant 0 : i32
    return %c0_i32, %arg0 : i32, i32
  }
  func.func @transform_1(%arg0: i32) -> (i32, i32) {
    %c0_i32 = arith.constant 0 : i32
    %c0_i32_0 = arith.constant 0 : i32
    return %c0_i32, %arg0 : i32, i32
  }
  func.func @transform_2(%arg0: i32) -> (i32, i32) {
    %c0_i32 = arith.constant 0 : i32
    %c0_i32_0 = arith.constant 0 : i32
    %c0_i32_1 = arith.constant 0 : i32
    return %c0_i32, %c0_i32_0 : i32, i32
  }
  func.func @transform_3(%arg0: i32) -> (i32, i32) {
    %c0_i32 = arith.constant 0 : i32
    %c0_i32_0 = arith.constant 0 : i32
    %c0_i32_1 = arith.constant 0 : i32
    return %c0_i32, %c0_i32_0 : i32, i32
  }
  func.func @transform_4(%arg0: i32) -> (i32, i32) {
    %c0_i32 = arith.constant 0 : i32
    %c0_i32_0 = arith.constant 0 : i32
    %c0_i32_1 = arith.constant 0 : i32
    return %c0_i32, %c0_i32_0 : i32, i32
  }
  func.func @transform_5(%arg0: i32) -> (i32, i32) {
    %c0_i32 = arith.constant 0 : i32
    %c0_i32_0 = arith.constant 0 : i32
    return %c0_i32, %arg0 : i32, i32
  }
}

module attributes {stable_mosaic.version = 11 : i64} {
  func.func @_epilogue_kernel(%arg0: i32, %arg1: memref<128x2xf32, #tpu.memory_space<vmem>>, %arg2: memref<2x2xf32, #tpu.memory_space<vmem>>, %arg3: memref<4x288x2xf32, #tpu.memory_space<vmem>>, %arg4: memref<32x4xf32, #tpu.memory_space<vmem>>, %arg5: memref<32x288xf32, #tpu.memory_space<vmem>>, %arg6: memref<32x1xf32, #tpu.memory_space<vmem>>, %arg7: memref<4x32x32xf32, #tpu.memory_space<vmem>>, %arg8: memref<32x1xf32, #tpu.memory_space<vmem>>, %arg9: memref<1x32xf32, #tpu.memory_space<vmem>>, %arg10: memref<1x1xf32, #tpu.memory_space<vmem>>, %arg11: memref<1x2xf32, #tpu.memory_space<vmem>>) attributes {dimension_semantics = [#tpu.dimension_semantics<arbitrary>], iteration_bounds = array<i64: 1>, scalar_prefetch = 0 : i64, scratch_operands = 0 : i64, tpu.core_type = #tpu.core_type<tc>, window_params = [{pipeline_mode = #tpu.pipeline_mode<synchronous>, transform_indices = @transform_0, window_bounds = array<i64: 128, 2>}, {pipeline_mode = #tpu.pipeline_mode<synchronous>, transform_indices = @transform_1, window_bounds = array<i64: 2, 2>}, {pipeline_mode = #tpu.pipeline_mode<synchronous>, transform_indices = @transform_2, window_bounds = array<i64: 4, 288, 2>}, {pipeline_mode = #tpu.pipeline_mode<synchronous>, transform_indices = @transform_3, window_bounds = array<i64: 32, 4>}, {pipeline_mode = #tpu.pipeline_mode<synchronous>, transform_indices = @transform_4, window_bounds = array<i64: 32, 288>}, {pipeline_mode = #tpu.pipeline_mode<synchronous>, transform_indices = @transform_5, window_bounds = array<i64: 32, 1>}, {pipeline_mode = #tpu.pipeline_mode<synchronous>, transform_indices = @transform_6, window_bounds = array<i64: 4, 32, 32>}, {pipeline_mode = #tpu.pipeline_mode<synchronous>, transform_indices = @transform_7, window_bounds = array<i64: 32, 1>}, {pipeline_mode = #tpu.pipeline_mode<synchronous>, transform_indices = @transform_8, window_bounds = array<i64: 1, 32>}, {pipeline_mode = #tpu.pipeline_mode<synchronous>, transform_indices = @transform_9, window_bounds = array<i64: 1, 1>}, {pipeline_mode = #tpu.pipeline_mode<synchronous>, transform_indices = @transform_10, window_bounds = array<i64: 1, 2>}]} {
    %c0 = arith.constant 0 : index
    %c0_0 = arith.constant 0 : index
    %0 = vector.load %arg1[%c0, %c0_0] : memref<128x2xf32, #tpu.memory_space<vmem>>, vector<128x2xf32>
    %c0_1 = arith.constant 0 : index
    %c0_2 = arith.constant 0 : index
    %1 = vector.load %arg2[%c0_1, %c0_2] : memref<2x2xf32, #tpu.memory_space<vmem>>, vector<2x2xf32>
    %cst = arith.constant dense<0.000000e+00> : vector<128x2xf32>
    %2 = tpu.matmul %0, %1, %cst {dimension_numbers = #tpu.dot_dimension_numbers<[1], [0], [0], [1], [0, 0, 1, 1], [], []>} : vector<128x2xf32>, vector<2x2xf32>, vector<128x2xf32> -> vector<128x2xf32>
    %3 = arith.subf %0, %2 : vector<128x2xf32>
    %4 = arith.mulf %3, %3 : vector<128x2xf32>
    %cst_3 = arith.constant dense<0.000000e+00> : vector<128x2xf32>
    %5 = tpu.matmul %4, %1, %cst_3 {dimension_numbers = #tpu.dot_dimension_numbers<[1], [0], [0], [1], [0, 0, 1, 1], [], []>} : vector<128x2xf32>, vector<2x2xf32>, vector<128x2xf32> -> vector<128x2xf32>
    %cst_4 = arith.constant 9.99999974E-5 : f32
    %6 = vector.broadcast %cst_4 : f32 to vector<128x2xf32>
    %7 = arith.addf %5, %6 : vector<128x2xf32>
    %8 = math.sqrt %7 : vector<128x2xf32>
    %cst_5 = arith.constant dense<0.000000e+00> : vector<2xf32>
    %9 = vector.multi_reduction <add>, %8, %cst_5 [0] : vector<128x2xf32> to vector<2xf32>
    %10 = vector.shape_cast %9 : vector<2xf32> to vector<1x2xf32>
    %cst_6 = arith.constant 7.812500e-03 : f32
    %11 = vector.broadcast %cst_6 : f32 to vector<1x2xf32>
    %12 = arith.mulf %10, %11 : vector<1x2xf32>
    %c0_7 = arith.constant 0 : index
    %c0_8 = arith.constant 0 : index
    %13 = vector.load %arg5[%c0_7, %c0_8] : memref<32x288xf32, #tpu.memory_space<vmem>>, vector<32x288xf32>
    %cst_9 = arith.constant 0.000000e+00 : f32
    %14 = vector.broadcast %cst_9 : f32 to vector<32x2xf32>
    %c0_10 = arith.constant 0 : index
    %c0_11 = arith.constant 0 : index
    %c0_12 = arith.constant 0 : index
    %15 = vector.load %arg3[%c0_10, %c0_11, %c0_12] : memref<4x288x2xf32, #tpu.memory_space<vmem>>, vector<1x288x2xf32>
    %16 = vector.shape_cast %15 : vector<1x288x2xf32> to vector<288x2xf32>
    %cst_13 = arith.constant dense<0.000000e+00> : vector<32x2xf32>
    %17 = tpu.matmul %13, %16, %cst_13 {dimension_numbers = #tpu.dot_dimension_numbers<[1], [0], [0], [1], [0, 0, 1, 1], [], []>} : vector<32x288xf32>, vector<288x2xf32>, vector<32x2xf32> -> vector<32x2xf32>
    %c0_14 = arith.constant 0 : index
    %c0_15 = arith.constant 0 : index
    %18 = vector.load %arg4[%c0_14, %c0_15] : memref<32x4xf32, #tpu.memory_space<vmem>>, vector<32x1xf32>
    %19 = vector.broadcast %18 : vector<32x1xf32> to vector<32x2xf32>
    %20 = vector.broadcast %12 : vector<1x2xf32> to vector<32x2xf32>
    %21 = arith.mulf %19, %20 : vector<32x2xf32>
    %22 = arith.addf %17, %21 : vector<32x2xf32>
    %c0_16 = arith.constant 0 : index
    %c0_17 = arith.constant 0 : index
    %23 = vector.load %arg6[%c0_16, %c0_17] : memref<32x1xf32, #tpu.memory_space<vmem>>, vector<32x1xf32>
    %24 = vector.broadcast %23 : vector<32x1xf32> to vector<32x2xf32>
    %25 = arith.addf %22, %24 : vector<32x2xf32>
    %cst_18 = arith.constant 0.000000e+00 : f32
    %26 = vector.broadcast %cst_18 : f32 to vector<32x2xf32>
    %27 = arith.cmpf oge, %25, %26 : vector<32x2xf32>
    %cst_19 = arith.constant 2.000000e-01 : f32
    %28 = vector.broadcast %cst_19 : f32 to vector<32x2xf32>
    %29 = arith.mulf %25, %28 : vector<32x2xf32>
    %30 = arith.select %27, %25, %29 : vector<32x2xi1>, vector<32x2xf32>
    %cst_20 = arith.constant 1.41421354 : f32
    %31 = vector.broadcast %cst_20 : f32 to vector<32x2xf32>
    %32 = arith.mulf %30, %31 : vector<32x2xf32>
    %c0_21 = arith.constant 0 : index
    %c0_22 = arith.constant 0 : index
    %c0_23 = arith.constant 0 : index
    %33 = vector.load %arg7[%c0_21, %c0_22, %c0_23] : memref<4x32x32xf32, #tpu.memory_space<vmem>>, vector<1x32x32xf32>
    %34 = vector.shape_cast %33 : vector<1x32x32xf32> to vector<32x32xf32>
    %cst_24 = arith.constant dense<0.000000e+00> : vector<32x2xf32>
    %35 = tpu.matmul %34, %32, %cst_24 {dimension_numbers = #tpu.dot_dimension_numbers<[1], [0], [0], [1], [0, 0, 1, 1], [], []>} : vector<32x32xf32>, vector<32x2xf32>, vector<32x2xf32> -> vector<32x2xf32>
    %36 = arith.addf %14, %35 : vector<32x2xf32>
    %c1 = arith.constant 1 : index
    %c0_25 = arith.constant 0 : index
    %c0_26 = arith.constant 0 : index
    %37 = vector.load %arg3[%c1, %c0_25, %c0_26] : memref<4x288x2xf32, #tpu.memory_space<vmem>>, vector<1x288x2xf32>
    %38 = vector.shape_cast %37 : vector<1x288x2xf32> to vector<288x2xf32>
    %cst_27 = arith.constant dense<0.000000e+00> : vector<32x2xf32>
    %39 = tpu.matmul %13, %38, %cst_27 {dimension_numbers = #tpu.dot_dimension_numbers<[1], [0], [0], [1], [0, 0, 1, 1], [], []>} : vector<32x288xf32>, vector<288x2xf32>, vector<32x2xf32> -> vector<32x2xf32>
    %c0_28 = arith.constant 0 : index
    %c1_29 = arith.constant 1 : index
    %40 = vector.load %arg4[%c0_28, %c1_29] : memref<32x4xf32, #tpu.memory_space<vmem>>, vector<32x1xf32>
    %41 = vector.broadcast %40 : vector<32x1xf32> to vector<32x2xf32>
    %42 = vector.broadcast %12 : vector<1x2xf32> to vector<32x2xf32>
    %43 = arith.mulf %41, %42 : vector<32x2xf32>
    %44 = arith.addf %39, %43 : vector<32x2xf32>
    %c0_30 = arith.constant 0 : index
    %c0_31 = arith.constant 0 : index
    %45 = vector.load %arg6[%c0_30, %c0_31] : memref<32x1xf32, #tpu.memory_space<vmem>>, vector<32x1xf32>
    %46 = vector.broadcast %45 : vector<32x1xf32> to vector<32x2xf32>
    %47 = arith.addf %44, %46 : vector<32x2xf32>
    %cst_32 = arith.constant 0.000000e+00 : f32
    %48 = vector.broadcast %cst_32 : f32 to vector<32x2xf32>
    %49 = arith.cmpf oge, %47, %48 : vector<32x2xf32>
    %cst_33 = arith.constant 2.000000e-01 : f32
    %50 = vector.broadcast %cst_33 : f32 to vector<32x2xf32>
    %51 = arith.mulf %47, %50 : vector<32x2xf32>
    %52 = arith.select %49, %47, %51 : vector<32x2xi1>, vector<32x2xf32>
    %cst_34 = arith.constant 1.41421354 : f32
    %53 = vector.broadcast %cst_34 : f32 to vector<32x2xf32>
    %54 = arith.mulf %52, %53 : vector<32x2xf32>
    %c1_35 = arith.constant 1 : index
    %c0_36 = arith.constant 0 : index
    %c0_37 = arith.constant 0 : index
    %55 = vector.load %arg7[%c1_35, %c0_36, %c0_37] : memref<4x32x32xf32, #tpu.memory_space<vmem>>, vector<1x32x32xf32>
    %56 = vector.shape_cast %55 : vector<1x32x32xf32> to vector<32x32xf32>
    %cst_38 = arith.constant dense<0.000000e+00> : vector<32x2xf32>
    %57 = tpu.matmul %56, %54, %cst_38 {dimension_numbers = #tpu.dot_dimension_numbers<[1], [0], [0], [1], [0, 0, 1, 1], [], []>} : vector<32x32xf32>, vector<32x2xf32>, vector<32x2xf32> -> vector<32x2xf32>
    %58 = arith.addf %36, %57 : vector<32x2xf32>
    %c2 = arith.constant 2 : index
    %c0_39 = arith.constant 0 : index
    %c0_40 = arith.constant 0 : index
    %59 = vector.load %arg3[%c2, %c0_39, %c0_40] : memref<4x288x2xf32, #tpu.memory_space<vmem>>, vector<1x288x2xf32>
    %60 = vector.shape_cast %59 : vector<1x288x2xf32> to vector<288x2xf32>
    %cst_41 = arith.constant dense<0.000000e+00> : vector<32x2xf32>
    %61 = tpu.matmul %13, %60, %cst_41 {dimension_numbers = #tpu.dot_dimension_numbers<[1], [0], [0], [1], [0, 0, 1, 1], [], []>} : vector<32x288xf32>, vector<288x2xf32>, vector<32x2xf32> -> vector<32x2xf32>
    %c0_42 = arith.constant 0 : index
    %c2_43 = arith.constant 2 : index
    %62 = vector.load %arg4[%c0_42, %c2_43] : memref<32x4xf32, #tpu.memory_space<vmem>>, vector<32x1xf32>
    %63 = vector.broadcast %62 : vector<32x1xf32> to vector<32x2xf32>
    %64 = vector.broadcast %12 : vector<1x2xf32> to vector<32x2xf32>
    %65 = arith.mulf %63, %64 : vector<32x2xf32>
    %66 = arith.addf %61, %65 : vector<32x2xf32>
    %c0_44 = arith.constant 0 : index
    %c0_45 = arith.constant 0 : index
    %67 = vector.load %arg6[%c0_44, %c0_45] : memref<32x1xf32, #tpu.memory_space<vmem>>, vector<32x1xf32>
    %68 = vector.broadcast %67 : vector<32x1xf32> to vector<32x2xf32>
    %69 = arith.addf %66, %68 : vector<32x2xf32>
    %cst_46 = arith.constant 0.000000e+00 : f32
    %70 = vector.broadcast %cst_46 : f32 to vector<32x2xf32>
    %71 = arith.cmpf oge, %69, %70 : vector<32x2xf32>
    %cst_47 = arith.constant 2.000000e-01 : f32
    %72 = vector.broadcast %cst_47 : f32 to vector<32x2xf32>
    %73 = arith.mulf %69, %72 : vector<32x2xf32>
    %74 = arith.select %71, %69, %73 : vector<32x2xi1>, vector<32x2xf32>
    %cst_48 = arith.constant 1.41421354 : f32
    %75 = vector.broadcast %cst_48 : f32 to vector<32x2xf32>
    %76 = arith.mulf %74, %75 : vector<32x2xf32>
    %c2_49 = arith.constant 2 : index
    %c0_50 = arith.constant 0 : index
    %c0_51 = arith.constant 0 : index
    %77 = vector.load %arg7[%c2_49, %c0_50, %c0_51] : memref<4x32x32xf32, #tpu.memory_space<vmem>>, vector<1x32x32xf32>
    %78 = vector.shape_cast %77 : vector<1x32x32xf32> to vector<32x32xf32>
    %cst_52 = arith.constant dense<0.000000e+00> : vector<32x2xf32>
    %79 = tpu.matmul %78, %76, %cst_52 {dimension_numbers = #tpu.dot_dimension_numbers<[1], [0], [0], [1], [0, 0, 1, 1], [], []>} : vector<32x32xf32>, vector<32x2xf32>, vector<32x2xf32> -> vector<32x2xf32>
    %80 = arith.addf %58, %79 : vector<32x2xf32>
    %c3 = arith.constant 3 : index
    %c0_53 = arith.constant 0 : index
    %c0_54 = arith.constant 0 : index
    %81 = vector.load %arg3[%c3, %c0_53, %c0_54] : memref<4x288x2xf32, #tpu.memory_space<vmem>>, vector<1x288x2xf32>
    %82 = vector.shape_cast %81 : vector<1x288x2xf32> to vector<288x2xf32>
    %cst_55 = arith.constant dense<0.000000e+00> : vector<32x2xf32>
    %83 = tpu.matmul %13, %82, %cst_55 {dimension_numbers = #tpu.dot_dimension_numbers<[1], [0], [0], [1], [0, 0, 1, 1], [], []>} : vector<32x288xf32>, vector<288x2xf32>, vector<32x2xf32> -> vector<32x2xf32>
    %c0_56 = arith.constant 0 : index
    %c3_57 = arith.constant 3 : index
    %84 = vector.load %arg4[%c0_56, %c3_57] : memref<32x4xf32, #tpu.memory_space<vmem>>, vector<32x1xf32>
    %85 = vector.broadcast %84 : vector<32x1xf32> to vector<32x2xf32>
    %86 = vector.broadcast %12 : vector<1x2xf32> to vector<32x2xf32>
    %87 = arith.mulf %85, %86 : vector<32x2xf32>
    %88 = arith.addf %83, %87 : vector<32x2xf32>
    %c0_58 = arith.constant 0 : index
    %c0_59 = arith.constant 0 : index
    %89 = vector.load %arg6[%c0_58, %c0_59] : memref<32x1xf32, #tpu.memory_space<vmem>>, vector<32x1xf32>
    %90 = vector.broadcast %89 : vector<32x1xf32> to vector<32x2xf32>
    %91 = arith.addf %88, %90 : vector<32x2xf32>
    %cst_60 = arith.constant 0.000000e+00 : f32
    %92 = vector.broadcast %cst_60 : f32 to vector<32x2xf32>
    %93 = arith.cmpf oge, %91, %92 : vector<32x2xf32>
    %cst_61 = arith.constant 2.000000e-01 : f32
    %94 = vector.broadcast %cst_61 : f32 to vector<32x2xf32>
    %95 = arith.mulf %91, %94 : vector<32x2xf32>
    %96 = arith.select %93, %91, %95 : vector<32x2xi1>, vector<32x2xf32>
    %cst_62 = arith.constant 1.41421354 : f32
    %97 = vector.broadcast %cst_62 : f32 to vector<32x2xf32>
    %98 = arith.mulf %96, %97 : vector<32x2xf32>
    %c3_63 = arith.constant 3 : index
    %c0_64 = arith.constant 0 : index
    %c0_65 = arith.constant 0 : index
    %99 = vector.load %arg7[%c3_63, %c0_64, %c0_65] : memref<4x32x32xf32, #tpu.memory_space<vmem>>, vector<1x32x32xf32>
    %100 = vector.shape_cast %99 : vector<1x32x32xf32> to vector<32x32xf32>
    %cst_66 = arith.constant dense<0.000000e+00> : vector<32x2xf32>
    %101 = tpu.matmul %100, %98, %cst_66 {dimension_numbers = #tpu.dot_dimension_numbers<[1], [0], [0], [1], [0, 0, 1, 1], [], []>} : vector<32x32xf32>, vector<32x2xf32>, vector<32x2xf32> -> vector<32x2xf32>
    %102 = arith.addf %80, %101 : vector<32x2xf32>
    %c0_67 = arith.constant 0 : index
    %c0_68 = arith.constant 0 : index
    %103 = vector.load %arg8[%c0_67, %c0_68] : memref<32x1xf32, #tpu.memory_space<vmem>>, vector<32x1xf32>
    %104 = vector.broadcast %103 : vector<32x1xf32> to vector<32x2xf32>
    %105 = arith.addf %102, %104 : vector<32x2xf32>
    %cst_69 = arith.constant 0.000000e+00 : f32
    %106 = vector.broadcast %cst_69 : f32 to vector<32x2xf32>
    %107 = arith.cmpf oge, %105, %106 : vector<32x2xf32>
    %cst_70 = arith.constant 2.000000e-01 : f32
    %108 = vector.broadcast %cst_70 : f32 to vector<32x2xf32>
    %109 = arith.mulf %105, %108 : vector<32x2xf32>
    %110 = arith.select %107, %105, %109 : vector<32x2xi1>, vector<32x2xf32>
    %cst_71 = arith.constant 1.41421354 : f32
    %111 = vector.broadcast %cst_71 : f32 to vector<32x2xf32>
    %112 = arith.mulf %110, %111 : vector<32x2xf32>
    %c0_72 = arith.constant 0 : index
    %c0_73 = arith.constant 0 : index
    %113 = vector.load %arg9[%c0_72, %c0_73] : memref<1x32xf32, #tpu.memory_space<vmem>>, vector<1x32xf32>
    %cst_74 = arith.constant dense<0.000000e+00> : vector<1x2xf32>
    %114 = tpu.matmul %113, %112, %cst_74 {dimension_numbers = #tpu.dot_dimension_numbers<[1], [0], [0], [1], [0, 0, 1, 1], [], []>} : vector<1x32xf32>, vector<32x2xf32>, vector<1x2xf32> -> vector<1x2xf32>
    %c0_75 = arith.constant 0 : index
    %c0_76 = arith.constant 0 : index
    %115 = vector.load %arg10[%c0_75, %c0_76] : memref<1x1xf32, #tpu.memory_space<vmem>>, vector<1x1xf32>
    %116 = vector.broadcast %115 : vector<1x1xf32> to vector<1x2xf32>
    %117 = arith.addf %114, %116 : vector<1x2xf32>
    %c0_77 = arith.constant 0 : index
    %c0_78 = arith.constant 0 : index
    %118 = vector.load %arg11[%c0_77, %c0_78] : memref<1x2xf32, #tpu.memory_space<vmem>>, vector<1x2xf32>
    tpu.vector_store %arg11[%c0_77, %c0_78], %117 {strides = array<i32>} : memref<1x2xf32, #tpu.memory_space<vmem>>, vector<1x2xf32>,
    return
  }
  func.func @transform_0(%arg0: i32) -> (i32, i32) {
    %c0_i32 = arith.constant 0 : i32
    %c0_i32_0 = arith.constant 0 : i32
    %c0_i32_1 = arith.constant 0 : i32
    return %c0_i32, %c0_i32_0 : i32, i32
  }
  func.func @transform_1(%arg0: i32) -> (i32, i32) {
    %c0_i32 = arith.constant 0 : i32
    %c0_i32_0 = arith.constant 0 : i32
    %c0_i32_1 = arith.constant 0 : i32
    return %c0_i32, %c0_i32_0 : i32, i32
  }
  func.func @transform_2(%arg0: i32) -> (i32, i32, i32) {
    %c0_i32 = arith.constant 0 : i32
    %c0_i32_0 = arith.constant 0 : i32
    %c0_i32_1 = arith.constant 0 : i32
    %c0_i32_2 = arith.constant 0 : i32
    return %c0_i32, %c0_i32_0, %c0_i32_1 : i32, i32, i32
  }
  func.func @transform_3(%arg0: i32) -> (i32, i32) {
    %c0_i32 = arith.constant 0 : i32
    %c0_i32_0 = arith.constant 0 : i32
    %c0_i32_1 = arith.constant 0 : i32
    return %c0_i32, %c0_i32_0 : i32, i32
  }
  func.func @transform_4(%arg0: i32) -> (i32, i32) {
    %c0_i32 = arith.constant 0 : i32
    %c0_i32_0 = arith.constant 0 : i32
    %c0_i32_1 = arith.constant 0 : i32
    return %c0_i32, %c0_i32_0 : i32, i32
  }
  func.func @transform_5(%arg0: i32) -> (i32, i32) {
    %c0_i32 = arith.constant 0 : i32
    %c0_i32_0 = arith.constant 0 : i32
    %c0_i32_1 = arith.constant 0 : i32
    return %c0_i32, %c0_i32_0 : i32, i32
  }
  func.func @transform_6(%arg0: i32) -> (i32, i32, i32) {
    %c0_i32 = arith.constant 0 : i32
    %c0_i32_0 = arith.constant 0 : i32
    %c0_i32_1 = arith.constant 0 : i32
    %c0_i32_2 = arith.constant 0 : i32
    return %c0_i32, %c0_i32_0, %c0_i32_1 : i32, i32, i32
  }
  func.func @transform_7(%arg0: i32) -> (i32, i32) {
    %c0_i32 = arith.constant 0 : i32
    %c0_i32_0 = arith.constant 0 : i32
    %c0_i32_1 = arith.constant 0 : i32
    return %c0_i32, %c0_i32_0 : i32, i32
  }
  func.func @transform_8(%arg0: i32) -> (i32, i32) {
    %c0_i32 = arith.constant 0 : i32
    %c0_i32_0 = arith.constant 0 : i32
    %c0_i32_1 = arith.constant 0 : i32
    return %c0_i32, %c0_i32_0 : i32, i32
  }
  func.func @transform_9(%arg0: i32) -> (i32, i32) {
    %c0_i32 = arith.constant 0 : i32
    %c0_i32_0 = arith.constant 0 : i32
    %c0_i32_1 = arith.constant 0 : i32
    return %c0_i32, %c0_i32_0 : i32, i32
  }
  func.func @transform_10(%arg0: i32) -> (i32, i32) {
    %c0_i32 = arith.constant 0 : i32
    %c0_i32_0 = arith.constant 0 : i32
    %c0_i32_1 = arith.constant 0 : i32
    return %c0_i32, %c0_i32_0 : i32, i32
  }
}

</mosaic_0001>

<llo_original>
// kernel: discriminator_forward.8
$region0: #{discriminator_forward.8}
  #allocation0 [shape = 'u32[]', space=smem, size = 0x4, offset = 0x4, fixed_abs, tag = 'smem constant byte address 0x4 - core index']
  #allocation1 [shape = 'u32[72,128]{1,0:T(1,128)}', space=vmem, size = 0x9000, scoped, tag = 'internal scratch']
  %s0 = inlined_call_operand.vmem [shape: f32[2,3,3,288], index: 0, kind: input, shape index: {}]
  %s1 = inlined_call_operand.vmem [shape: f32[3,3,4,3], index: 1, kind: input, shape index: {}]
  %s2 = inlined_call_operand.vmem [shape: f32[4,1], index: 2, kind: input, shape index: {}]
  %s3 = inlined_call_operand.vmem [shape: f32[2,4,256], index: 3, kind: output, shape index: {}]
  %s4 = sld [smem:[#allocation0]]
  $region45: #{discriminator_forward.8} parent=0
    _
  %s6 = ssub.s32 1, %s4
  %s7 = scalar_select 0, %s6, %s4
  loop: start=0, step=1, limit=4
  $region2: #{discriminator_forward.8} parent=0 // loop_pre_header
    _
  $region3: #{discriminator_forward.8} parent=0 // loop_header
    %s9 = sphi 0, %s13
    %p10 = scmp.ge.s32.totalorder %s9, 4
    %s16 = sphi 0, %s28
    %s17 = sphi 0, %s24
    %s18 = sphi 0, %s16
    %s19 = sphi 0, %s17
    %s20 = sphi 0, %s18
    %s21 = sphi 0, %s19
    %s33 = sphi 0, %s35
    %s36 = sphi 0, %s33
    %s37 = sphi 0, %s36
    %s53 = sphi 0, %s37
    %s57 = sphi 0, %s57
    %s59 = sphi 0, %s57
    %s60 = sphi 0, %s59
    %s74 = sphi 0, %s60
    %s78 = sphi 0, %s78
    %s80 = sphi 0, %s78
    %s81 = sphi 0, %s80
    %s95 = sphi 0, %s81
    %s103 = sphi 0, %s105
    %s106 = sphi 0, %s103
    %s107 = sphi 0, %s106
    %s123 = sphi 0, %s107
  $region4: #{discriminator_forward.8} parent=0 // loop_header_branch
    %12 = sbr.rel (%p10) target = $region8
  $region5: #{discriminator_forward.8} parent=0 // loop_body
    %s14 = ssub.s32 %s9, 1
    %s15 = ssub.s32 %s9, 2
    %s22 = sadd.s32 1, %s17
    %p23 = scmp.ge.s32.totalorder %s22, 1
    %s24 = scalar_select %p23, 0, %s22
    %s25 = sadd.s32 1, %s16
    %s26 = scalar_select %p23, %s25, %s16
    %p27 = scmp.ge.s32.totalorder %s26, 2
    %s28 = scalar_select %p27, 0, %s26
    %s29 = sadd.s32 %s16, %s17
    %s30 = sadd.s32 %s28, %s24
    %s31 = ssub.s32 %s29, %s30
    %p32 = scmp.eq.s32.totalorder %s31, 0
    %s34 = sadd.s32 %s33, 1
    %s35 = scalar_select %p32, %s33, %s34
    %p38 = pneg %p32
    %p39 = scmp.eq.s32.totalorder %s9, 1
    %p40 = por %p38, %p39
    %p41 = scmp.ne.s32.totalorder %s33, %s36
    %p42 = scmp.eq.s32.totalorder %s9, 0
    %p43 = por %p41, %p42
    %p44 = scmp.ne.s32.totalorder %s33, %s36
    %p45 = scmp.eq.s32.totalorder %s14, 1
    %p46 = por %p44, %p45
    %p47 = scmp.ne.s32.totalorder %s36, %s37
    %p48 = scmp.eq.s32.totalorder %s14, 0
    %p49 = por %p47, %p48
    %p50 = scmp.ne.s32.totalorder %s36, %s37
    %p51 = scmp.eq.s32.totalorder %s15, 1
    %p52 = por %p50, %p51
    %p54 = scmp.ne.s32.totalorder %s37, %s53
    %p55 = scmp.eq.s32.totalorder %s15, 0
    %p56 = por %p54, %p55
    %s58 = sadd.s32 %s57, 1
    %p61 = scmp.eq.s32.totalorder %s9, 1
    %p62 = scmp.ne.s32.totalorder %s57, %s59
    %p63 = scmp.eq.s32.totalorder %s9, 0
    %p64 = por %p62, %p63
    %p65 = scmp.ne.s32.totalorder %s57, %s59
    %p66 = scmp.eq.s32.totalorder %s14, 1
    %p67 = por %p65, %p66
    %p68 = scmp.ne.s32.totalorder %s59, %s60
    %p69 = scmp.eq.s32.totalorder %s14, 0
    %p70 = por %p68, %p69
    %p71 = scmp.ne.s32.totalorder %s59, %s60
    %p72 = scmp.eq.s32.totalorder %s15, 1
    %p73 = por %p71, %p72
    %p75 = scmp.ne.s32.totalorder %s60, %s74
    %p76 = scmp.eq.s32.totalorder %s15, 0
    %p77 = por %p75, %p76
    %s79 = sadd.s32 %s78, 1
    %p82 = scmp.eq.s32.totalorder %s9, 1
    %p83 = scmp.ne.s32.totalorder %s78, %s80
    %p84 = scmp.eq.s32.totalorder %s9, 0
    %p85 = por %p83, %p84
    %p86 = scmp.ne.s32.totalorder %s78, %s80
    %p87 = scmp.eq.s32.totalorder %s14, 1
    %p88 = por %p86, %p87
    %p89 = scmp.ne.s32.totalorder %s80, %s81
    %p90 = scmp.eq.s32.totalorder %s14, 0
    %p91 = por %p89, %p90
    %p92 = scmp.ne.s32.totalorder %s80, %s81
    %p93 = scmp.eq.s32.totalorder %s15, 1
    %p94 = por %p92, %p93
    %p96 = scmp.ne.s32.totalorder %s81, %s95
    %p97 = scmp.eq.s32.totalorder %s15, 0
    %p98 = por %p96, %p97
    %s99 = ssub.s32 %s16, %s28
    %s100 = ssub.s32 %s17, %s24
    %s101 = sor.u32 %s99, %s100
    %p102 = scmp.eq.s32.totalorder %s101, 0
    %s104 = sadd.s32 %s103, 1
    %s105 = scalar_select %p102, %s103, %s104
    %p108 = pneg %p102
    %p109 = scmp.eq.s32.totalorder %s9, 1
    %p110 = por %p108, %p109
    %p111 = scmp.ne.s32.totalorder %s103, %s106
    %p112 = scmp.eq.s32.totalorder %s9, 0
    %p113 = por %p111, %p112
    %p114 = scmp.ne.s32.totalorder %s103, %s106
    %p115 = scmp.eq.s32.totalorder %s14, 1
    %p116 = por %p114, %p115
    %p117 = scmp.ne.s32.totalorder %s106, %s107
    %p118 = scmp.eq.s32.totalorder %s14, 0
    %p119 = por %p117, %p118
    %p120 = scmp.ne.s32.totalorder %s106, %s107
    %p121 = scmp.eq.s32.totalorder %s15, 1
    %p122 = por %p120, %p121
    %p124 = scmp.ne.s32.totalorder %s107, %s123
    %p125 = scmp.eq.s32.totalorder %s15, 0
    %p126 = por %p124, %p125
    %p127 = scmp.le.s32.totalorder 1, %s9
    %p128 = scmp.lt.s32.totalorder %s9, 3
    %p129 = pnand %p127, %p128
    %p130 = pneg %p129
    // Predicated region
    $region9: #{discriminator_forward.8} parent=5 // pred_check
      _
    $region10: #{discriminator_forward.8} parent=5 // pred_check_branch
      %132 = sbr.rel (%p129) target = $region12
    $region11: #{discriminator_forward.8} parent=5 // pred_region
      %s133 = ssub.s32 %s9, 1
      // Predicated region
      $region13: #{discriminator_forward.8} parent=11 // pred_check
        %p134 = pneg %p70
      $region14: #{discriminator_forward.8} parent=11 // pred_check_branch
        %136 = sbr.rel (%p134) target = $region16
      $region15: #{discriminator_forward.8} parent=11 // pred_region
        _
      $region16: #{discriminator_forward.8} parent=11 // pred_fallthru
        _
      // Predicated region
      $region17: #{discriminator_forward.8} parent=11 // pred_check
        %p137 = pneg %p91
      $region18: #{discriminator_forward.8} parent=11 // pred_check_branch
        %139 = sbr.rel (%p137) target = $region20
      $region19: #{discriminator_forward.8} parent=11 // pred_region
        _
      $region20: #{discriminator_forward.8} parent=11 // pred_fallthru
        _
    $region12: #{discriminator_forward.8} parent=5 // pred_fallthru
      _
    %p140 = scmp.lt.s32.totalorder %s9, 2
    // Predicated region
    $region21: #{discriminator_forward.8} parent=5 // pred_check
      %p141 = pneg %p140
    $region22: #{discriminator_forward.8} parent=5 // pred_check_branch
      %143 = sbr.rel (%p141) target = $region24
    $region23: #{discriminator_forward.8} parent=5 // pred_region
      // Predicated region
      $region25: #{discriminator_forward.8} parent=23 // pred_check
        %p144 = pneg %p43
      $region26: #{discriminator_forward.8} parent=23 // pred_check_branch
        %146 = sbr.rel (%p144) target = $region28
      $region27: #{discriminator_forward.8} parent=23 // pred_region
        %s147 = sadd.s32 %s16, %s17
        %p148 = scmp.lt.s32.totalorder %s147, 1
        %s149 = scalar_select %p148, %s147, 1
        %s150 = smul.addr %s149, 9
        %s151 = smul.addr %s150, 4
        %s152 = scalar_lea.vmem %s0, %s151
        %s153 = sadd.s32 %s16, %s17
      $region28: #{discriminator_forward.8} parent=23 // pred_fallthru
        _
    $region24: #{discriminator_forward.8} parent=5 // pred_fallthru
      _
    %p154 = scmp.le.s32.totalorder 1, %s9
    %p155 = scmp.lt.s32.totalorder %s9, 3
    %p156 = pnand %p154, %p155
    %p157 = pneg %p156
    // Predicated region
    $region29: #{discriminator_forward.8} parent=5 // pred_check
      _
    $region30: #{discriminator_forward.8} parent=5 // pred_check_branch
      %159 = sbr.rel (%p156) target = $region32
    $region31: #{discriminator_forward.8} parent=5 // pred_region
      %s160 = ssub.s32 %s9, 1
      %s161 = sadd.s32 %s18, %s19
      %p162 = scmp.lt.s32.totalorder %s161, 1
      %s163 = scalar_select %p162, %s161, 1
      %s164 = smul.addr %s163, 9
      %s165 = smul.addr %s164, 4
      %s166 = scalar_lea.vmem %s0, %s165
      %p167 = pneg %p49
      %p168 = pneg %p46
      %p169 = pneg %p70
      %p170 = pneg %p67
      %p171 = pneg %p91
      %p172 = pneg %p88
      %p173 = pneg %p119
      %p174 = pneg %p116
      %s175 = smul.u32 2, %s19
      %p176 = scmp.lt.s32.totalorder %s18, 1
      %s177 = scalar_select %p176, %s18, 1
      %p178 = scmp.lt.s32.totalorder %s175, 1
      %s179 = scalar_select %p178, %s175, 1
      %s180 = smul.addr %s177, 2
      %s181 = sadd.s32 %s179, %s180
      %s182 = smul.addr %s181, 4
      %s183 = scalar_lea.vmem %s3, %s182
      %s184 = sadd.s32 %s18, %s19
      %p185 = scmp.lt.s32.totalorder %s184, 1
      %s186 = scalar_select %p185, %s184, 1
      %s187 = smul.addr %s186, 9
      %s188 = smul.addr %s187, 4
      %s189 = scalar_lea.vmem %s0, %s188
      %s190 = sadd.s32 %s18, %s19
      %s191 = smul.u32 2, %s19
      %p192 = scmp.lt.s32.totalorder %s18, 1
      %s193 = scalar_select %p192, %s18, 1
      %p194 = scmp.lt.s32.totalorder %s191, 1
      %s195 = scalar_select %p194, %s191, 1
      %s196 = smul.addr %s193, 2
      %s197 = sadd.s32 %s195, %s196
      %s198 = smul.addr %s197, 4
      %s199 = scalar_lea.vmem %s3, %s198
      %s200 = smul.u32 2, %s19
      %v201 = vld [vmem:[%s189] sm:$0x77]
      %v202 = vld [vmem:[%s1] sm:$0xf]
      %s203 = scalar_lea.vmem %s189, 12
      %v204 = vld [vmem:[%s203] sm:$0x77]
      %s205 = scalar_lea.vmem %s1, 4
      %v206 = vld [vmem:[%s205] sm:$0xf]
      %208 = vst [vmem:[#allocation1] ss:$2 sm:$0xff] %v204
      %v209 = vld.sshfl [vmem:[#allocation1] sm:$0xff pattern:$0x75316420]
      %v210 = vld.sshfl [vmem:[#allocation1 + $0x8] sm:$0xff pattern:$0x75316420]
      %vm211 = vcmask 23552
      %v213 = vsel %vm211, %v206, 0
      %vm215 = vcmask 1042432
      %v216 = vsel %vm215, %v209, 0
      %v218 = vsel %vm215, %v210, 0
      %220 = vmatpush.msra.mxu0 0.0
      %221 = vmatpush.msra.mxu0 0.0
      %222 = vmatpush.msra.mxu0 0.0
      %223 = vmatpush.msra.mxu0 0.0
      %224 = vmatpush.msra.mxu0 0.0
      %225 = vmatpush.msra.mxu0 0.0
      %226 = vmatpush.msra.mxu0 0.0
      %227 = vmatpush.msra.mxu0 0.0
      %228 = vmatpush.msra.mxu0 0.0
      %229 = vmatpush.msra.mxu0 0.0
      %230 = vmatpush.msra.mxu0 0.0
      %231 = vmatpush.msra.mxu0 0.0
      %232 = vmatpush.msra.mxu0 0.0
      %233 = vmatpush.msra.mxu0 0.0
      %234 = vmatpush.msra.mxu0 0.0
      %235 = vmatpush.msra.mxu0 %v216
      %236 = vmatmul.f32.gmra.mxu0 %v213
      %v237 = vpop.f32.mrf.mxu0
      %v238 = vadd.f32 0.0, %v237
      %239 = vdwg.mxu0
      %240 = vmatpush.msra.mxu0 0.0
      %241 = vmatpush.msra.mxu0 0.0
      %242 = vmatpush.msra.mxu0 0.0
      %243 = vmatpush.msra.mxu0 0.0
      %244 = vmatpush.msra.mxu0 0.0
      %245 = vmatpush.msra.mxu0 0.0
      %246 = vmatpush.msra.mxu0 0.0
      %247 = vmatpush.msra.mxu0 0.0
      %248 = vmatpush.msra.mxu0 0.0
      %249 = vmatpush.msra.mxu0 0.0
      %250 = vmatpush.msra.mxu0 0.0
      %251 = vmatpush.msra.mxu0 0.0
      %252 = vmatpush.msra.mxu0 0.0
      %253 = vmatpush.msra.mxu0 0.0
      %254 = vmatpush.msra.mxu0 0.0
      %255 = vmatpush.msra.mxu0 %v218
      %256 = vmatmul.f32.gmra.mxu0 %v213
      %v257 = vpop.f32.mrf.mxu0
      %v258 = vadd.f32 0.0, %v257
      %259 = vdwg.mxu0
      %261 = vst [vmem:[#allocation1] ss:$2 sm:$0xff] %v201
      %v262 = vld.sshfl [vmem:[#allocation1] sm:$0xff pattern:$0x75316420]
      %v263 = vld.sshfl [vmem:[#allocation1 + $0x8] sm:$0xff pattern:$0x75316420]
      %v265 = vsel %vm211, %v202, 0
      %v267 = vsel %vm215, %v262, 0
      %v269 = vsel %vm215, %v263, 0
      %271 = vmatpush.msra.mxu0 0.0
      %272 = vmatpush.msra.mxu0 0.0
      %273 = vmatpush.msra.mxu0 0.0
      %274 = vmatpush.msra.mxu0 0.0
      %275 = vmatpush.msra.mxu0 0.0
      %276 = vmatpush.msra.mxu0 0.0
      %277 = vmatpush.msra.mxu0 0.0
      %278 = vmatpush.msra.mxu0 0.0
      %279 = vmatpush.msra.mxu0 0.0
      %280 = vmatpush.msra.mxu0 0.0
      %281 = vmatpush.msra.mxu0 0.0
      %282 = vmatpush.msra.mxu0 0.0
      %283 = vmatpush.msra.mxu0 0.0
      %284 = vmatpush.msra.mxu0 0.0
      %285 = vmatpush.msra.mxu0 0.0
      %286 = vmatpush.msra.mxu0 %v267
      %287 = vmatmul.f32.gmra.mxu0 %v265
      %v288 = vpop.f32.mrf.mxu0
      %v289 = vadd.f32 %v238, %v288
      %290 = vdwg.mxu0
      %291 = vmatpush.msra.mxu0 0.0
      %292 = vmatpush.msra.mxu0 0.0
      %293 = vmatpush.msra.mxu0 0.0
      %294 = vmatpush.msra.mxu0 0.0
      %295 = vmatpush.msra.mxu0 0.0
      %296 = vmatpush.msra.mxu0 0.0
      %297 = vmatpush.msra.mxu0 0.0
      %298 = vmatpush.msra.mxu0 0.0
      %299 = vmatpush.msra.mxu0 0.0
      %300 = vmatpush.msra.mxu0 0.0
      %301 = vmatpush.msra.mxu0 0.0
      %302 = vmatpush.msra.mxu0 0.0
      %303 = vmatpush.msra.mxu0 0.0
      %304 = vmatpush.msra.mxu0 0.0
      %305 = vmatpush.msra.mxu0 0.0
      %306 = vmatpush.msra.mxu0 %v269
      %307 = vmatmul.f32.gmra.mxu0 %v265
      %v308 = vpop.f32.mrf.mxu0
      %v309 = vadd.f32 %v258, %v308
      %310 = vdwg.mxu0
      %s311 = scalar_lea.vmem %s189, 24
      %v312 = vld [vmem:[%s311] sm:$0x77]
      %s313 = scalar_lea.vmem %s1, 8
      %v314 = vld [vmem:[%s313] sm:$0xf]
      %316 = vst [vmem:[#allocation1] ss:$2 sm:$0xff] %v312
      %v317 = vld.sshfl [vmem:[#allocation1] sm:$0xff pattern:$0x75316420]
      %v318 = vld.sshfl [vmem:[#allocation1 + $0x8] sm:$0xff pattern:$0x75316420]
      %v320 = vsel %vm211, %v314, 0
      %v322 = vsel %vm215, %v317, 0
      %v324 = vsel %vm215, %v318, 0
      %326 = vmatpush.msra.mxu0 0.0
      %327 = vmatpush.msra.mxu0 0.0
      %328 = vmatpush.msra.mxu0 0.0
      %329 = vmatpush.msra.mxu0 0.0
      %330 = vmatpush.msra.mxu0 0.0
      %331 = vmatpush.msra.mxu0 0.0
      %332 = vmatpush.msra.mxu0 0.0
      %333 = vmatpush.msra.mxu0 0.0
      %334 = vmatpush.msra.mxu0 0.0
      %335 = vmatpush.msra.mxu0 0.0
      %336 = vmatpush.msra.mxu0 0.0
      %337 = vmatpush.msra.mxu0 0.0
      %338 = vmatpush.msra.mxu0 0.0
      %339 = vmatpush.msra.mxu0 0.0
      %340 = vmatpush.msra.mxu0 0.0
      %341 = vmatpush.msra.mxu0 %v322
      %342 = vmatmul.f32.gmra.mxu0 %v320
      %v343 = vpop.f32.mrf.mxu0
      %v344 = vadd.f32 0.0, %v343
      %345 = vdwg.mxu0
      %346 = vmatpush.msra.mxu0 0.0
      %347 = vmatpush.msra.mxu0 0.0
      %348 = vmatpush.msra.mxu0 0.0
      %349 = vmatpush.msra.mxu0 0.0
      %350 = vmatpush.msra.mxu0 0.0
      %351 = vmatpush.msra.mxu0 0.0
      %352 = vmatpush.msra.mxu0 0.0
      %353 = vmatpush.msra.mxu0 0.0
      %354 = vmatpush.msra.mxu0 0.0
      %355 = vmatpush.msra.mxu0 0.0
      %356 = vmatpush.msra.mxu0 0.0
      %357 = vmatpush.msra.mxu0 0.0
      %358 = vmatpush.msra.mxu0 0.0
      %359 = vmatpush.msra.mxu0 0.0
      %360 = vmatpush.msra.mxu0 0.0
      %361 = vmatpush.msra.mxu0 %v324
      %362 = vmatmul.f32.gmra.mxu0 %v320
      %v363 = vpop.f32.mrf.mxu0
      %v364 = vadd.f32 0.0, %v363
      %365 = vdwg.mxu0
      %v366 = vadd.f32 %v289, %v344
      %v367 = vadd.f32 %v309, %v364
      %v368 = vld [vmem:[%s189] sm:$0x77]
      %v369 = vld [vmem:[%s189 + $0x8] sm:$0x7]
      %s370 = scalar_lea.vmem %s1, 12
      %v371 = vld [vmem:[%s370] sm:$0xf]
      %374 = vst [vmem:[#allocation1] ss:$2 sm:$0xff] %v368
      %s375 = scalar_lea.vmem [#allocation1], 16
      %376 = vst [vmem:[%s375] ss:$2 sm:$0xff] %v369
      %v377 = vld.sshfl [vmem:[#allocation1] sm:$0xff pattern:$0x75316420]
      %v378 = vld.sshfl [vmem:[#allocation1 + $0x8] sm:$0xff pattern:$0x75316420]
      %v379 = vld.sshfl [vmem:[#allocation1 + $0x10] sm:$0xff pattern:$0x75316420]
      %380 = vrot.lane.b32.xlu0 %v377, 112
      %v381 = vpop.permute.xlu0 %380
      %382 = vrot.lane.b32.xlu0 %v378, 112
      %v383 = vpop.permute.xlu0 %382
      %384 = vrot.lane.b32.xlu0 %v379, 112
      %v385 = vpop.permute.xlu0 %384
      %vm386 = vcmask 916480
      %v387 = vsel %vm386, %v381, %v383
      %v388 = vsel %vm386, %v383, %v385
      %v390 = vsel %vm211, %v371, 0
      %v392 = vsel %vm215, %v387, 0
      %v394 = vsel %vm215, %v388, 0
      %396 = vmatpush.msra.mxu0 0.0
      %397 = vmatpush.msra.mxu0 0.0
      %398 = vmatpush.msra.mxu0 0.0
      %399 = vmatpush.msra.mxu0 0.0
      %400 = vmatpush.msra.mxu0 0.0
      %401 = vmatpush.msra.mxu0 0.0
      %402 = vmatpush.msra.mxu0 0.0
      %403 = vmatpush.msra.mxu0 0.0
      %404 = vmatpush.msra.mxu0 0.0
      %405 = vmatpush.msra.mxu0 0.0
      %406 = vmatpush.msra.mxu0 0.0
      %407 = vmatpush.msra.mxu0 0.0
      %408 = vmatpush.msra.mxu0 0.0
      %409 = vmatpush.msra.mxu0 0.0
      %410 = vmatpush.msra.mxu0 0.0
      %411 = vmatpush.msra.mxu0 %v392
      %412 = vmatmul.f32.gmra.mxu0 %v390
      %v413 = vpop.f32.mrf.mxu0
      %v414 = vadd.f32 0.0, %v413
      %415 = vdwg.mxu0
      %416 = vmatpush.msra.mxu0 0.0
      %417 = vmatpush.msra.mxu0 0.0
      %418 = vmatpush.msra.mxu0 0.0
      %419 = vmatpush.msra.mxu0 0.0
      %420 = vmatpush.msra.mxu0 0.0
      %421 = vmatpush.msra.mxu0 0.0
      %422 = vmatpush.msra.mxu0 0.0
      %423 = vmatpush.msra.mxu0 0.0
      %424 = vmatpush.msra.mxu0 0.0
      %425 = vmatpush.msra.mxu0 0.0
      %426 = vmatpush.msra.mxu0 0.0
      %427 = vmatpush.msra.mxu0 0.0
      %428 = vmatpush.msra.mxu0 0.0
      %429 = vmatpush.msra.mxu0 0.0
      %430 = vmatpush.msra.mxu0 0.0
      %431 = vmatpush.msra.mxu0 %v394
      %432 = vmatmul.f32.gmra.mxu0 %v390
      %v433 = vpop.f32.mrf.mxu0
      %v434 = vadd.f32 0.0, %v433
      %435 = vdwg.mxu0
      %v436 = vadd.f32 %v366, %v414
      %v437 = vadd.f32 %v367, %v434
      %v438 = vld [vmem:[%s203] sm:$0x77]
      %v439 = vld [vmem:[%s203 + $0x8] sm:$0x7]
      %s440 = scalar_lea.vmem %s1, 16
      %v441 = vld [vmem:[%s440] sm:$0xf]
      %444 = vst [vmem:[#allocation1] ss:$2 sm:$0xff] %v438
      %s445 = scalar_lea.vmem [#allocation1], 16
      %446 = vst [vmem:[%s445] ss:$2 sm:$0xff] %v439
      %v447 = vld.sshfl [vmem:[#allocation1] sm:$0xff pattern:$0x75316420]
      %v448 = vld.sshfl [vmem:[#allocation1 + $0x8] sm:$0xff pattern:$0x75316420]
      %v449 = vld.sshfl [vmem:[#allocation1 + $0x10] sm:$0xff pattern:$0x75316420]
      %450 = vrot.lane.b32.xlu0 %v447, 112
      %v451 = vpop.permute.xlu0 %450
      %452 = vrot.lane.b32.xlu0 %v448, 112
      %v453 = vpop.permute.xlu0 %452
      %454 = vrot.lane.b32.xlu0 %v449, 112
      %v455 = vpop.permute.xlu0 %454
      %v456 = vsel %vm386, %v451, %v453
      %v457 = vsel %vm386, %v453, %v455
      %v459 = vsel %vm211, %v441, 0
      %v461 = vsel %vm215, %v456, 0
      %v463 = vsel %vm215, %v457, 0
      %465 = vmatpush.msra.mxu0 0.0
      %466 = vmatpush.msra.mxu0 0.0
      %467 = vmatpush.msra.mxu0 0.0
      %468 = vmatpush.msra.mxu0 0.0
      %469 = vmatpush.msra.mxu0 0.0
      %470 = vmatpush.msra.mxu0 0.0
      %471 = vmatpush.msra.mxu0 0.0
      %472 = vmatpush.msra.mxu0 0.0
      %473 = vmatpush.msra.mxu0 0.0
      %474 = vmatpush.msra.mxu0 0.0
      %475 = vmatpush.msra.mxu0 0.0
      %476 = vmatpush.msra.mxu0 0.0
      %477 = vmatpush.msra.mxu0 0.0
      %478 = vmatpush.msra.mxu0 0.0
      %479 = vmatpush.msra.mxu0 0.0
      %480 = vmatpush.msra.mxu0 %v461
      %481 = vmatmul.f32.gmra.mxu0 %v459
      %v482 = vpop.f32.mrf.mxu0
      %v483 = vadd.f32 0.0, %v482
      %484 = vdwg.mxu0
      %485 = vmatpush.msra.mxu0 0.0
      %486 = vmatpush.msra.mxu0 0.0
      %487 = vmatpush.msra.mxu0 0.0
      %488 = vmatpush.msra.mxu0 0.0
      %489 = vmatpush.msra.mxu0 0.0
      %490 = vmatpush.msra.mxu0 0.0
      %491 = vmatpush.msra.mxu0 0.0
      %492 = vmatpush.msra.mxu0 0.0
      %493 = vmatpush.msra.mxu0 0.0
      %494 = vmatpush.msra.mxu0 0.0
      %495 = vmatpush.msra.mxu0 0.0
      %496 = vmatpush.msra.mxu0 0.0
      %497 = vmatpush.msra.mxu0 0.0
      %498 = vmatpush.msra.mxu0 0.0
      %499 = vmatpush.msra.mxu0 0.0
      %500 = vmatpush.msra.mxu0 %v463
      %501 = vmatmul.f32.gmra.mxu0 %v459
      %v502 = vpop.f32.mrf.mxu0
      %v503 = vadd.f32 0.0, %v502
      %504 = vdwg.mxu0
      %v505 = vadd.f32 %v436, %v483
      %v506 = vadd.f32 %v437, %v503
      %v507 = vld [vmem:[%s311] sm:$0x77]
      %v508 = vld [vmem:[%s311 + $0x8] sm:$0x7]
      %s509 = scalar_lea.vmem %s1, 20
      %v510 = vld [vmem:[%s509] sm:$0xf]
      %513 = vst [vmem:[#allocation1] ss:$2 sm:$0xff] %v507
      %s514 = scalar_lea.vmem [#allocation1], 16
      %515 = vst [vmem:[%s514] ss:$2 sm:$0xff] %v508
      %v516 = vld.sshfl [vmem:[#allocation1] sm:$0xff pattern:$0x75316420]
      %v517 = vld.sshfl [vmem:[#allocation1 + $0x8] sm:$0xff pattern:$0x75316420]
      %v518 = vld.sshfl [vmem:[#allocation1 + $0x10] sm:$0xff pattern:$0x75316420]
      %519 = vrot.lane.b32.xlu0 %v516, 112
      %v520 = vpop.permute.xlu0 %519
      %521 = vrot.lane.b32.xlu0 %v517, 112
      %v522 = vpop.permute.xlu0 %521
      %523 = vrot.lane.b32.xlu0 %v518, 112
      %v524 = vpop.permute.xlu0 %523
      %v525 = vsel %vm386, %v520, %v522
      %v526 = vsel %vm386, %v522, %v524
      %v528 = vsel %vm211, %v510, 0
      %v530 = vsel %vm215, %v525, 0
      %v532 = vsel %vm215, %v526, 0
      %534 = vmatpush.msra.mxu0 0.0
      %535 = vmatpush.msra.mxu0 0.0
      %536 = vmatpush.msra.mxu0 0.0
      %537 = vmatpush.msra.mxu0 0.0
      %538 = vmatpush.msra.mxu0 0.0
      %539 = vmatpush.msra.mxu0 0.0
      %540 = vmatpush.msra.mxu0 0.0
      %541 = vmatpush.msra.mxu0 0.0
      %542 = vmatpush.msra.mxu0 0.0
      %543 = vmatpush.msra.mxu0 0.0
      %544 = vmatpush.msra.mxu0 0.0
      %545 = vmatpush.msra.mxu0 0.0
      %546 = vmatpush.msra.mxu0 0.0
      %547 = vmatpush.msra.mxu0 0.0
      %548 = vmatpush.msra.mxu0 0.0
      %549 = vmatpush.msra.mxu0 %v530
      %550 = vmatmul.f32.gmra.mxu0 %v528
      %v551 = vpop.f32.mrf.mxu0
      %v552 = vadd.f32 0.0, %v551
      %553 = vdwg.mxu0
      %554 = vmatpush.msra.mxu0 0.0
      %555 = vmatpush.msra.mxu0 0.0
      %556 = vmatpush.msra.mxu0 0.0
      %557 = vmatpush.msra.mxu0 0.0
      %558 = vmatpush.msra.mxu0 0.0
      %559 = vmatpush.msra.mxu0 0.0
      %560 = vmatpush.msra.mxu0 0.0
      %561 = vmatpush.msra.mxu0 0.0
      %562 = vmatpush.msra.mxu0 0.0
      %563 = vmatpush.msra.mxu0 0.0
      %564 = vmatpush.msra.mxu0 0.0
      %565 = vmatpush.msra.mxu0 0.0
      %566 = vmatpush.msra.mxu0 0.0
      %567 = vmatpush.msra.mxu0 0.0
      %568 = vmatpush.msra.mxu0 0.0
      %569 = vmatpush.msra.mxu0 %v532
      %570 = vmatmul.f32.gmra.mxu0 %v528
      %v571 = vpop.f32.mrf.mxu0
      %v572 = vadd.f32 0.0, %v571
      %573 = vdwg.mxu0
      %v574 = vadd.f32 %v505, %v552
      %v575 = vadd.f32 %v506, %v572
      %v576 = vld [vmem:[%s189] sm:$0x77]
      %v577 = vld [vmem:[%s189 + $0x8] sm:$0x7]
      %s578 = scalar_lea.vmem %s1, 24
      %v579 = vld [vmem:[%s578] sm:$0xf]
      %582 = vst [vmem:[#allocation1] ss:$2 sm:$0xff] %v576
      %s583 = scalar_lea.vmem [#allocation1], 16
      %584 = vst [vmem:[%s583] ss:$2 sm:$0xff] %v577
      %v585 = vld.sshfl [vmem:[#allocation1] sm:$0xff pattern:$0x75316420]
      %v586 = vld.sshfl [vmem:[#allocation1 + $0x8] sm:$0xff pattern:$0x75316420]
      %v587 = vld.sshfl [vmem:[#allocation1 + $0x10] sm:$0xff pattern:$0x75316420]
      %588 = vrot.lane.b32.xlu0 %v585, 96
      %v589 = vpop.permute.xlu0 %588
      %590 = vrot.lane.b32.xlu0 %v586, 96
      %v591 = vpop.permute.xlu0 %590
      %592 = vrot.lane.b32.xlu0 %v587, 96
      %v593 = vpop.permute.xlu0 %592
      %vm594 = vcmask 785408
      %v595 = vsel %vm594, %v589, %v591
      %v596 = vsel %vm594, %v591, %v593
      %v598 = vsel %vm211, %v579, 0
      %v600 = vsel %vm215, %v595, 0
      %v602 = vsel %vm215, %v596, 0
      %604 = vmatpush.msra.mxu0 0.0
      %605 = vmatpush.msra.mxu0 0.0
      %606 = vmatpush.msra.mxu0 0.0
      %607 = vmatpush.msra.mxu0 0.0
      %608 = vmatpush.msra.mxu0 0.0
      %609 = vmatpush.msra.mxu0 0.0
      %610 = vmatpush.msra.mxu0 0.0
      %611 = vmatpush.msra.mxu0 0.0
      %612 = vmatpush.msra.mxu0 0.0
      %613 = vmatpush.msra.mxu0 0.0
      %614 = vmatpush.msra.mxu0 0.0
      %615 = vmatpush.msra.mxu0 0.0
      %616 = vmatpush.msra.mxu0 0.0
      %617 = vmatpush.msra.mxu0 0.0
      %618 = vmatpush.msra.mxu0 0.0
      %619 = vmatpush.msra.mxu0 %v600
      %620 = vmatmul.f32.gmra.mxu0 %v598
      %v621 = vpop.f32.mrf.mxu0
      %v622 = vadd.f32 0.0, %v621
      %623 = vdwg.mxu0
      %624 = vmatpush.msra.mxu0 0.0
      %625 = vmatpush.msra.mxu0 0.0
      %626 = vmatpush.msra.mxu0 0.0
      %627 = vmatpush.msra.mxu0 0.0
      %628 = vmatpush.msra.mxu0 0.0
      %629 = vmatpush.msra.mxu0 0.0
      %630 = vmatpush.msra.mxu0 0.0
      %631 = vmatpush.msra.mxu0 0.0
      %632 = vmatpush.msra.mxu0 0.0
      %633 = vmatpush.msra.mxu0 0.0
      %634 = vmatpush.msra.mxu0 0.0
      %635 = vmatpush.msra.mxu0 0.0
      %636 = vmatpush.msra.mxu0 0.0
      %637 = vmatpush.msra.mxu0 0.0
      %638 = vmatpush.msra.mxu0 0.0
      %639 = vmatpush.msra.mxu0 %v602
      %640 = vmatmul.f32.gmra.mxu0 %v598
      %v641 = vpop.f32.mrf.mxu0
      %v642 = vadd.f32 0.0, %v641
      %643 = vdwg.mxu0
      %v644 = vadd.f32 %v574, %v622
      %v645 = vadd.f32 %v575, %v642
      %v646 = vld [vmem:[%s203] sm:$0x77]
      %v647 = vld [vmem:[%s203 + $0x8] sm:$0x7]
      %s648 = scalar_lea.vmem %s1, 28
      %v649 = vld [vmem:[%s648] sm:$0xf]
      %652 = vst [vmem:[#allocation1] ss:$2 sm:$0xff] %v646
      %s653 = scalar_lea.vmem [#allocation1], 16
      %654 = vst [vmem:[%s653] ss:$2 sm:$0xff] %v647
      %v655 = vld.sshfl [vmem:[#allocation1] sm:$0xff pattern:$0x75316420]
      %v656 = vld.sshfl [vmem:[#allocation1 + $0x8] sm:$0xff pattern:$0x75316420]
      %v657 = vld.sshfl [vmem:[#allocation1 + $0x10] sm:$0xff pattern:$0x75316420]
      %658 = vrot.lane.b32.xlu0 %v655, 96
      %v659 = vpop.permute.xlu0 %658
      %660 = vrot.lane.b32.xlu0 %v656, 96
      %v661 = vpop.permute.xlu0 %660
      %662 = vrot.lane.b32.xlu0 %v657, 96
      %v663 = vpop.permute.xlu0 %662
      %v664 = vsel %vm594, %v659, %v661
      %v665 = vsel %vm594, %v661, %v663
      %v667 = vsel %vm211, %v649, 0
      %v669 = vsel %vm215, %v664, 0
      %v671 = vsel %vm215, %v665, 0
      %673 = vmatpush.msra.mxu0 0.0
      %674 = vmatpush.msra.mxu0 0.0
      %675 = vmatpush.msra.mxu0 0.0
      %676 = vmatpush.msra.mxu0 0.0
      %677 = vmatpush.msra.mxu0 0.0
      %678 = vmatpush.msra.mxu0 0.0
      %679 = vmatpush.msra.mxu0 0.0
      %680 = vmatpush.msra.mxu0 0.0
      %681 = vmatpush.msra.mxu0 0.0
      %682 = vmatpush.msra.mxu0 0.0
      %683 = vmatpush.msra.mxu0 0.0
      %684 = vmatpush.msra.mxu0 0.0
      %685 = vmatpush.msra.mxu0 0.0
      %686 = vmatpush.msra.mxu0 0.0
      %687 = vmatpush.msra.mxu0 0.0
      %688 = vmatpush.msra.mxu0 %v669
      %689 = vmatmul.f32.gmra.mxu0 %v667
      %v690 = vpop.f32.mrf.mxu0
      %v691 = vadd.f32 0.0, %v690
      %692 = vdwg.mxu0
      %693 = vmatpush.msra.mxu0 0.0
      %694 = vmatpush.msra.mxu0 0.0
      %695 = vmatpush.msra.mxu0 0.0
      %696 = vmatpush.msra.mxu0 0.0
      %697 = vmatpush.msra.mxu0 0.0
      %698 = vmatpush.msra.mxu0 0.0
      %699 = vmatpush.msra.mxu0 0.0
      %700 = vmatpush.msra.mxu0 0.0
      %701 = vmatpush.msra.mxu0 0.0
      %702 = vmatpush.msra.mxu0 0.0
      %703 = vmatpush.msra.mxu0 0.0
      %704 = vmatpush.msra.mxu0 0.0
      %705 = vmatpush.msra.mxu0 0.0
      %706 = vmatpush.msra.mxu0 0.0
      %707 = vmatpush.msra.mxu0 0.0
      %708 = vmatpush.msra.mxu0 %v671
      %709 = vmatmul.f32.gmra.mxu0 %v667
      %v710 = vpop.f32.mrf.mxu0
      %v711 = vadd.f32 0.0, %v710
      %712 = vdwg.mxu0
      %v713 = vadd.f32 %v644, %v691
      %v714 = vadd.f32 %v645, %v711
      %v715 = vld [vmem:[%s311] sm:$0x77]
      %v716 = vld [vmem:[%s311 + $0x8] sm:$0x7]
      %s717 = scalar_lea.vmem %s1, 32
      %v718 = vld [vmem:[%s717] sm:$0xf]
      %721 = vst [vmem:[#allocation1] ss:$2 sm:$0xff] %v715
      %s722 = scalar_lea.vmem [#allocation1], 16
      %723 = vst [vmem:[%s722] ss:$2 sm:$0xff] %v716
      %v724 = vld.sshfl [vmem:[#allocation1] sm:$0xff pattern:$0x75316420]
      %v725 = vld.sshfl [vmem:[#allocation1 + $0x8] sm:$0xff pattern:$0x75316420]
      %v726 = vld.sshfl [vmem:[#allocation1 + $0x10] sm:$0xff pattern:$0x75316420]
      %727 = vrot.lane.b32.xlu0 %v724, 96
      %v728 = vpop.permute.xlu0 %727
      %729 = vrot.lane.b32.xlu0 %v725, 96
      %v730 = vpop.permute.xlu0 %729
      %731 = vrot.lane.b32.xlu0 %v726, 96
      %v732 = vpop.permute.xlu0 %731
      %v733 = vsel %vm594, %v728, %v730
      %v734 = vsel %vm594, %v730, %v732
      %v736 = vsel %vm211, %v718, 0
      %v738 = vsel %vm215, %v733, 0
      %v740 = vsel %vm215, %v734, 0
      %742 = vmatpush.msra.mxu0 0.0
      %743 = vmatpush.msra.mxu0 0.0
      %744 = vmatpush.msra.mxu0 0.0
      %745 = vmatpush.msra.mxu0 0.0
      %746 = vmatpush.msra.mxu0 0.0
      %747 = vmatpush.msra.mxu0 0.0
      %748 = vmatpush.msra.mxu0 0.0
      %749 = vmatpush.msra.mxu0 0.0
      %750 = vmatpush.msra.mxu0 0.0
      %751 = vmatpush.msra.mxu0 0.0
      %752 = vmatpush.msra.mxu0 0.0
      %753 = vmatpush.msra.mxu0 0.0
      %754 = vmatpush.msra.mxu0 0.0
      %755 = vmatpush.msra.mxu0 0.0
      %756 = vmatpush.msra.mxu0 0.0
      %757 = vmatpush.msra.mxu0 %v738
      %758 = vmatmul.f32.gmra.mxu0 %v736
      %v759 = vpop.f32.mrf.mxu0
      %v760 = vadd.f32 0.0, %v759
      %761 = vdwg.mxu0
      %762 = vmatpush.msra.mxu0 0.0
      %763 = vmatpush.msra.mxu0 0.0
      %764 = vmatpush.msra.mxu0 0.0
      %765 = vmatpush.msra.mxu0 0.0
      %766 = vmatpush.msra.mxu0 0.0
      %767 = vmatpush.msra.mxu0 0.0
      %768 = vmatpush.msra.mxu0 0.0
      %769 = vmatpush.msra.mxu0 0.0
      %770 = vmatpush.msra.mxu0 0.0
      %771 = vmatpush.msra.mxu0 0.0
      %772 = vmatpush.msra.mxu0 0.0
      %773 = vmatpush.msra.mxu0 0.0
      %774 = vmatpush.msra.mxu0 0.0
      %775 = vmatpush.msra.mxu0 0.0
      %776 = vmatpush.msra.mxu0 0.0
      %777 = vmatpush.msra.mxu0 %v740
      %778 = vmatmul.f32.gmra.mxu0 %v736
      %v779 = vpop.f32.mrf.mxu0
      %v780 = vadd.f32 0.0, %v779
      %781 = vdwg.mxu0
      %v782 = vadd.f32 %v713, %v760
      %v783 = vadd.f32 %v714, %v780
      %v784 = vld [vmem:[%s2] sm:$0xf]
      %786 = vset.pattern.permute.xlu0 0
      %787 = vperm.xlu0 %786, %v784
      %v788 = vpop.permute.xlu0 %787
      %v790 = vadd.f32 %v782, %v788
      %v791 = vadd.f32 %v783, %v788
      %vm792 = vcmp.ge.f32.partialorder %v790, 0.0
      %vm793 = vcmp.ge.f32.partialorder %v791, 0.0
      %v794 = vmul.f32 %v790, 0.2
      %v795 = vmul.f32 %v791, 0.2
      %v796 = vsel %vm792, %v790, %v794
      %v797 = vsel %vm793, %v791, %v795
      %v798 = vmul.f32 %v796, 1.4142135
      %v799 = vmul.f32 %v797, 1.4142135
      %v802 = vrot.slane %v799, 4
      %vm803 = vcmask 1043456
      %v804 = vsel %vm803, %v798, %v802
      %806 = vst [vmem:[%s199] sm:$0xff] %v804
      %s807 = smul.u32 2, %s19
      %p808 = scmp.lt.s32.totalorder %s18, 1
      %s809 = scalar_select %p808, %s18, 1
      %p810 = scmp.lt.s32.totalorder %s807, 1
      %s811 = scalar_select %p810, %s807, 1
      %s812 = smul.addr %s809, 2
      %s813 = sadd.s32 %s811, %s812
      %s814 = smul.addr %s813, 4
      %s815 = scalar_lea.vmem %s3, %s814
      // Predicated region
      $region33: #{discriminator_forward.8} parent=31 // pred_check
        %p816 = pneg %p116
      $region34: #{discriminator_forward.8} parent=31 // pred_check_branch
        %818 = sbr.rel (%p816) target = $region36
      $region35: #{discriminator_forward.8} parent=31 // pred_region
        %s819 = smul.u32 2, %s19
      $region36: #{discriminator_forward.8} parent=31 // pred_fallthru
        _
    $region32: #{discriminator_forward.8} parent=5 // pred_fallthru
      _
    %p820 = scmp.le.s32.totalorder 2, %s9
    // Predicated region
    $region37: #{discriminator_forward.8} parent=5 // pred_check
      %p821 = pneg %p820
    $region38: #{discriminator_forward.8} parent=5 // pred_check_branch
      %823 = sbr.rel (%p821) target = $region40
    $region39: #{discriminator_forward.8} parent=5 // pred_region
      %s824 = ssub.s32 %s9, 2
      // Predicated region
      $region41: #{discriminator_forward.8} parent=39 // pred_check
        %p825 = pneg %p122
      $region42: #{discriminator_forward.8} parent=39 // pred_check_branch
        %827 = sbr.rel (%p825) target = $region44
      $region43: #{discriminator_forward.8} parent=39 // pred_region
        %s828 = smul.u32 2, %s21
        %p829 = scmp.lt.s32.totalorder %s20, 1
        %s830 = scalar_select %p829, %s20, 1
        %p831 = scmp.lt.s32.totalorder %s828, 1
        %s832 = scalar_select %p831, %s828, 1
        %s833 = smul.addr %s830, 2
        %s834 = sadd.s32 %s832, %s833
        %s835 = smul.addr %s834, 4
        %s836 = scalar_lea.vmem %s3, %s835
      $region44: #{discriminator_forward.8} parent=39 // pred_fallthru
        _
    $region40: #{discriminator_forward.8} parent=5 // pred_fallthru
      _
  $region6: #{discriminator_forward.8} parent=0 // loop_footer
    %s13 = sadd.s32 1, %s9
  $region7: #{discriminator_forward.8} parent=0 // loop_footer_branch
    %8 = sbr.rel target = $region3
  $region8: #{discriminator_forward.8} parent=0 // loop_exit
    _

// kernel: discriminator_forward.9
$region0: #{discriminator_forward.9}
  #allocation0 [shape = 'u32[]', space=smem, size = 0x4, offset = 0x4, fixed_abs, tag = 'smem constant byte address 0x4 - core index']
  #allocation1 [shape = 'u32[72,128]{1,0:T(1,128)}', space=vmem, size = 0x9000, scoped, tag = 'internal scratch']
  %s0 = inlined_call_operand.vmem [shape: f32[2,3,4,288], index: 0, kind: input, shape index: {}]
  %s1 = inlined_call_operand.vmem [shape: f32[3,3,8,4], index: 1, kind: input, shape index: {}]
  %s2 = inlined_call_operand.vmem [shape: f32[8,1], index: 2, kind: input, shape index: {}]
  %s3 = inlined_call_operand.vmem [shape: f32[2,8,256], index: 3, kind: output, shape index: {}]
  %s4 = sld [smem:[#allocation0]]
  $region45: #{discriminator_forward.9} parent=0
    _
  %s6 = ssub.s32 1, %s4
  %s7 = scalar_select 0, %s6, %s4
  loop: start=0, step=1, limit=4
  $region2: #{discriminator_forward.9} parent=0 // loop_pre_header
    _
  $region3: #{discriminator_forward.9} parent=0 // loop_header
    %s9 = sphi 0, %s13
    %p10 = scmp.ge.s32.totalorder %s9, 4
    %s16 = sphi 0, %s28
    %s17 = sphi 0, %s24
    %s18 = sphi 0, %s16
    %s19 = sphi 0, %s17
    %s20 = sphi 0, %s18
    %s21 = sphi 0, %s19
    %s33 = sphi 0, %s35
    %s36 = sphi 0, %s33
    %s37 = sphi 0, %s36
    %s53 = sphi 0, %s37
    %s57 = sphi 0, %s57
    %s59 = sphi 0, %s57
    %s60 = sphi 0, %s59
    %s74 = sphi 0, %s60
    %s78 = sphi 0, %s78
    %s80 = sphi 0, %s78
    %s81 = sphi 0, %s80
    %s95 = sphi 0, %s81
    %s103 = sphi 0, %s105
    %s106 = sphi 0, %s103
    %s107 = sphi 0, %s106
    %s123 = sphi 0, %s107
  $region4: #{discriminator_forward.9} parent=0 // loop_header_branch
    %12 = sbr.rel (%p10) target = $region8
  $region5: #{discriminator_forward.9} parent=0 // loop_body
    %s14 = ssub.s32 %s9, 1
    %s15 = ssub.s32 %s9, 2
    %s22 = sadd.s32 1, %s17
    %p23 = scmp.ge.s32.totalorder %s22, 1
    %s24 = scalar_select %p23, 0, %s22
    %s25 = sadd.s32 1, %s16
    %s26 = scalar_select %p23, %s25, %s16
    %p27 = scmp.ge.s32.totalorder %s26, 2
    %s28 = scalar_select %p27, 0, %s26
    %s29 = sadd.s32 %s16, %s17
    %s30 = sadd.s32 %s28, %s24
    %s31 = ssub.s32 %s29, %s30
    %p32 = scmp.eq.s32.totalorder %s31, 0
    %s34 = sadd.s32 %s33, 1
    %s35 = scalar_select %p32, %s33, %s34
    %p38 = pneg %p32
    %p39 = scmp.eq.s32.totalorder %s9, 1
    %p40 = por %p38, %p39
    %p41 = scmp.ne.s32.totalorder %s33, %s36
    %p42 = scmp.eq.s32.totalorder %s9, 0
    %p43 = por %p41, %p42
    %p44 = scmp.ne.s32.totalorder %s33, %s36
    %p45 = scmp.eq.s32.totalorder %s14, 1
    %p46 = por %p44, %p45
    %p47 = scmp.ne.s32.totalorder %s36, %s37
    %p48 = scmp.eq.s32.totalorder %s14, 0
    %p49 = por %p47, %p48
    %p50 = scmp.ne.s32.totalorder %s36, %s37
    %p51 = scmp.eq.s32.totalorder %s15, 1
    %p52 = por %p50, %p51
    %p54 = scmp.ne.s32.totalorder %s37, %s53
    %p55 = scmp.eq.s32.totalorder %s15, 0
    %p56 = por %p54, %p55
    %s58 = sadd.s32 %s57, 1
    %p61 = scmp.eq.s32.totalorder %s9, 1
    %p62 = scmp.ne.s32.totalorder %s57, %s59
    %p63 = scmp.eq.s32.totalorder %s9, 0
    %p64 = por %p62, %p63
    %p65 = scmp.ne.s32.totalorder %s57, %s59
    %p66 = scmp.eq.s32.totalorder %s14, 1
    %p67 = por %p65, %p66
    %p68 = scmp.ne.s32.totalorder %s59, %s60
    %p69 = scmp.eq.s32.totalorder %s14, 0
    %p70 = por %p68, %p69
    %p71 = scmp.ne.s32.totalorder %s59, %s60
    %p72 = scmp.eq.s32.totalorder %s15, 1
    %p73 = por %p71, %p72
    %p75 = scmp.ne.s32.totalorder %s60, %s74
    %p76 = scmp.eq.s32.totalorder %s15, 0
    %p77 = por %p75, %p76
    %s79 = sadd.s32 %s78, 1
    %p82 = scmp.eq.s32.totalorder %s9, 1
    %p83 = scmp.ne.s32.totalorder %s78, %s80
    %p84 = scmp.eq.s32.totalorder %s9, 0
    %p85 = por %p83, %p84
    %p86 = scmp.ne.s32.totalorder %s78, %s80
    %p87 = scmp.eq.s32.totalorder %s14, 1
    %p88 = por %p86, %p87
    %p89 = scmp.ne.s32.totalorder %s80, %s81
    %p90 = scmp.eq.s32.totalorder %s14, 0
    %p91 = por %p89, %p90
    %p92 = scmp.ne.s32.totalorder %s80, %s81
    %p93 = scmp.eq.s32.totalorder %s15, 1
    %p94 = por %p92, %p93
    %p96 = scmp.ne.s32.totalorder %s81, %s95
    %p97 = scmp.eq.s32.totalorder %s15, 0
    %p98 = por %p96, %p97
    %s99 = ssub.s32 %s16, %s28
    %s100 = ssub.s32 %s17, %s24
    %s101 = sor.u32 %s99, %s100
    %p102 = scmp.eq.s32.totalorder %s101, 0
    %s104 = sadd.s32 %s103, 1
    %s105 = scalar_select %p102, %s103, %s104
    %p108 = pneg %p102
    %p109 = scmp.eq.s32.totalorder %s9, 1
    %p110 = por %p108, %p109
    %p111 = scmp.ne.s32.totalorder %s103, %s106
    %p112 = scmp.eq.s32.totalorder %s9, 0
    %p113 = por %p111, %p112
    %p114 = scmp.ne.s32.totalorder %s103, %s106
    %p115 = scmp.eq.s32.totalorder %s14, 1
    %p116 = por %p114, %p115
    %p117 = scmp.ne.s32.totalorder %s106, %s107
    %p118 = scmp.eq.s32.totalorder %s14, 0
    %p119 = por %p117, %p118
    %p120 = scmp.ne.s32.totalorder %s106, %s107
    %p121 = scmp.eq.s32.totalorder %s15, 1
    %p122 = por %p120, %p121
    %p124 = scmp.ne.s32.totalorder %s107, %s123
    %p125 = scmp.eq.s32.totalorder %s15, 0
    %p126 = por %p124, %p125
    %p127 = scmp.le.s32.totalorder 1, %s9
    %p128 = scmp.lt.s32.totalorder %s9, 3
    %p129 = pnand %p127, %p128
    %p130 = pneg %p129
    // Predicated region
    $region9: #{discriminator_forward.9} parent=5 // pred_check
      _
    $region10: #{discriminator_forward.9} parent=5 // pred_check_branch
      %132 = sbr.rel (%p129) target = $region12
    $region11: #{discriminator_forward.9} parent=5 // pred_region
      %s133 = ssub.s32 %s9, 1
      // Predicated region
      $region13: #{discriminator_forward.9} parent=11 // pred_check
        %p134 = pneg %p70
      $region14: #{discriminator_forward.9} parent=11 // pred_check_branch
        %136 = sbr.rel (%p134) target = $region16
      $region15: #{discriminator_forward.9} parent=11 // pred_region
        _
      $region16: #{discriminator_forward.9} parent=11 // pred_fallthru
        _
      // Predicated region
      $region17: #{discriminator_forward.9} parent=11 // pred_check
        %p137 = pneg %p91
      $region18: #{discriminator_forward.9} parent=11 // pred_check_branch
        %139 = sbr.rel (%p137) target = $region20
      $region19: #{discriminator_forward.9} parent=11 // pred_region
        _
      $region20: #{discriminator_forward.9} parent=11 // pred_fallthru
        _
    $region12: #{discriminator_forward.9} parent=5 // pred_fallthru
      _
    %p140 = scmp.lt.s32.totalorder %s9, 2
    // Predicated region
    $region21: #{discriminator_forward.9} parent=5 // pred_check
      %p141 = pneg %p140
    $region22: #{discriminator_forward.9} parent=5 // pred_check_branch
      %143 = sbr.rel (%p141) target = $region24
    $region23: #{discriminator_forward.9} parent=5 // pred_region
      // Predicated region
      $region25: #{discriminator_forward.9} parent=23 // pred_check
        %p144 = pneg %p43
      $region26: #{discriminator_forward.9} parent=23 // pred_check_branch
        %146 = sbr.rel (%p144) target = $region28
      $region27: #{discriminator_forward.9} parent=23 // pred_region
        %s147 = sadd.s32 %s16, %s17
        %p148 = scmp.lt.s32.totalorder %s147, 1
        %s149 = scalar_select %p148, %s147, 1
        %s150 = smul.addr %s149, 9
        %s151 = smul.addr %s150, 4
        %s152 = scalar_lea.vmem %s0, %s151
        %s153 = sadd.s32 %s16, %s17
      $region28: #{discriminator_forward.9} parent=23 // pred_fallthru
        _
    $region24: #{discriminator_forward.9} parent=5 // pred_fallthru
      _
    %p154 = scmp.le.s32.totalorder 1, %s9
    %p155 = scmp.lt.s32.totalorder %s9, 3
    %p156 = pnand %p154, %p155
    %p157 = pneg %p156
    // Predicated region
    $region29: #{discriminator_forward.9} parent=5 // pred_check
      _
    $region30: #{discriminator_forward.9} parent=5 // pred_check_branch
      %159 = sbr.rel (%p156) target = $region32
    $region31: #{discriminator_forward.9} parent=5 // pred_region
      %s160 = ssub.s32 %s9, 1
      %s161 = sadd.s32 %s18, %s19
      %p162 = scmp.lt.s32.totalorder %s161, 1
      %s163 = scalar_select %p162, %s161, 1
      %s164 = smul.addr %s163, 9
      %s165 = smul.addr %s164, 4
      %s166 = scalar_lea.vmem %s0, %s165
      %p167 = pneg %p49
      %p168 = pneg %p46
      %p169 = pneg %p70
      %p170 = pneg %p67
      %p171 = pneg %p91
      %p172 = pneg %p88
      %p173 = pneg %p119
      %p174 = pneg %p116
      %s175 = smul.u32 2, %s19
      %p176 = scmp.lt.s32.totalorder %s18, 1
      %s177 = scalar_select %p176, %s18, 1
      %p178 = scmp.lt.s32.totalorder %s175, 1
      %s179 = scalar_select %p178, %s175, 1
      %s180 = smul.addr %s177, 2
      %s181 = sadd.s32 %s179, %s180
      %s182 = smul.addr %s181, 8
      %s183 = scalar_lea.vmem %s3, %s182
      %s184 = sadd.s32 %s18, %s19
      %p185 = scmp.lt.s32.totalorder %s184, 1
      %s186 = scalar_select %p185, %s184, 1
      %s187 = smul.addr %s186, 9
      %s188 = smul.addr %s187, 4
      %s189 = scalar_lea.vmem %s0, %s188
      %s190 = sadd.s32 %s18, %s19
      %s191 = smul.u32 2, %s19
      %p192 = scmp.lt.s32.totalorder %s18, 1
      %s193 = scalar_select %p192, %s18, 1
      %p194 = scmp.lt.s32.totalorder %s191, 1
      %s195 = scalar_select %p194, %s191, 1
      %s196 = smul.addr %s193, 2
      %s197 = sadd.s32 %s195, %s196
      %s198 = smul.addr %s197, 8
      %s199 = scalar_lea.vmem %s3, %s198
      %s200 = smul.u32 2, %s19
      %v201 = vld [vmem:[%s189] sm:$0xff]
      %v202 = vld [vmem:[%s1] sm:$0xff]
      %s203 = scalar_lea.vmem %s189, 12
      %v204 = vld [vmem:[%s203] sm:$0xff]
      %s205 = scalar_lea.vmem %s1, 8
      %v206 = vld [vmem:[%s205] sm:$0xff]
      %208 = vst [vmem:[#allocation1] ss:$2 sm:$0xff] %v204
      %v209 = vld.sshfl [vmem:[#allocation1] sm:$0xff pattern:$0x75316420]
      %v210 = vld.sshfl [vmem:[#allocation1 + $0x8] sm:$0xff pattern:$0x75316420]
      %vm211 = vcmask 31744
      %v213 = vsel %vm211, %v206, 0
      %vm215 = vcmask 1043456
      %v216 = vsel %vm215, %v209, 0
      %v218 = vsel %vm215, %v210, 0
      %220 = vmatpush.msra.mxu0 0.0
      %221 = vmatpush.msra.mxu0 0.0
      %222 = vmatpush.msra.mxu0 0.0
      %223 = vmatpush.msra.mxu0 0.0
      %224 = vmatpush.msra.mxu0 0.0
      %225 = vmatpush.msra.mxu0 0.0
      %226 = vmatpush.msra.mxu0 0.0
      %227 = vmatpush.msra.mxu0 0.0
      %228 = vmatpush.msra.mxu0 0.0
      %229 = vmatpush.msra.mxu0 0.0
      %230 = vmatpush.msra.mxu0 0.0
      %231 = vmatpush.msra.mxu0 0.0
      %232 = vmatpush.msra.mxu0 0.0
      %233 = vmatpush.msra.mxu0 0.0
      %234 = vmatpush.msra.mxu0 0.0
      %235 = vmatpush.msra.mxu0 %v216
      %236 = vmatmul.f32.gmra.mxu0 %v213
      %v237 = vpop.f32.mrf.mxu0
      %v238 = vadd.f32 0.0, %v237
      %239 = vdwg.mxu0
      %240 = vmatpush.msra.mxu0 0.0
      %241 = vmatpush.msra.mxu0 0.0
      %242 = vmatpush.msra.mxu0 0.0
      %243 = vmatpush.msra.mxu0 0.0
      %244 = vmatpush.msra.mxu0 0.0
      %245 = vmatpush.msra.mxu0 0.0
      %246 = vmatpush.msra.mxu0 0.0
      %247 = vmatpush.msra.mxu0 0.0
      %248 = vmatpush.msra.mxu0 0.0
      %249 = vmatpush.msra.mxu0 0.0
      %250 = vmatpush.msra.mxu0 0.0
      %251 = vmatpush.msra.mxu0 0.0
      %252 = vmatpush.msra.mxu0 0.0
      %253 = vmatpush.msra.mxu0 0.0
      %254 = vmatpush.msra.mxu0 0.0
      %255 = vmatpush.msra.mxu0 %v218
      %256 = vmatmul.f32.gmra.mxu0 %v213
      %v257 = vpop.f32.mrf.mxu0
      %v258 = vadd.f32 0.0, %v257
      %259 = vdwg.mxu0
      %261 = vst [vmem:[#allocation1] ss:$2 sm:$0xff] %v201
      %v262 = vld.sshfl [vmem:[#allocation1] sm:$0xff pattern:$0x75316420]
      %v263 = vld.sshfl [vmem:[#allocation1 + $0x8] sm:$0xff pattern:$0x75316420]
      %v265 = vsel %vm211, %v202, 0
      %v267 = vsel %vm215, %v262, 0
      %v269 = vsel %vm215, %v263, 0
      %271 = vmatpush.msra.mxu0 0.0
      %272 = vmatpush.msra.mxu0 0.0
      %273 = vmatpush.msra.mxu0 0.0
      %274 = vmatpush.msra.mxu0 0.0
      %275 = vmatpush.msra.mxu0 0.0
      %276 = vmatpush.msra.mxu0 0.0
      %277 = vmatpush.msra.mxu0 0.0
      %278 = vmatpush.msra.mxu0 0.0
      %279 = vmatpush.msra.mxu0 0.0
      %280 = vmatpush.msra.mxu0 0.0
      %281 = vmatpush.msra.mxu0 0.0
      %282 = vmatpush.msra.mxu0 0.0
      %283 = vmatpush.msra.mxu0 0.0
      %284 = vmatpush.msra.mxu0 0.0
      %285 = vmatpush.msra.mxu0 0.0
      %286 = vmatpush.msra.mxu0 %v267
      %287 = vmatmul.f32.gmra.mxu0 %v265
      %v288 = vpop.f32.mrf.mxu0
      %v289 = vadd.f32 %v238, %v288
      %290 = vdwg.mxu0
      %291 = vmatpush.msra.mxu0 0.0
      %292 = vmatpush.msra.mxu0 0.0
      %293 = vmatpush.msra.mxu0 0.0
      %294 = vmatpush.msra.mxu0 0.0
      %295 = vmatpush.msra.mxu0 0.0
      %296 = vmatpush.msra.mxu0 0.0
      %297 = vmatpush.msra.mxu0 0.0
      %298 = vmatpush.msra.mxu0 0.0
      %299 = vmatpush.msra.mxu0 0.0
      %300 = vmatpush.msra.mxu0 0.0
      %301 = vmatpush.msra.mxu0 0.0
      %302 = vmatpush.msra.mxu0 0.0
      %303 = vmatpush.msra.mxu0 0.0
      %304 = vmatpush.msra.mxu0 0.0
      %305 = vmatpush.msra.mxu0 0.0
      %306 = vmatpush.msra.mxu0 %v269
      %307 = vmatmul.f32.gmra.mxu0 %v265
      %v308 = vpop.f32.mrf.mxu0
      %v309 = vadd.f32 %v258, %v308
      %310 = vdwg.mxu0
      %s311 = scalar_lea.vmem %s189, 24
      %v312 = vld [vmem:[%s311] sm:$0xff]
      %s313 = scalar_lea.vmem %s1, 16
      %v314 = vld [vmem:[%s313] sm:$0xff]
      %316 = vst [vmem:[#allocation1] ss:$2 sm:$0xff] %v312
      %v317 = vld.sshfl [vmem:[#allocation1] sm:$0xff pattern:$0x75316420]
      %v318 = vld.sshfl [vmem:[#allocation1 + $0x8] sm:$0xff pattern:$0x75316420]
      %v320 = vsel %vm211, %v314, 0
      %v322 = vsel %vm215, %v317, 0
      %v324 = vsel %vm215, %v318, 0
      %326 = vmatpush.msra.mxu0 0.0
      %327 = vmatpush.msra.mxu0 0.0
      %328 = vmatpush.msra.mxu0 0.0
      %329 = vmatpush.msra.mxu0 0.0
      %330 = vmatpush.msra.mxu0 0.0
      %331 = vmatpush.msra.mxu0 0.0
      %332 = vmatpush.msra.mxu0 0.0
      %333 = vmatpush.msra.mxu0 0.0
      %334 = vmatpush.msra.mxu0 0.0
      %335 = vmatpush.msra.mxu0 0.0
      %336 = vmatpush.msra.mxu0 0.0
      %337 = vmatpush.msra.mxu0 0.0
      %338 = vmatpush.msra.mxu0 0.0
      %339 = vmatpush.msra.mxu0 0.0
      %340 = vmatpush.msra.mxu0 0.0
      %341 = vmatpush.msra.mxu0 %v322
      %342 = vmatmul.f32.gmra.mxu0 %v320
      %v343 = vpop.f32.mrf.mxu0
      %v344 = vadd.f32 0.0, %v343
      %345 = vdwg.mxu0
      %346 = vmatpush.msra.mxu0 0.0
      %347 = vmatpush.msra.mxu0 0.0
      %348 = vmatpush.msra.mxu0 0.0
      %349 = vmatpush.msra.mxu0 0.0
      %350 = vmatpush.msra.mxu0 0.0
      %351 = vmatpush.msra.mxu0 0.0
      %352 = vmatpush.msra.mxu0 0.0
      %353 = vmatpush.msra.mxu0 0.0
      %354 = vmatpush.msra.mxu0 0.0
      %355 = vmatpush.msra.mxu0 0.0
      %356 = vmatpush.msra.mxu0 0.0
      %357 = vmatpush.msra.mxu0 0.0
      %358 = vmatpush.msra.mxu0 0.0
      %359 = vmatpush.msra.mxu0 0.0
      %360 = vmatpush.msra.mxu0 0.0
      %361 = vmatpush.msra.mxu0 %v324
      %362 = vmatmul.f32.gmra.mxu0 %v320
      %v363 = vpop.f32.mrf.mxu0
      %v364 = vadd.f32 0.0, %v363
      %365 = vdwg.mxu0
      %v366 = vadd.f32 %v289, %v344
      %v367 = vadd.f32 %v309, %v364
      %v368 = vld [vmem:[%s189] sm:$0xff]
      %v369 = vld [vmem:[%s189 + $0x8] sm:$0xf]
      %s370 = scalar_lea.vmem %s1, 24
      %v371 = vld [vmem:[%s370] sm:$0xff]
      %374 = vst [vmem:[#allocation1] ss:$2 sm:$0xff] %v368
      %s375 = scalar_lea.vmem [#allocation1], 16
      %376 = vst [vmem:[%s375] ss:$2 sm:$0xff] %v369
      %v377 = vld.sshfl [vmem:[#allocation1] sm:$0xff pattern:$0x75316420]
      %v378 = vld.sshfl [vmem:[#allocation1 + $0x8] sm:$0xff pattern:$0x75316420]
      %v379 = vld.sshfl [vmem:[#allocation1 + $0x10] sm:$0xff pattern:$0x75316420]
      %380 = vrot.lane.b32.xlu0 %v377, 112
      %v381 = vpop.permute.xlu0 %380
      %382 = vrot.lane.b32.xlu0 %v378, 112
      %v383 = vpop.permute.xlu0 %382
      %384 = vrot.lane.b32.xlu0 %v379, 112
      %v385 = vpop.permute.xlu0 %384
      %vm386 = vcmask 916480
      %v387 = vsel %vm386, %v381, %v383
      %v388 = vsel %vm386, %v383, %v385
      %v390 = vsel %vm211, %v371, 0
      %v392 = vsel %vm215, %v387, 0
      %v394 = vsel %vm215, %v388, 0
      %396 = vmatpush.msra.mxu0 0.0
      %397 = vmatpush.msra.mxu0 0.0
      %398 = vmatpush.msra.mxu0 0.0
      %399 = vmatpush.msra.mxu0 0.0
      %400 = vmatpush.msra.mxu0 0.0
      %401 = vmatpush.msra.mxu0 0.0
      %402 = vmatpush.msra.mxu0 0.0
      %403 = vmatpush.msra.mxu0 0.0
      %404 = vmatpush.msra.mxu0 0.0
      %405 = vmatpush.msra.mxu0 0.0
      %406 = vmatpush.msra.mxu0 0.0
      %407 = vmatpush.msra.mxu0 0.0
      %408 = vmatpush.msra.mxu0 0.0
      %409 = vmatpush.msra.mxu0 0.0
      %410 = vmatpush.msra.mxu0 0.0
      %411 = vmatpush.msra.mxu0 %v392
      %412 = vmatmul.f32.gmra.mxu0 %v390
      %v413 = vpop.f32.mrf.mxu0
      %v414 = vadd.f32 0.0, %v413
      %415 = vdwg.mxu0
      %416 = vmatpush.msra.mxu0 0.0
      %417 = vmatpush.msra.mxu0 0.0
      %418 = vmatpush.msra.mxu0 0.0
      %419 = vmatpush.msra.mxu0 0.0
      %420 = vmatpush.msra.mxu0 0.0
      %421 = vmatpush.msra.mxu0 0.0
      %422 = vmatpush.msra.mxu0 0.0
      %423 = vmatpush.msra.mxu0 0.0
      %424 = vmatpush.msra.mxu0 0.0
      %425 = vmatpush.msra.mxu0 0.0
      %426 = vmatpush.msra.mxu0 0.0
      %427 = vmatpush.msra.mxu0 0.0
      %428 = vmatpush.msra.mxu0 0.0
      %429 = vmatpush.msra.mxu0 0.0
      %430 = vmatpush.msra.mxu0 0.0
      %431 = vmatpush.msra.mxu0 %v394
      %432 = vmatmul.f32.gmra.mxu0 %v390
      %v433 = vpop.f32.mrf.mxu0
      %v434 = vadd.f32 0.0, %v433
      %435 = vdwg.mxu0
      %v436 = vadd.f32 %v366, %v414
      %v437 = vadd.f32 %v367, %v434
      %v438 = vld [vmem:[%s203] sm:$0xff]
      %v439 = vld [vmem:[%s203 + $0x8] sm:$0xf]
      %s440 = scalar_lea.vmem %s1, 32
      %v441 = vld [vmem:[%s440] sm:$0xff]
      %444 = vst [vmem:[#allocation1] ss:$2 sm:$0xff] %v438
      %s445 = scalar_lea.vmem [#allocation1], 16
      %446 = vst [vmem:[%s445] ss:$2 sm:$0xff] %v439
      %v447 = vld.sshfl [vmem:[#allocation1] sm:$0xff pattern:$0x75316420]
      %v448 = vld.sshfl [vmem:[#allocation1 + $0x8] sm:$0xff pattern:$0x75316420]
      %v449 = vld.sshfl [vmem:[#allocation1 + $0x10] sm:$0xff pattern:$0x75316420]
      %450 = vrot.lane.b32.xlu0 %v447, 112
      %v451 = vpop.permute.xlu0 %450
      %452 = vrot.lane.b32.xlu0 %v448, 112
      %v453 = vpop.permute.xlu0 %452
      %454 = vrot.lane.b32.xlu0 %v449, 112
      %v455 = vpop.permute.xlu0 %454
      %v456 = vsel %vm386, %v451, %v453
      %v457 = vsel %vm386, %v453, %v455
      %v459 = vsel %vm211, %v441, 0
      %v461 = vsel %vm215, %v456, 0
      %v463 = vsel %vm215, %v457, 0
      %465 = vmatpush.msra.mxu0 0.0
      %466 = vmatpush.msra.mxu0 0.0
      %467 = vmatpush.msra.mxu0 0.0
      %468 = vmatpush.msra.mxu0 0.0
      %469 = vmatpush.msra.mxu0 0.0
      %470 = vmatpush.msra.mxu0 0.0
      %471 = vmatpush.msra.mxu0 0.0
      %472 = vmatpush.msra.mxu0 0.0
      %473 = vmatpush.msra.mxu0 0.0
      %474 = vmatpush.msra.mxu0 0.0
      %475 = vmatpush.msra.mxu0 0.0
      %476 = vmatpush.msra.mxu0 0.0
      %477 = vmatpush.msra.mxu0 0.0
      %478 = vmatpush.msra.mxu0 0.0
      %479 = vmatpush.msra.mxu0 0.0
      %480 = vmatpush.msra.mxu0 %v461
      %481 = vmatmul.f32.gmra.mxu0 %v459
      %v482 = vpop.f32.mrf.mxu0
      %v483 = vadd.f32 0.0, %v482
      %484 = vdwg.mxu0
      %485 = vmatpush.msra.mxu0 0.0
      %486 = vmatpush.msra.mxu0 0.0
      %487 = vmatpush.msra.mxu0 0.0
      %488 = vmatpush.msra.mxu0 0.0
      %489 = vmatpush.msra.mxu0 0.0
      %490 = vmatpush.msra.mxu0 0.0
      %491 = vmatpush.msra.mxu0 0.0
      %492 = vmatpush.msra.mxu0 0.0
      %493 = vmatpush.msra.mxu0 0.0
      %494 = vmatpush.msra.mxu0 0.0
      %495 = vmatpush.msra.mxu0 0.0
      %496 = vmatpush.msra.mxu0 0.0
      %497 = vmatpush.msra.mxu0 0.0
      %498 = vmatpush.msra.mxu0 0.0
      %499 = vmatpush.msra.mxu0 0.0
      %500 = vmatpush.msra.mxu0 %v463
      %501 = vmatmul.f32.gmra.mxu0 %v459
      %v502 = vpop.f32.mrf.mxu0
      %v503 = vadd.f32 0.0, %v502
      %504 = vdwg.mxu0
      %v505 = vadd.f32 %v436, %v483
      %v506 = vadd.f32 %v437, %v503
      %v507 = vld [vmem:[%s311] sm:$0xff]
      %v508 = vld [vmem:[%s311 + $0x8] sm:$0xf]
      %s509 = scalar_lea.vmem %s1, 40
      %v510 = vld [vmem:[%s509] sm:$0xff]
      %513 = vst [vmem:[#allocation1] ss:$2 sm:$0xff] %v507
      %s514 = scalar_lea.vmem [#allocation1], 16
      %515 = vst [vmem:[%s514] ss:$2 sm:$0xff] %v508
      %v516 = vld.sshfl [vmem:[#allocation1] sm:$0xff pattern:$0x75316420]
      %v517 = vld.sshfl [vmem:[#allocation1 + $0x8] sm:$0xff pattern:$0x75316420]
      %v518 = vld.sshfl [vmem:[#allocation1 + $0x10] sm:$0xff pattern:$0x75316420]
      %519 = vrot.lane.b32.xlu0 %v516, 112
      %v520 = vpop.permute.xlu0 %519
      %521 = vrot.lane.b32.xlu0 %v517, 112
      %v522 = vpop.permute.xlu0 %521
      %523 = vrot.lane.b32.xlu0 %v518, 112
      %v524 = vpop.permute.xlu0 %523
      %v525 = vsel %vm386, %v520, %v522
      %v526 = vsel %vm386, %v522, %v524
      %v528 = vsel %vm211, %v510, 0
      %v530 = vsel %vm215, %v525, 0
      %v532 = vsel %vm215, %v526, 0
      %534 = vmatpush.msra.mxu0 0.0
      %535 = vmatpush.msra.mxu0 0.0
      %536 = vmatpush.msra.mxu0 0.0
      %537 = vmatpush.msra.mxu0 0.0
      %538 = vmatpush.msra.mxu0 0.0
      %539 = vmatpush.msra.mxu0 0.0
      %540 = vmatpush.msra.mxu0 0.0
      %541 = vmatpush.msra.mxu0 0.0
      %542 = vmatpush.msra.mxu0 0.0
      %543 = vmatpush.msra.mxu0 0.0
      %544 = vmatpush.msra.mxu0 0.0
      %545 = vmatpush.msra.mxu0 0.0
      %546 = vmatpush.msra.mxu0 0.0
      %547 = vmatpush.msra.mxu0 0.0
      %548 = vmatpush.msra.mxu0 0.0
      %549 = vmatpush.msra.mxu0 %v530
      %550 = vmatmul.f32.gmra.mxu0 %v528
      %v551 = vpop.f32.mrf.mxu0
      %v552 = vadd.f32 0.0, %v551
      %553 = vdwg.mxu0
      %554 = vmatpush.msra.mxu0 0.0
      %555 = vmatpush.msra.mxu0 0.0
      %556 = vmatpush.msra.mxu0 0.0
      %557 = vmatpush.msra.mxu0 0.0
      %558 = vmatpush.msra.mxu0 0.0
      %559 = vmatpush.msra.mxu0 0.0
      %560 = vmatpush.msra.mxu0 0.0
      %561 = vmatpush.msra.mxu0 0.0
      %562 = vmatpush.msra.mxu0 0.0
      %563 = vmatpush.msra.mxu0 0.0
      %564 = vmatpush.msra.mxu0 0.0
      %565 = vmatpush.msra.mxu0 0.0
      %566 = vmatpush.msra.mxu0 0.0
      %567 = vmatpush.msra.mxu0 0.0
      %568 = vmatpush.msra.mxu0 0.0
      %569 = vmatpush.msra.mxu0 %v532
      %570 = vmatmul.f32.gmra.mxu0 %v528
      %v571 = vpop.f32.mrf.mxu0
      %v572 = vadd.f32 0.0, %v571
      %573 = vdwg.mxu0
      %v574 = vadd.f32 %v505, %v552
      %v575 = vadd.f32 %v506, %v572
      %v576 = vld [vmem:[%s189] sm:$0xff]
      %v577 = vld [vmem:[%s189 + $0x8] sm:$0xf]
      %s578 = scalar_lea.vmem %s1, 48
      %v579 = vld [vmem:[%s578] sm:$0xff]
      %582 = vst [vmem:[#allocation1] ss:$2 sm:$0xff] %v576
      %s583 = scalar_lea.vmem [#allocation1], 16
      %584 = vst [vmem:[%s583] ss:$2 sm:$0xff] %v577
      %v585 = vld.sshfl [vmem:[#allocation1] sm:$0xff pattern:$0x75316420]
      %v586 = vld.sshfl [vmem:[#allocation1 + $0x8] sm:$0xff pattern:$0x75316420]
      %v587 = vld.sshfl [vmem:[#allocation1 + $0x10] sm:$0xff pattern:$0x75316420]
      %588 = vrot.lane.b32.xlu0 %v585, 96
      %v589 = vpop.permute.xlu0 %588
      %590 = vrot.lane.b32.xlu0 %v586, 96
      %v591 = vpop.permute.xlu0 %590
      %592 = vrot.lane.b32.xlu0 %v587, 96
      %v593 = vpop.permute.xlu0 %592
      %vm594 = vcmask 785408
      %v595 = vsel %vm594, %v589, %v591
      %v596 = vsel %vm594, %v591, %v593
      %v598 = vsel %vm211, %v579, 0
      %v600 = vsel %vm215, %v595, 0
      %v602 = vsel %vm215, %v596, 0
      %604 = vmatpush.msra.mxu0 0.0
      %605 = vmatpush.msra.mxu0 0.0
      %606 = vmatpush.msra.mxu0 0.0
      %607 = vmatpush.msra.mxu0 0.0
      %608 = vmatpush.msra.mxu0 0.0
      %609 = vmatpush.msra.mxu0 0.0
      %610 = vmatpush.msra.mxu0 0.0
      %611 = vmatpush.msra.mxu0 0.0
      %612 = vmatpush.msra.mxu0 0.0
      %613 = vmatpush.msra.mxu0 0.0
      %614 = vmatpush.msra.mxu0 0.0
      %615 = vmatpush.msra.mxu0 0.0
      %616 = vmatpush.msra.mxu0 0.0
      %617 = vmatpush.msra.mxu0 0.0
      %618 = vmatpush.msra.mxu0 0.0
      %619 = vmatpush.msra.mxu0 %v600
      %620 = vmatmul.f32.gmra.mxu0 %v598
      %v621 = vpop.f32.mrf.mxu0
      %v622 = vadd.f32 0.0, %v621
      %623 = vdwg.mxu0
      %624 = vmatpush.msra.mxu0 0.0
      %625 = vmatpush.msra.mxu0 0.0
      %626 = vmatpush.msra.mxu0 0.0
      %627 = vmatpush.msra.mxu0 0.0
      %628 = vmatpush.msra.mxu0 0.0
      %629 = vmatpush.msra.mxu0 0.0
      %630 = vmatpush.msra.mxu0 0.0
      %631 = vmatpush.msra.mxu0 0.0
      %632 = vmatpush.msra.mxu0 0.0
      %633 = vmatpush.msra.mxu0 0.0
      %634 = vmatpush.msra.mxu0 0.0
      %635 = vmatpush.msra.mxu0 0.0
      %636 = vmatpush.msra.mxu0 0.0
      %637 = vmatpush.msra.mxu0 0.0
      %638 = vmatpush.msra.mxu0 0.0
      %639 = vmatpush.msra.mxu0 %v602
      %640 = vmatmul.f32.gmra.mxu0 %v598
      %v641 = vpop.f32.mrf.mxu0
      %v642 = vadd.f32 0.0, %v641
      %643 = vdwg.mxu0
      %v644 = vadd.f32 %v574, %v622
      %v645 = vadd.f32 %v575, %v642
      %v646 = vld [vmem:[%s203] sm:$0xff]
      %v647 = vld [vmem:[%s203 + $0x8] sm:$0xf]
      %s648 = scalar_lea.vmem %s1, 56
      %v649 = vld [vmem:[%s648] sm:$0xff]
      %652 = vst [vmem:[#allocation1] ss:$2 sm:$0xff] %v646
      %s653 = scalar_lea.vmem [#allocation1], 16
      %654 = vst [vmem:[%s653] ss:$2 sm:$0xff] %v647
      %v655 = vld.sshfl [vmem:[#allocation1] sm:$0xff pattern:$0x75316420]
      %v656 = vld.sshfl [vmem:[#allocation1 + $0x8] sm:$0xff pattern:$0x75316420]
      %v657 = vld.sshfl [vmem:[#allocation1 + $0x10] sm:$0xff pattern:$0x75316420]
      %658 = vrot.lane.b32.xlu0 %v655, 96
      %v659 = vpop.permute.xlu0 %658
      %660 = vrot.lane.b32.xlu0 %v656, 96
      %v661 = vpop.permute.xlu0 %660
      %662 = vrot.lane.b32.xlu0 %v657, 96
      %v663 = vpop.permute.xlu0 %662
      %v664 = vsel %vm594, %v659, %v661
      %v665 = vsel %vm594, %v661, %v663
      %v667 = vsel %vm211, %v649, 0
      %v669 = vsel %vm215, %v664, 0
      %v671 = vsel %vm215, %v665, 0
      %673 = vmatpush.msra.mxu0 0.0
      %674 = vmatpush.msra.mxu0 0.0
      %675 = vmatpush.msra.mxu0 0.0
      %676 = vmatpush.msra.mxu0 0.0
      %677 = vmatpush.msra.mxu0 0.0
      %678 = vmatpush.msra.mxu0 0.0
      %679 = vmatpush.msra.mxu0 0.0
      %680 = vmatpush.msra.mxu0 0.0
      %681 = vmatpush.msra.mxu0 0.0
      %682 = vmatpush.msra.mxu0 0.0
      %683 = vmatpush.msra.mxu0 0.0
      %684 = vmatpush.msra.mxu0 0.0
      %685 = vmatpush.msra.mxu0 0.0
      %686 = vmatpush.msra.mxu0 0.0
      %687 = vmatpush.msra.mxu0 0.0
      %688 = vmatpush.msra.mxu0 %v669
      %689 = vmatmul.f32.gmra.mxu0 %v667
      %v690 = vpop.f32.mrf.mxu0
      %v691 = vadd.f32 0.0, %v690
      %692 = vdwg.mxu0
      %693 = vmatpush.msra.mxu0 0.0
      %694 = vmatpush.msra.mxu0 0.0
      %695 = vmatpush.msra.mxu0 0.0
      %696 = vmatpush.msra.mxu0 0.0
      %697 = vmatpush.msra.mxu0 0.0
      %698 = vmatpush.msra.mxu0 0.0
      %699 = vmatpush.msra.mxu0 0.0
      %700 = vmatpush.msra.mxu0 0.0
      %701 = vmatpush.msra.mxu0 0.0
      %702 = vmatpush.msra.mxu0 0.0
      %703 = vmatpush.msra.mxu0 0.0
      %704 = vmatpush.msra.mxu0 0.0
      %705 = vmatpush.msra.mxu0 0.0
      %706 = vmatpush.msra.mxu0 0.0
      %707 = vmatpush.msra.mxu0 0.0
      %708 = vmatpush.msra.mxu0 %v671
      %709 = vmatmul.f32.gmra.mxu0 %v667
      %v710 = vpop.f32.mrf.mxu0
      %v711 = vadd.f32 0.0, %v710
      %712 = vdwg.mxu0
      %v713 = vadd.f32 %v644, %v691
      %v714 = vadd.f32 %v645, %v711
      %v715 = vld [vmem:[%s311] sm:$0xff]
      %v716 = vld [vmem:[%s311 + $0x8] sm:$0xf]
      %s717 = scalar_lea.vmem %s1, 64
      %v718 = vld [vmem:[%s717] sm:$0xff]
      %721 = vst [vmem:[#allocation1] ss:$2 sm:$0xff] %v715
      %s722 = scalar_lea.vmem [#allocation1], 16
      %723 = vst [vmem:[%s722] ss:$2 sm:$0xff] %v716
      %v724 = vld.sshfl [vmem:[#allocation1] sm:$0xff pattern:$0x75316420]
      %v725 = vld.sshfl [vmem:[#allocation1 + $0x8] sm:$0xff pattern:$0x75316420]
      %v726 = vld.sshfl [vmem:[#allocation1 + $0x10] sm:$0xff pattern:$0x75316420]
      %727 = vrot.lane.b32.xlu0 %v724, 96
      %v728 = vpop.permute.xlu0 %727
      %729 = vrot.lane.b32.xlu0 %v725, 96
      %v730 = vpop.permute.xlu0 %729
      %731 = vrot.lane.b32.xlu0 %v726, 96
      %v732 = vpop.permute.xlu0 %731
      %v733 = vsel %vm594, %v728, %v730
      %v734 = vsel %vm594, %v730, %v732
      %v736 = vsel %vm211, %v718, 0
      %v738 = vsel %vm215, %v733, 0
      %v740 = vsel %vm215, %v734, 0
      %742 = vmatpush.msra.mxu0 0.0
      %743 = vmatpush.msra.mxu0 0.0
      %744 = vmatpush.msra.mxu0 0.0
      %745 = vmatpush.msra.mxu0 0.0
      %746 = vmatpush.msra.mxu0 0.0
      %747 = vmatpush.msra.mxu0 0.0
      %748 = vmatpush.msra.mxu0 0.0
      %749 = vmatpush.msra.mxu0 0.0
      %750 = vmatpush.msra.mxu0 0.0
      %751 = vmatpush.msra.mxu0 0.0
      %752 = vmatpush.msra.mxu0 0.0
      %753 = vmatpush.msra.mxu0 0.0
      %754 = vmatpush.msra.mxu0 0.0
      %755 = vmatpush.msra.mxu0 0.0
      %756 = vmatpush.msra.mxu0 0.0
      %757 = vmatpush.msra.mxu0 %v738
      %758 = vmatmul.f32.gmra.mxu0 %v736
      %v759 = vpop.f32.mrf.mxu0
      %v760 = vadd.f32 0.0, %v759
      %761 = vdwg.mxu0
      %762 = vmatpush.msra.mxu0 0.0
      %763 = vmatpush.msra.mxu0 0.0
      %764 = vmatpush.msra.mxu0 0.0
      %765 = vmatpush.msra.mxu0 0.0
      %766 = vmatpush.msra.mxu0 0.0
      %767 = vmatpush.msra.mxu0 0.0
      %768 = vmatpush.msra.mxu0 0.0
      %769 = vmatpush.msra.mxu0 0.0
      %770 = vmatpush.msra.mxu0 0.0
      %771 = vmatpush.msra.mxu0 0.0
      %772 = vmatpush.msra.mxu0 0.0
      %773 = vmatpush.msra.mxu0 0.0
      %774 = vmatpush.msra.mxu0 0.0
      %775 = vmatpush.msra.mxu0 0.0
      %776 = vmatpush.msra.mxu0 0.0
      %777 = vmatpush.msra.mxu0 %v740
      %778 = vmatmul.f32.gmra.mxu0 %v736
      %v779 = vpop.f32.mrf.mxu0
      %v780 = vadd.f32 0.0, %v779
      %781 = vdwg.mxu0
      %v782 = vadd.f32 %v713, %v760
      %v783 = vadd.f32 %v714, %v780
      %v784 = vld [vmem:[%s2] sm:$0xff]
      %786 = vset.pattern.permute.xlu0 0
      %787 = vperm.xlu0 %786, %v784
      %v788 = vpop.permute.xlu0 %787
      %v790 = vadd.f32 %v782, %v788
      %v791 = vadd.f32 %v783, %v788
      %vm792 = vcmp.ge.f32.partialorder %v790, 0.0
      %vm793 = vcmp.ge.f32.partialorder %v791, 0.0
      %v794 = vmul.f32 %v790, 0.2
      %v795 = vmul.f32 %v791, 0.2
      %v796 = vsel %vm792, %v790, %v794
      %v797 = vsel %vm793, %v791, %v795
      %v798 = vmul.f32 %v796, 1.4142135
      %v799 = vmul.f32 %v797, 1.4142135
      %800 = vst [vmem:[%s199] sm:$0xff] %v798
      %801 = vst [vmem:[%s199 + $0x8] sm:$0xff] %v799
      %s802 = smul.u32 2, %s19
      %p803 = scmp.lt.s32.totalorder %s18, 1
      %s804 = scalar_select %p803, %s18, 1
      %p805 = scmp.lt.s32.totalorder %s802, 1
      %s806 = scalar_select %p805, %s802, 1
      %s807 = smul.addr %s804, 2
      %s808 = sadd.s32 %s806, %s807
      %s809 = smul.addr %s808, 8
      %s810 = scalar_lea.vmem %s3, %s809
      // Predicated region
      $region33: #{discriminator_forward.9} parent=31 // pred_check
        %p811 = pneg %p116
      $region34: #{discriminator_forward.9} parent=31 // pred_check_branch
        %813 = sbr.rel (%p811) target = $region36
      $region35: #{discriminator_forward.9} parent=31 // pred_region
        %s814 = smul.u32 2, %s19
      $region36: #{discriminator_forward.9} parent=31 // pred_fallthru
        _
    $region32: #{discriminator_forward.9} parent=5 // pred_fallthru
      _
    %p815 = scmp.le.s32.totalorder 2, %s9
    // Predicated region
    $region37: #{discriminator_forward.9} parent=5 // pred_check
      %p816 = pneg %p815
    $region38: #{discriminator_forward.9} parent=5 // pred_check_branch
      %818 = sbr.rel (%p816) target = $region40
    $region39: #{discriminator_forward.9} parent=5 // pred_region
      %s819 = ssub.s32 %s9, 2
      // Predicated region
      $region41: #{discriminator_forward.9} parent=39 // pred_check
        %p820 = pneg %p122
      $region42: #{discriminator_forward.9} parent=39 // pred_check_branch
        %822 = sbr.rel (%p820) target = $region44
      $region43: #{discriminator_forward.9} parent=39 // pred_region
        %s823 = smul.u32 2, %s21
        %p824 = scmp.lt.s32.totalorder %s20, 1
        %s825 = scalar_select %p824, %s20, 1
        %p826 = scmp.lt.s32.totalorder %s823, 1
        %s827 = scalar_select %p826, %s823, 1
        %s828 = smul.addr %s825, 2
        %s829 = sadd.s32 %s827, %s828
        %s830 = smul.addr %s829, 8
        %s831 = scalar_lea.vmem %s3, %s830
      $region44: #{discriminator_forward.9} parent=39 // pred_fallthru
        _
    $region40: #{discriminator_forward.9} parent=5 // pred_fallthru
      _
  $region6: #{discriminator_forward.9} parent=0 // loop_footer
    %s13 = sadd.s32 1, %s9
  $region7: #{discriminator_forward.9} parent=0 // loop_footer_branch
    %8 = sbr.rel target = $region3
  $region8: #{discriminator_forward.9} parent=0 // loop_exit
    _

// kernel: discriminator_forward.10
$region0: #{discriminator_forward.10}
  #allocation0 [shape = 'u32[]', space=smem, size = 0x4, offset = 0x4, fixed_abs, tag = 'smem constant byte address 0x4 - core index']
  #allocation1 [shape = 'u32[72,128]{1,0:T(1,128)}', space=vmem, size = 0x9000, scoped, tag = 'internal scratch']
  %s0 = inlined_call_operand.vmem [shape: f32[72,128], index: 0, kind: input, shape index: {}]
  %s1 = inlined_call_operand.vmem [shape: f32[4,128], index: 1, kind: input, shape index: {}]
  %s2 = inlined_call_operand.vmem [shape: f32[8,72], index: 2, kind: input, shape index: {}]
  %s3 = inlined_call_operand.vmem [shape: f32[8,4], index: 3, kind: input, shape index: {}]
  %s4 = inlined_call_operand.vmem [shape: f32[8,1], index: 4, kind: input, shape index: {}]
  %s5 = inlined_call_operand.vmem [shape: f32[8,128], index: 5, kind: output, shape index: {}]
  %s6 = sld [smem:[#allocation0]]
  $region30: #{discriminator_forward.10} parent=0
    _
  %s8 = ssub.s32 1, %s6
  %s9 = scalar_select 0, %s8, %s6
  // Predicated region
  $region2: #{discriminator_forward.10} parent=0 // pred_check
    _
  $region3: #{discriminator_forward.10} parent=0 // pred_check_branch
    %11 = sbr.rel (0) target = $region5
  $region4: #{discriminator_forward.10} parent=0 // pred_region
    _
  $region5: #{discriminator_forward.10} parent=0 // pred_fallthru
    _
  // Predicated region
  $region6: #{discriminator_forward.10} parent=0 // pred_check
    _
  $region7: #{discriminator_forward.10} parent=0 // pred_check_branch
    %13 = sbr.rel (0) target = $region9
  $region8: #{discriminator_forward.10} parent=0 // pred_region
    _
  $region9: #{discriminator_forward.10} parent=0 // pred_fallthru
    _
  // Predicated region
  $region10: #{discriminator_forward.10} parent=0 // pred_check
    _
  $region11: #{discriminator_forward.10} parent=0 // pred_check_branch
    %15 = sbr.rel (0) target = $region13
  $region12: #{discriminator_forward.10} parent=0 // pred_region
    _
  $region13: #{discriminator_forward.10} parent=0 // pred_fallthru
    _
  // Predicated region
  $region14: #{discriminator_forward.10} parent=0 // pred_check
    _
  $region15: #{discriminator_forward.10} parent=0 // pred_check_branch
    %17 = sbr.rel (0) target = $region17
  $region16: #{discriminator_forward.10} parent=0 // pred_region
    _
  $region17: #{discriminator_forward.10} parent=0 // pred_fallthru
    _
  // Predicated region
  $region18: #{discriminator_forward.10} parent=0 // pred_check
    _
  $region19: #{discriminator_forward.10} parent=0 // pred_check_branch
    %19 = sbr.rel (0) target = $region21
  $region20: #{discriminator_forward.10} parent=0 // pred_region
    _
  $region21: #{discriminator_forward.10} parent=0 // pred_fallthru
    _
  %v20 = vld [vmem:[%s2] sm:$0xff]
  %v21 = vld [vmem:[%s0] sm:$0xff]
  %v22 = vld [vmem:[%s0 + $0x8] sm:$0xff]
  %v23 = vld [vmem:[%s0 + $0x10] sm:$0xff]
  %v24 = vld [vmem:[%s0 + $0x18] sm:$0xff]
  %v25 = vld [vmem:[%s0 + $0x20] sm:$0xff]
  %v26 = vld [vmem:[%s0 + $0x28] sm:$0xff]
  %v27 = vld [vmem:[%s0 + $0x30] sm:$0xff]
  %v28 = vld [vmem:[%s0 + $0x38] sm:$0xff]
  %v29 = vld [vmem:[%s0 + $0x40] sm:$0xff]
  %v30 = vld [vmem:[%s4] sm:$0xff]
  %32 = vset.pattern.permute.xlu0 0
  %33 = vperm.xlu0 %32, %v30
  %v34 = vpop.permute.xlu0 %33
  %vm36 = vcmask 588800
  %v38 = vsel %vm36, %v20, 0
  %40 = vmatpush.msra.mxu0 0.0
  %41 = vmatpush.msra.mxu0 0.0
  %42 = vmatpush.msra.mxu0 0.0
  %43 = vmatpush.msra.mxu0 0.0
  %44 = vmatpush.msra.mxu0 0.0
  %45 = vmatpush.msra.mxu0 0.0
  %46 = vmatpush.msra.mxu0 0.0
  %47 = vmatpush.msra.mxu0 %v29
  %48 = vmatpush.msra.mxu0 %v28
  %49 = vmatpush.msra.mxu0 %v27
  %50 = vmatpush.msra.mxu0 %v26
  %51 = vmatpush.msra.mxu0 %v25
  %52 = vmatpush.msra.mxu0 %v24
  %53 = vmatpush.msra.mxu0 %v23
  %54 = vmatpush.msra.mxu0 %v22
  %55 = vmatpush.msra.mxu0 %v21
  %56 = vmatmul.f32.gmra.mxu0 %v38
  %v57 = vpop.f32.mrf.mxu0
  %v58 = vadd.f32 %v34, %v57
  %59 = vdwg.mxu0
  %v60 = vld [vmem:[%s3] sm:$0xff]
  %v61 = vld [vmem:[%s1] sm:$0xf]
  %vm62 = vcmask 31744
  %v64 = vsel %vm62, %v60, 0
  %vm66 = vcmask 1043456
  %v68 = vsel %vm66, %v61, 0
  %70 = vmatpush.msra.mxu0 0.0
  %71 = vmatpush.msra.mxu0 0.0
  %72 = vmatpush.msra.mxu0 0.0
  %73 = vmatpush.msra.mxu0 0.0
  %74 = vmatpush.msra.mxu0 0.0
  %75 = vmatpush.msra.mxu0 0.0
  %76 = vmatpush.msra.mxu0 0.0
  %77 = vmatpush.msra.mxu0 0.0
  %78 = vmatpush.msra.mxu0 0.0
  %79 = vmatpush.msra.mxu0 0.0
  %80 = vmatpush.msra.mxu0 0.0
  %81 = vmatpush.msra.mxu0 0.0
  %82 = vmatpush.msra.mxu0 0.0
  %83 = vmatpush.msra.mxu0 0.0
  %84 = vmatpush.msra.mxu0 0.0
  %85 = vmatpush.msra.mxu0 %v68
  %86 = vmatmul.f32.gmra.mxu0 %v64
  %v87 = vpop.f32.mrf.mxu0
  %v88 = vadd.f32 0.0, %v87
  %89 = vdwg.mxu0
  %v90 = vadd.f32 %v58, %v88
  %91 = vst [vmem:[%s5] sm:$0xff] %v90
  // Predicated region
  $region22: #{discriminator_forward.10} parent=0 // pred_check
    _
  $region23: #{discriminator_forward.10} parent=0 // pred_check_branch
    %93 = sbr.rel (0) target = $region25
  $region24: #{discriminator_forward.10} parent=0 // pred_region
    _
  $region25: #{discriminator_forward.10} parent=0 // pred_fallthru
    _
  // Predicated region
  $region26: #{discriminator_forward.10} parent=0 // pred_check
    _
  $region27: #{discriminator_forward.10} parent=0 // pred_check_branch
    %95 = sbr.rel (0) target = $region29
  $region28: #{discriminator_forward.10} parent=0 // pred_region
    _
  $region29: #{discriminator_forward.10} parent=0 // pred_fallthru
    _

// kernel: discriminator_forward.11
$region0: #{discriminator_forward.11}
  #allocation0 [shape = 'u32[]', space=smem, size = 0x4, offset = 0x4, fixed_abs, tag = 'smem constant byte address 0x4 - core index']
  #allocation1 [shape = 'u32[72,128]{1,0:T(1,128)}', space=vmem, size = 0x9000, scoped, tag = 'internal scratch']
  %s0 = inlined_call_operand.vmem [shape: f32[72,128], index: 0, kind: input, shape index: {}]
  %s1 = inlined_call_operand.vmem [shape: f32[16,72], index: 1, kind: input, shape index: {}]
  %s2 = inlined_call_operand.vmem [shape: f32[16,1], index: 2, kind: input, shape index: {}]
  %s3 = inlined_call_operand.vmem [shape: f32[16,128], index: 3, kind: output, shape index: {}]
  %s4 = sld [smem:[#allocation0]]
  $region22: #{discriminator_forward.11} parent=0
    _
  %s6 = ssub.s32 1, %s4
  %s7 = scalar_select 0, %s6, %s4
  // Predicated region
  $region2: #{discriminator_forward.11} parent=0 // pred_check
    _
  $region3: #{discriminator_forward.11} parent=0 // pred_check_branch
    %9 = sbr.rel (0) target = $region5
  $region4: #{discriminator_forward.11} parent=0 // pred_region
    _
  $region5: #{discriminator_forward.11} parent=0 // pred_fallthru
    _
  // Predicated region
  $region6: #{discriminator_forward.11} parent=0 // pred_check
    _
  $region7: #{discriminator_forward.11} parent=0 // pred_check_branch
    %11 = sbr.rel (0) target = $region9
  $region8: #{discriminator_forward.11} parent=0 // pred_region
    _
  $region9: #{discriminator_forward.11} parent=0 // pred_fallthru
    _
  // Predicated region
  $region10: #{discriminator_forward.11} parent=0 // pred_check
    _
  $region11: #{discriminator_forward.11} parent=0 // pred_check_branch
    %13 = sbr.rel (0) target = $region13
  $region12: #{discriminator_forward.11} parent=0 // pred_region
    _
  $region13: #{discriminator_forward.11} parent=0 // pred_fallthru
    _
  %v14 = vld [vmem:[%s1] sm:$0xff]
  %v15 = vld [vmem:[%s1 + $0x8] sm:$0xff]
  %v16 = vld [vmem:[%s0] sm:$0xff]
  %v17 = vld [vmem:[%s0 + $0x8] sm:$0xff]
  %v18 = vld [vmem:[%s0 + $0x10] sm:$0xff]
  %v19 = vld [vmem:[%s0 + $0x18] sm:$0xff]
  %v20 = vld [vmem:[%s0 + $0x20] sm:$0xff]
  %v21 = vld [vmem:[%s0 + $0x28] sm:$0xff]
  %v22 = vld [vmem:[%s0 + $0x30] sm:$0xff]
  %v23 = vld [vmem:[%s0 + $0x38] sm:$0xff]
  %v24 = vld [vmem:[%s0 + $0x40] sm:$0xff]
  %v25 = vld [vmem:[%s2] sm:$0xff]
  %v26 = vld [vmem:[%s2 + $0x8] sm:$0xff]
  %28 = vset.pattern.permute.xlu0 0
  %29 = vperm.xlu0 %28, %v25
  %v30 = vpop.permute.xlu0 %29
  %33 = vset.pattern.permute.xlu0 0
  %34 = vperm.xlu0 %33, %v26
  %v35 = vpop.permute.xlu0 %34
  %vm37 = vcmask 588800
  %v39 = vsel %vm37, %v14, 0
  %v42 = vsel %vm37, %v15, 0
  %44 = vmatpush.msra.mxu0 0.0
  %45 = vmatpush.msra.mxu0 0.0
  %46 = vmatpush.msra.mxu0 0.0
  %47 = vmatpush.msra.mxu0 0.0
  %48 = vmatpush.msra.mxu0 0.0
  %49 = vmatpush.msra.mxu0 0.0
  %50 = vmatpush.msra.mxu0 0.0
  %51 = vmatpush.msra.mxu0 %v24
  %52 = vmatpush.msra.mxu0 %v23
  %53 = vmatpush.msra.mxu0 %v22
  %54 = vmatpush.msra.mxu0 %v21
  %55 = vmatpush.msra.mxu0 %v20
  %56 = vmatpush.msra.mxu0 %v19
  %57 = vmatpush.msra.mxu0 %v18
  %58 = vmatpush.msra.mxu0 %v17
  %59 = vmatpush.msra.mxu0 %v16
  %60 = vmatmul.f32.gmra.mxu0 %v39
  %v61 = vpop.f32.mrf.mxu0
  %v62 = vadd.f32 %v30, %v61
  %63 = vmatmul.f32.gmra.mxu0 %v42
  %v64 = vpop.f32.mrf.mxu0
  %v65 = vadd.f32 %v35, %v64
  %66 = vdwg.mxu0
  %vm67 = vcmp.ge.f32.partialorder %v62, 0.0
  %vm68 = vcmp.ge.f32.partialorder %v65, 0.0
  %v69 = vmul.f32 %v62, 0.2
  %v70 = vmul.f32 %v65, 0.2
  %v71 = vsel %vm67, %v62, %v69
  %v72 = vsel %vm68, %v65, %v70
  %v73 = vmul.f32 %v71, 1.4142135
  %v74 = vmul.f32 %v72, 1.4142135
  %75 = vst [vmem:[%s3] sm:$0xff] %v73
  %76 = vst [vmem:[%s3 + $0x8] sm:$0xff] %v74
  // Predicated region
  $region14: #{discriminator_forward.11} parent=0 // pred_check
    _
  $region15: #{discriminator_forward.11} parent=0 // pred_check_branch
    %78 = sbr.rel (0) target = $region17
  $region16: #{discriminator_forward.11} parent=0 // pred_region
    _
  $region17: #{discriminator_forward.11} parent=0 // pred_fallthru
    _
  // Predicated region
  $region18: #{discriminator_forward.11} parent=0 // pred_check
    _
  $region19: #{discriminator_forward.11} parent=0 // pred_check_branch
    %80 = sbr.rel (0) target = $region21
  $region20: #{discriminator_forward.11} parent=0 // pred_region
    _
  $region21: #{discriminator_forward.11} parent=0 // pred_fallthru
    _

// kernel: discriminator_forward.12
$region0: #{discriminator_forward.12}
  #allocation0 [shape = 'u32[]', space=smem, size = 0x4, offset = 0x4, fixed_abs, tag = 'smem constant byte address 0x4 - core index']
  #allocation1 [shape = 'u32[72,128]{1,0:T(1,128)}', space=vmem, size = 0x9000, scoped, tag = 'internal scratch']
  %s0 = inlined_call_operand.vmem [shape: f32[144,32], index: 0, kind: input, shape index: {}]
  %s1 = inlined_call_operand.vmem [shape: f32[8,32], index: 1, kind: input, shape index: {}]
  %s2 = inlined_call_operand.vmem [shape: f32[16,144], index: 2, kind: input, shape index: {}]
  %s3 = inlined_call_operand.vmem [shape: f32[16,8], index: 3, kind: input, shape index: {}]
  %s4 = inlined_call_operand.vmem [shape: f32[16,1], index: 4, kind: input, shape index: {}]
  %s5 = inlined_call_operand.vmem [shape: f32[16,32], index: 5, kind: output, shape index: {}]
  %s6 = sld [smem:[#allocation0]]
  $region30: #{discriminator_forward.12} parent=0
    _
  %s8 = ssub.s32 1, %s6
  %s9 = scalar_select 0, %s8, %s6
  // Predicated region
  $region2: #{discriminator_forward.12} parent=0 // pred_check
    _
  $region3: #{discriminator_forward.12} parent=0 // pred_check_branch
    %11 = sbr.rel (0) target = $region5
  $region4: #{discriminator_forward.12} parent=0 // pred_region
    _
  $region5: #{discriminator_forward.12} parent=0 // pred_fallthru
    _
  // Predicated region
  $region6: #{discriminator_forward.12} parent=0 // pred_check
    _
  $region7: #{discriminator_forward.12} parent=0 // pred_check_branch
    %13 = sbr.rel (0) target = $region9
  $region8: #{discriminator_forward.12} parent=0 // pred_region
    _
  $region9: #{discriminator_forward.12} parent=0 // pred_fallthru
    _
  // Predicated region
  $region10: #{discriminator_forward.12} parent=0 // pred_check
    _
  $region11: #{discriminator_forward.12} parent=0 // pred_check_branch
    %15 = sbr.rel (0) target = $region13
  $region12: #{discriminator_forward.12} parent=0 // pred_region
    _
  $region13: #{discriminator_forward.12} parent=0 // pred_fallthru
    _
  // Predicated region
  $region14: #{discriminator_forward.12} parent=0 // pred_check
    _
  $region15: #{discriminator_forward.12} parent=0 // pred_check_branch
    %17 = sbr.rel (0) target = $region17
  $region16: #{discriminator_forward.12} parent=0 // pred_region
    _
  $region17: #{discriminator_forward.12} parent=0 // pred_fallthru
    _
  // Predicated region
  $region18: #{discriminator_forward.12} parent=0 // pred_check
    _
  $region19: #{discriminator_forward.12} parent=0 // pred_check_branch
    %19 = sbr.rel (0) target = $region21
  $region20: #{discriminator_forward.12} parent=0 // pred_region
    _
  $region21: #{discriminator_forward.12} parent=0 // pred_fallthru
    _
  %v20 = vld [vmem:[%s2] sm:$0xff]
  %v21 = vld [vmem:[%s2 + $0x8] sm:$0xff]
  %v22 = vld [vmem:[%s2 + $0x10] sm:$0xff]
  %v23 = vld [vmem:[%s2 + $0x18] sm:$0xff]
  %v24 = vld [vmem:[%s0] sm:$0xff]
  %v25 = vld [vmem:[%s0 + $0x8] sm:$0xff]
  %v26 = vld [vmem:[%s0 + $0x10] sm:$0xff]
  %v27 = vld [vmem:[%s0 + $0x18] sm:$0xff]
  %v28 = vld [vmem:[%s0 + $0x20] sm:$0xff]
  %v29 = vld [vmem:[%s0 + $0x28] sm:$0xff]
  %v30 = vld [vmem:[%s0 + $0x30] sm:$0xff]
  %v31 = vld [vmem:[%s0 + $0x38] sm:$0xff]
  %v32 = vld [vmem:[%s0 + $0x40] sm:$0xff]
  %v33 = vld [vmem:[%s0 + $0x48] sm:$0xff]
  %v34 = vld [vmem:[%s0 + $0x50] sm:$0xff]
  %v35 = vld [vmem:[%s0 + $0x58] sm:$0xff]
  %v36 = vld [vmem:[%s0 + $0x60] sm:$0xff]
  %v37 = vld [vmem:[%s0 + $0x68] sm:$0xff]
  %v38 = vld [vmem:[%s0 + $0x70] sm:$0xff]
  %v39 = vld [vmem:[%s0 + $0x78] sm:$0xff]
  %v40 = vld [vmem:[%s0 + $0x80] sm:$0xff]
  %v41 = vld [vmem:[%s0 + $0x88] sm:$0xff]
  %v42 = vld [vmem:[%s4] sm:$0xff]
  %v43 = vld [vmem:[%s4 + $0x8] sm:$0xff]
  %45 = vset.pattern.permute.xlu0 0
  %46 = vperm.xlu0 %45, %v42
  %v47 = vpop.permute.xlu0 %46
  %50 = vset.pattern.permute.xlu0 0
  %51 = vperm.xlu0 %50, %v43
  %v52 = vpop.permute.xlu0 %51
  %vm54 = vcmask 130048
  %v56 = vsel %vm54, %v21, 0
  %v59 = vsel %vm54, %v23, 0
  %61 = vmatpush.msra.mxu0 %v39
  %62 = vmatpush.msra.mxu0 %v38
  %63 = vmatpush.msra.mxu0 %v37
  %64 = vmatpush.msra.mxu0 %v36
  %65 = vmatpush.msra.mxu0 %v35
  %66 = vmatpush.msra.mxu0 %v34
  %67 = vmatpush.msra.mxu0 %v33
  %68 = vmatpush.msra.mxu0 %v32
  %69 = vmatpush.msra.mxu0 %v31
  %70 = vmatpush.msra.mxu0 %v30
  %71 = vmatpush.msra.mxu0 %v29
  %72 = vmatpush.msra.mxu0 %v28
  %73 = vmatpush.msra.mxu0 %v27
  %74 = vmatpush.msra.mxu0 %v26
  %75 = vmatpush.msra.mxu0 %v25
  %76 = vmatpush.msra.mxu0 %v24
  %77 = vmatmul.f32.gmra.mxu0 %v20
  %v78 = vpop.f32.mrf.mxu0
  %v79 = vadd.f32 %v47, %v78
  %80 = vmatmul.f32.gmra.mxu0 %v22
  %v81 = vpop.f32.mrf.mxu0
  %v82 = vadd.f32 %v52, %v81
  %83 = vdwg.mxu0
  %84 = vmatpush.msra.mxu0 0.0
  %85 = vmatpush.msra.mxu0 0.0
  %86 = vmatpush.msra.mxu0 0.0
  %87 = vmatpush.msra.mxu0 0.0
  %88 = vmatpush.msra.mxu0 0.0
  %89 = vmatpush.msra.mxu0 0.0
  %90 = vmatpush.msra.mxu0 0.0
  %91 = vmatpush.msra.mxu0 0.0
  %92 = vmatpush.msra.mxu0 0.0
  %93 = vmatpush.msra.mxu0 0.0
  %94 = vmatpush.msra.mxu0 0.0
  %95 = vmatpush.msra.mxu0 0.0
  %96 = vmatpush.msra.mxu0 0.0
  %97 = vmatpush.msra.mxu0 0.0
  %98 = vmatpush.msra.mxu0 %v41
  %99 = vmatpush.msra.mxu0 %v40
  %100 = vmatmul.f32.gmra.mxu0 %v56
  %v101 = vpop.f32.mrf.mxu0
  %v102 = vadd.f32 %v79, %v101
  %103 = vmatmul.f32.gmra.mxu0 %v59
  %v104 = vpop.f32.mrf.mxu0
  %v105 = vadd.f32 %v82, %v104
  %106 = vdwg.mxu0
  %v107 = vld [vmem:[%s3] sm:$0xff]
  %v108 = vld [vmem:[%s3 + $0x8] sm:$0xff]
  %v109 = vld [vmem:[%s1] sm:$0xff]
  %vm110 = vcmask 64512
  %v112 = vsel %vm110, %v107, 0
  %v115 = vsel %vm110, %v108, 0
  %117 = vmatpush.msra.mxu0 0.0
  %118 = vmatpush.msra.mxu0 0.0
  %119 = vmatpush.msra.mxu0 0.0
  %120 = vmatpush.msra.mxu0 0.0
  %121 = vmatpush.msra.mxu0 0.0
  %122 = vmatpush.msra.mxu0 0.0
  %123 = vmatpush.msra.mxu0 0.0
  %124 = vmatpush.msra.mxu0 0.0
  %125 = vmatpush.msra.mxu0 0.0
  %126 = vmatpush.msra.mxu0 0.0
  %127 = vmatpush.msra.mxu0 0.0
  %128 = vmatpush.msra.mxu0 0.0
  %129 = vmatpush.msra.mxu0 0.0
  %130 = vmatpush.msra.mxu0 0.0
  %131 = vmatpush.msra.mxu0 0.0
  %132 = vmatpush.msra.mxu0 %v109
  %133 = vmatmul.f32.gmra.mxu0 %v112
  %v134 = vpop.f32.mrf.mxu0
  %v135 = vadd.f32 0.0, %v134
  %136 = vmatmul.f32.gmra.mxu0 %v115
  %v137 = vpop.f32.mrf.mxu0
  %v138 = vadd.f32 0.0, %v137
  %139 = vdwg.mxu0
  %v140 = vadd.f32 %v102, %v135
  %v141 = vadd.f32 %v105, %v138
  %vm142 = vcmask 261120
  %143 = vst.msk [vmem:[%s5] sm:$0xff] %vm142, %v140
  %144 = vst.msk [vmem:[%s5 + $0x8] sm:$0xff] %vm142, %v141
  // Predicated region
  $region22: #{discriminator_forward.12} parent=0 // pred_check
    _
  $region23: #{discriminator_forward.12} parent=0 // pred_check_branch
    %146 = sbr.rel (0) target = $region25
  $region24: #{discriminator_forward.12} parent=0 // pred_region
    _
  $region25: #{discriminator_forward.12} parent=0 // pred_fallthru
    _
  // Predicated region
  $region26: #{discriminator_forward.12} parent=0 // pred_check
    _
  $region27: #{discriminator_forward.12} parent=0 // pred_check_branch
    %148 = sbr.rel (0) target = $region29
  $region28: #{discriminator_forward.12} parent=0 // pred_region
    _
  $region29: #{discriminator_forward.12} parent=0 // pred_fallthru
    _

// kernel: discriminator_forward.13
$region0: #{discriminator_forward.13}
  #allocation0 [shape = 'u32[]', space=smem, size = 0x4, offset = 0x4, fixed_abs, tag = 'smem constant byte address 0x4 - core index']
  #allocation1 [shape = 'u32[72,128]{1,0:T(1,128)}', space=vmem, size = 0x9000, scoped, tag = 'internal scratch']
  %s0 = inlined_call_operand.vmem [shape: f32[144,32], index: 0, kind: input, shape index: {}]
  %s1 = inlined_call_operand.vmem [shape: f32[32,144], index: 1, kind: input, shape index: {}]
  %s2 = inlined_call_operand.vmem [shape: f32[32,1], index: 2, kind: input, shape index: {}]
  %s3 = inlined_call_operand.vmem [shape: f32[32,32], index: 3, kind: output, shape index: {}]
  %s4 = sld [smem:[#allocation0]]
  $region22: #{discriminator_forward.13} parent=0
    _
  %s6 = ssub.s32 1, %s4
  %s7 = scalar_select 0, %s6, %s4
  // Predicated region
  $region2: #{discriminator_forward.13} parent=0 // pred_check
    _
  $region3: #{discriminator_forward.13} parent=0 // pred_check_branch
    %9 = sbr.rel (0) target = $region5
  $region4: #{discriminator_forward.13} parent=0 // pred_region
    _
  $region5: #{discriminator_forward.13} parent=0 // pred_fallthru
    _
  // Predicated region
  $region6: #{discriminator_forward.13} parent=0 // pred_check
    _
  $region7: #{discriminator_forward.13} parent=0 // pred_check_branch
    %11 = sbr.rel (0) target = $region9
  $region8: #{discriminator_forward.13} parent=0 // pred_region
    _
  $region9: #{discriminator_forward.13} parent=0 // pred_fallthru
    _
  // Predicated region
  $region10: #{discriminator_forward.13} parent=0 // pred_check
    _
  $region11: #{discriminator_forward.13} parent=0 // pred_check_branch
    %13 = sbr.rel (0) target = $region13
  $region12: #{discriminator_forward.13} parent=0 // pred_region
    _
  $region13: #{discriminator_forward.13} parent=0 // pred_fallthru
    _
  %v14 = vld [vmem:[%s1] sm:$0xff]
  %v15 = vld [vmem:[%s1 + $0x8] sm:$0xff]
  %v16 = vld [vmem:[%s1 + $0x10] sm:$0xff]
  %v17 = vld [vmem:[%s1 + $0x18] sm:$0xff]
  %v18 = vld [vmem:[%s1 + $0x20] sm:$0xff]
  %v19 = vld [vmem:[%s1 + $0x28] sm:$0xff]
  %v20 = vld [vmem:[%s1 + $0x30] sm:$0xff]
  %v21 = vld [vmem:[%s1 + $0x38] sm:$0xff]
  %v22 = vld [vmem:[%s0] sm:$0xff]
  %v23 = vld [vmem:[%s0 + $0x8] sm:$0xff]
  %v24 = vld [vmem:[%s0 + $0x10] sm:$0xff]
  %v25 = vld [vmem:[%s0 + $0x18] sm:$0xff]
  %v26 = vld [vmem:[%s0 + $0x20] sm:$0xff]
  %v27 = vld [vmem:[%s0 + $0x28] sm:$0xff]
  %v28 = vld [vmem:[%s0 + $0x30] sm:$0xff]
  %v29 = vld [vmem:[%s0 + $0x38] sm:$0xff]
  %v30 = vld [vmem:[%s0 + $0x40] sm:$0xff]
  %v31 = vld [vmem:[%s0 + $0x48] sm:$0xff]
  %v32 = vld [vmem:[%s0 + $0x50] sm:$0xff]
  %v33 = vld [vmem:[%s0 + $0x58] sm:$0xff]
  %v34 = vld [vmem:[%s0 + $0x60] sm:$0xff]
  %v35 = vld [vmem:[%s0 + $0x68] sm:$0xff]
  %v36 = vld [vmem:[%s0 + $0x70] sm:$0xff]
  %v37 = vld [vmem:[%s0 + $0x78] sm:$0xff]
  %v38 = vld [vmem:[%s0 + $0x80] sm:$0xff]
  %v39 = vld [vmem:[%s0 + $0x88] sm:$0xff]
  %v40 = vld [vmem:[%s2] sm:$0xff]
  %v41 = vld [vmem:[%s2 + $0x8] sm:$0xff]
  %v42 = vld [vmem:[%s2 + $0x10] sm:$0xff]
  %v43 = vld [vmem:[%s2 + $0x18] sm:$0xff]
  %45 = vset.pattern.permute.xlu0 0
  %46 = vperm.xlu0 %45, %v40
  %v47 = vpop.permute.xlu0 %46
  %50 = vset.pattern.permute.xlu0 0
  %51 = vperm.xlu0 %50, %v41
  %v52 = vpop.permute.xlu0 %51
  %55 = vset.pattern.permute.xlu0 0
  %56 = vperm.xlu0 %55, %v42
  %v57 = vpop.permute.xlu0 %56
  %60 = vset.pattern.permute.xlu0 0
  %61 = vperm.xlu0 %60, %v43
  %v62 = vpop.permute.xlu0 %61
  %vm64 = vcmask 130048
  %v66 = vsel %vm64, %v15, 0
  %v69 = vsel %vm64, %v17, 0
  %v72 = vsel %vm64, %v19, 0
  %v75 = vsel %vm64, %v21, 0
  %77 = vmatpush.msra.mxu0 %v37
  %78 = vmatpush.msra.mxu0 %v36
  %79 = vmatpush.msra.mxu0 %v35
  %80 = vmatpush.msra.mxu0 %v34
  %81 = vmatpush.msra.mxu0 %v33
  %82 = vmatpush.msra.mxu0 %v32
  %83 = vmatpush.msra.mxu0 %v31
  %84 = vmatpush.msra.mxu0 %v30
  %85 = vmatpush.msra.mxu0 %v29
  %86 = vmatpush.msra.mxu0 %v28
  %87 = vmatpush.msra.mxu0 %v27
  %88 = vmatpush.msra.mxu0 %v26
  %89 = vmatpush.msra.mxu0 %v25
  %90 = vmatpush.msra.mxu0 %v24
  %91 = vmatpush.msra.mxu0 %v23
  %92 = vmatpush.msra.mxu0 %v22
  %93 = vmatmul.f32.gmra.mxu0 %v14
  %v94 = vpop.f32.mrf.mxu0
  %v95 = vadd.f32 %v47, %v94
  %96 = vmatmul.f32.gmra.mxu0 %v16
  %v97 = vpop.f32.mrf.mxu0
  %v98 = vadd.f32 %v52, %v97
  %99 = vmatmul.f32.gmra.mxu0 %v18
  %v100 = vpop.f32.mrf.mxu0
  %v101 = vadd.f32 %v57, %v100
  %102 = vmatmul.f32.gmra.mxu0 %v20
  %v103 = vpop.f32.mrf.mxu0
  %v104 = vadd.f32 %v62, %v103
  %105 = vdwg.mxu0
  %106 = vmatpush.msra.mxu0 0.0
  %107 = vmatpush.msra.mxu0 0.0
  %108 = vmatpush.msra.mxu0 0.0
  %109 = vmatpush.msra.mxu0 0.0
  %110 = vmatpush.msra.mxu0 0.0
  %111 = vmatpush.msra.mxu0 0.0
  %112 = vmatpush.msra.mxu0 0.0
  %113 = vmatpush.msra.mxu0 0.0
  %114 = vmatpush.msra.mxu0 0.0
  %115 = vmatpush.msra.mxu0 0.0
  %116 = vmatpush.msra.mxu0 0.0
  %117 = vmatpush.msra.mxu0 0.0
  %118 = vmatpush.msra.mxu0 0.0
  %119 = vmatpush.msra.mxu0 0.0
  %120 = vmatpush.msra.mxu0 %v39
  %121 = vmatpush.msra.mxu0 %v38
  %122 = vmatmul.f32.gmra.mxu0 %v66
  %v123 = vpop.f32.mrf.mxu0
  %v124 = vadd.f32 %v95, %v123
  %125 = vmatmul.f32.gmra.mxu0 %v69
  %v126 = vpop.f32.mrf.mxu0
  %v127 = vadd.f32 %v98, %v126
  %128 = vmatmul.f32.gmra.mxu0 %v72
  %v129 = vpop.f32.mrf.mxu0
  %v130 = vadd.f32 %v101, %v129
  %131 = vmatmul.f32.gmra.mxu0 %v75
  %v132 = vpop.f32.mrf.mxu0
  %v133 = vadd.f32 %v104, %v132
  %134 = vdwg.mxu0
  %vm135 = vcmp.ge.f32.partialorder %v124, 0.0
  %vm136 = vcmp.ge.f32.partialorder %v127, 0.0
  %vm137 = vcmp.ge.f32.partialorder %v130, 0.0
  %vm138 = vcmp.ge.f32.partialorder %v133, 0.0
  %v139 = vmul.f32 %v124, 0.2
  %v140 = vmul.f32 %v127, 0.2
  %v141 = vmul.f32 %v130, 0.2
  %v142 = vmul.f32 %v133, 0.2
  %v143 = vsel %vm135, %v124, %v139
  %v144 = vsel %vm136, %v127, %v140
  %v145 = vsel %vm137, %v130, %v141
  %v146 = vsel %vm138, %v133, %v142
  %v147 = vmul.f32 %v143, 1.4142135
  %v148 = vmul.f32 %v144, 1.4142135
  %v149 = vmul.f32 %v145, 1.4142135
  %v150 = vmul.f32 %v146, 1.4142135
  %vm151 = vcmask 261120
  %152 = vst.msk [vmem:[%s3] sm:$0xff] %vm151, %v147
  %153 = vst.msk [vmem:[%s3 + $0x8] sm:$0xff] %vm151, %v148
  %154 = vst.msk [vmem:[%s3 + $0x10] sm:$0xff] %vm151, %v149
  %155 = vst.msk [vmem:[%s3 + $0x18] sm:$0xff] %vm151, %v150
  // Predicated region
  $region14: #{discriminator_forward.13} parent=0 // pred_check
    _
  $region15: #{discriminator_forward.13} parent=0 // pred_check_branch
    %157 = sbr.rel (0) target = $region17
  $region16: #{discriminator_forward.13} parent=0 // pred_region
    _
  $region17: #{discriminator_forward.13} parent=0 // pred_fallthru
    _
  // Predicated region
  $region18: #{discriminator_forward.13} parent=0 // pred_check
    _
  $region19: #{discriminator_forward.13} parent=0 // pred_check_branch
    %159 = sbr.rel (0) target = $region21
  $region20: #{discriminator_forward.13} parent=0 // pred_region
    _
  $region21: #{discriminator_forward.13} parent=0 // pred_fallthru
    _

// kernel: discriminator_forward.14
$region0: #{discriminator_forward.14}
  #allocation0 [shape = 'u32[]', space=smem, size = 0x4, offset = 0x4, fixed_abs, tag = 'smem constant byte address 0x4 - core index']
  #allocation1 [shape = 'u32[72,128]{1,0:T(1,128)}', space=vmem, size = 0x9000, scoped, tag = 'internal scratch']
  %s0 = inlined_call_operand.vmem [shape: f32[288,8], index: 0, kind: input, shape index: {}]
  %s1 = inlined_call_operand.vmem [shape: f32[16,8], index: 1, kind: input, shape index: {}]
  %s2 = inlined_call_operand.vmem [shape: f32[32,288], index: 2, kind: input, shape index: {}]
  %s3 = inlined_call_operand.vmem [shape: f32[32,16], index: 3, kind: input, shape index: {}]
  %s4 = inlined_call_operand.vmem [shape: f32[32,1], index: 4, kind: input, shape index: {}]
  %s5 = inlined_call_operand.vmem [shape: f32[32,8], index: 5, kind: output, shape index: {}]
  %s6 = sld [smem:[#allocation0]]
  $region30: #{discriminator_forward.14} parent=0
    _
  %s8 = ssub.s32 1, %s6
  %s9 = scalar_select 0, %s8, %s6
  // Predicated region
  $region2: #{discriminator_forward.14} parent=0 // pred_check
    _
  $region3: #{discriminator_forward.14} parent=0 // pred_check_branch
    %11 = sbr.rel (0) target = $region5
  $region4: #{discriminator_forward.14} parent=0 // pred_region
    _
  $region5: #{discriminator_forward.14} parent=0 // pred_fallthru
    _
  // Predicated region
  $region6: #{discriminator_forward.14} parent=0 // pred_check
    _
  $region7: #{discriminator_forward.14} parent=0 // pred_check_branch
    %13 = sbr.rel (0) target = $region9
  $region8: #{discriminator_forward.14} parent=0 // pred_region
    _
  $region9: #{discriminator_forward.14} parent=0 // pred_fallthru
    _
  // Predicated region
  $region10: #{discriminator_forward.14} parent=0 // pred_check
    _
  $region11: #{discriminator_forward.14} parent=0 // pred_check_branch
    %15 = sbr.rel (0) target = $region13
  $region12: #{discriminator_forward.14} parent=0 // pred_region
    _
  $region13: #{discriminator_forward.14} parent=0 // pred_fallthru
    _
  // Predicated region
  $region14: #{discriminator_forward.14} parent=0 // pred_check
    _
  $region15: #{discriminator_forward.14} parent=0 // pred_check_branch
    %17 = sbr.rel (0) target = $region17
  $region16: #{discriminator_forward.14} parent=0 // pred_region
    _
  $region17: #{discriminator_forward.14} parent=0 // pred_fallthru
    _
  // Predicated region
  $region18: #{discriminator_forward.14} parent=0 // pred_check
    _
  $region19: #{discriminator_forward.14} parent=0 // pred_check_branch
    %19 = sbr.rel (0) target = $region21
  $region20: #{discriminator_forward.14} parent=0 // pred_region
    _
  $region21: #{discriminator_forward.14} parent=0 // pred_fallthru
    _
  %v20 = vld [vmem:[%s2] sm:$0xff]
  %v21 = vld [vmem:[%s2 + $0x8] sm:$0xff]
  %v22 = vld [vmem:[%s2 + $0x10] sm:$0xff]
  %v23 = vld [vmem:[%s2 + $0x18] sm:$0xff]
  %v24 = vld [vmem:[%s2 + $0x20] sm:$0xff]
  %v25 = vld [vmem:[%s2 + $0x28] sm:$0xff]
  %v26 = vld [vmem:[%s2 + $0x30] sm:$0xff]
  %v27 = vld [vmem:[%s2 + $0x38] sm:$0xff]
  %v28 = vld [vmem:[%s2 + $0x40] sm:$0xff]
  %v29 = vld [vmem:[%s2 + $0x48] sm:$0xff]
  %v30 = vld [vmem:[%s2 + $0x50] sm:$0xff]
  %v31 = vld [vmem:[%s2 + $0x58] sm:$0xff]
  %v32 = vld [vmem:[%s0] sm:$0xff]
  %v33 = vld [vmem:[%s0 + $0x8] sm:$0xff]
  %v34 = vld [vmem:[%s0 + $0x10] sm:$0xff]
  %v35 = vld [vmem:[%s0 + $0x18] sm:$0xff]
  %v36 = vld [vmem:[%s0 + $0x20] sm:$0xff]
  %v37 = vld [vmem:[%s0 + $0x28] sm:$0xff]
  %v38 = vld [vmem:[%s0 + $0x30] sm:$0xff]
  %v39 = vld [vmem:[%s0 + $0x38] sm:$0xff]
  %v40 = vld [vmem:[%s0 + $0x40] sm:$0xff]
  %v41 = vld [vmem:[%s0 + $0x48] sm:$0xff]
  %v42 = vld [vmem:[%s0 + $0x50] sm:$0xff]
  %v43 = vld [vmem:[%s0 + $0x58] sm:$0xff]
  %v44 = vld [vmem:[%s0 + $0x60] sm:$0xff]
  %v45 = vld [vmem:[%s0 + $0x68] sm:$0xff]
  %v46 = vld [vmem:[%s0 + $0x70] sm:$0xff]
  %v47 = vld [vmem:[%s0 + $0x78] sm:$0xff]
  %v48 = vld [vmem:[%s0 + $0x80] sm:$0xff]
  %v49 = vld [vmem:[%s0 + $0x88] sm:$0xff]
  %v50 = vld [vmem:[%s0 + $0x90] sm:$0xff]
  %v51 = vld [vmem:[%s0 + $0x98] sm:$0xff]
  %v52 = vld [vmem:[%s0 + $0xa0] sm:$0xff]
  %v53 = vld [vmem:[%s0 + $0xa8] sm:$0xff]
  %v54 = vld [vmem:[%s0 + $0xb0] sm:$0xff]
  %v55 = vld [vmem:[%s0 + $0xb8] sm:$0xff]
  %v56 = vld [vmem:[%s0 + $0xc0] sm:$0xff]
  %v57 = vld [vmem:[%s0 + $0xc8] sm:$0xff]
  %v58 = vld [vmem:[%s0 + $0xd0] sm:$0xff]
  %v59 = vld [vmem:[%s0 + $0xd8] sm:$0xff]
  %v60 = vld [vmem:[%s0 + $0xe0] sm:$0xff]
  %v61 = vld [vmem:[%s0 + $0xe8] sm:$0xff]
  %v62 = vld [vmem:[%s0 + $0xf0] sm:$0xff]
  %v63 = vld [vmem:[%s0 + $0xf8] sm:$0xff]
  %v64 = vld [vmem:[%s0 + $0x100] sm:$0xff]
  %v65 = vld [vmem:[%s0 + $0x108] sm:$0xff]
  %v66 = vld [vmem:[%s0 + $0x110] sm:$0xff]
  %v67 = vld [vmem:[%s0 + $0x118] sm:$0xff]
  %v68 = vld [vmem:[%s4] sm:$0xff]
  %v69 = vld [vmem:[%s4 + $0x8] sm:$0xff]
  %v70 = vld [vmem:[%s4 + $0x10] sm:$0xff]
  %v71 = vld [vmem:[%s4 + $0x18] sm:$0xff]
  %73 = vset.pattern.permute.xlu0 0
  %74 = vperm.xlu0 %73, %v68
  %v75 = vpop.permute.xlu0 %74
  %78 = vset.pattern.permute.xlu0 0
  %79 = vperm.xlu0 %78, %v69
  %v80 = vpop.permute.xlu0 %79
  %83 = vset.pattern.permute.xlu0 0
  %84 = vperm.xlu0 %83, %v70
  %v85 = vpop.permute.xlu0 %84
  %88 = vset.pattern.permute.xlu0 0
  %89 = vperm.xlu0 %88, %v71
  %v90 = vpop.permute.xlu0 %89
  %vm92 = vcmask 261120
  %v94 = vsel %vm92, %v22, 0
  %v97 = vsel %vm92, %v25, 0
  %v100 = vsel %vm92, %v28, 0
  %v103 = vsel %vm92, %v31, 0
  %105 = vmatpush.msra.mxu0 %v47
  %106 = vmatpush.msra.mxu0 %v46
  %107 = vmatpush.msra.mxu0 %v45
  %108 = vmatpush.msra.mxu0 %v44
  %109 = vmatpush.msra.mxu0 %v43
  %110 = vmatpush.msra.mxu0 %v42
  %111 = vmatpush.msra.mxu0 %v41
  %112 = vmatpush.msra.mxu0 %v40
  %113 = vmatpush.msra.mxu0 %v39
  %114 = vmatpush.msra.mxu0 %v38
  %115 = vmatpush.msra.mxu0 %v37
  %116 = vmatpush.msra.mxu0 %v36
  %117 = vmatpush.msra.mxu0 %v35
  %118 = vmatpush.msra.mxu0 %v34
  %119 = vmatpush.msra.mxu0 %v33
  %120 = vmatpush.msra.mxu0 %v32
  %121 = vmatmul.f32.gmra.mxu0 %v20
  %v122 = vpop.f32.mrf.mxu0
  %v123 = vadd.f32 %v75, %v122
  %124 = vmatmul.f32.gmra.mxu0 %v23
  %v125 = vpop.f32.mrf.mxu0
  %v126 = vadd.f32 %v80, %v125
  %127 = vmatmul.f32.gmra.mxu0 %v26
  %v128 = vpop.f32.mrf.mxu0
  %v129 = vadd.f32 %v85, %v128
  %130 = vmatmul.f32.gmra.mxu0 %v29
  %v131 = vpop.f32.mrf.mxu0
  %v132 = vadd.f32 %v90, %v131
  %133 = vdwg.mxu0
  %134 = vmatpush.msra.mxu0 %v63
  %135 = vmatpush.msra.mxu0 %v62
  %136 = vmatpush.msra.mxu0 %v61
  %137 = vmatpush.msra.mxu0 %v60
  %138 = vmatpush.msra.mxu0 %v59
  %139 = vmatpush.msra.mxu0 %v58
  %140 = vmatpush.msra.mxu0 %v57
  %141 = vmatpush.msra.mxu0 %v56
  %142 = vmatpush.msra.mxu0 %v55
  %143 = vmatpush.msra.mxu0 %v54
  %144 = vmatpush.msra.mxu0 %v53
  %145 = vmatpush.msra.mxu0 %v52
  %146 = vmatpush.msra.mxu0 %v51
  %147 = vmatpush.msra.mxu0 %v50
  %148 = vmatpush.msra.mxu0 %v49
  %149 = vmatpush.msra.mxu0 %v48
  %150 = vmatmul.f32.gmra.mxu0 %v21
  %v151 = vpop.f32.mrf.mxu0
  %v152 = vadd.f32 %v123, %v151
  %153 = vmatmul.f32.gmra.mxu0 %v24
  %v154 = vpop.f32.mrf.mxu0
  %v155 = vadd.f32 %v126, %v154
  %156 = vmatmul.f32.gmra.mxu0 %v27
  %v157 = vpop.f32.mrf.mxu0
  %v158 = vadd.f32 %v129, %v157
  %159 = vmatmul.f32.gmra.mxu0 %v30
  %v160 = vpop.f32.mrf.mxu0
  %v161 = vadd.f32 %v132, %v160
  %162 = vdwg.mxu0
  %163 = vmatpush.msra.mxu0 0.0
  %164 = vmatpush.msra.mxu0 0.0
  %165 = vmatpush.msra.mxu0 0.0
  %166 = vmatpush.msra.mxu0 0.0
  %167 = vmatpush.msra.mxu0 0.0
  %168 = vmatpush.msra.mxu0 0.0
  %169 = vmatpush.msra.mxu0 0.0
  %170 = vmatpush.msra.mxu0 0.0
  %171 = vmatpush.msra.mxu0 0.0
  %172 = vmatpush.msra.mxu0 0.0
  %173 = vmatpush.msra.mxu0 0.0
  %174 = vmatpush.msra.mxu0 0.0
  %175 = vmatpush.msra.mxu0 %v67
  %176 = vmatpush.msra.mxu0 %v66
  %177 = vmatpush.msra.mxu0 %v65
  %178 = vmatpush.msra.mxu0 %v64
  %179 = vmatmul.f32.gmra.mxu0 %v94
  %v180 = vpop.f32.mrf.mxu0
  %v181 = vadd.f32 %v152, %v180
  %182 = vmatmul.f32.gmra.mxu0 %v97
  %v183 = vpop.f32.mrf.mxu0
  %v184 = vadd.f32 %v155, %v183
  %185 = vmatmul.f32.gmra.mxu0 %v100
  %v186 = vpop.f32.mrf.mxu0
  %v187 = vadd.f32 %v158, %v186
  %188 = vmatmul.f32.gmra.mxu0 %v103
  %v189 = vpop.f32.mrf.mxu0
  %v190 = vadd.f32 %v161, %v189
  %191 = vdwg.mxu0
  %v192 = vld [vmem:[%s3] sm:$0xff]
  %v193 = vld [vmem:[%s3 + $0x8] sm:$0xff]
  %v194 = vld [vmem:[%s3 + $0x10] sm:$0xff]
  %v195 = vld [vmem:[%s3 + $0x18] sm:$0xff]
  %v196 = vld [vmem:[%s1] sm:$0xff]
  %v197 = vld [vmem:[%s1 + $0x8] sm:$0xff]
  %vm198 = vcmask 130048
  %v200 = vsel %vm198, %v192, 0
  %v203 = vsel %vm198, %v193, 0
  %v206 = vsel %vm198, %v194, 0
  %v209 = vsel %vm198, %v195, 0
  %211 = vmatpush.msra.mxu0 0.0
  %212 = vmatpush.msra.mxu0 0.0
  %213 = vmatpush.msra.mxu0 0.0
  %214 = vmatpush.msra.mxu0 0.0
  %215 = vmatpush.msra.mxu0 0.0
  %216 = vmatpush.msra.mxu0 0.0
  %217 = vmatpush.msra.mxu0 0.0
  %218 = vmatpush.msra.mxu0 0.0
  %219 = vmatpush.msra.mxu0 0.0
  %220 = vmatpush.msra.mxu0 0.0
  %221 = vmatpush.msra.mxu0 0.0
  %222 = vmatpush.msra.mxu0 0.0
  %223 = vmatpush.msra.mxu0 0.0
  %224 = vmatpush.msra.mxu0 0.0
  %225 = vmatpush.msra.mxu0 %v197
  %226 = vmatpush.msra.mxu0 %v196
  %227 = vmatmul.f32.gmra.mxu0 %v200
  %v228 = vpop.f32.mrf.mxu0
  %v229 = vadd.f32 0.0, %v228
  %230 = vmatmul.f32.gmra.mxu0 %v203
  %v231 = vpop.f32.mrf.mxu0
  %v232 = vadd.f32 0.0, %v231
  %233 = vmatmul.f32.gmra.mxu0 %v206
  %v234 = vpop.f32.mrf.mxu0
  %v235 = vadd.f32 0.0, %v234
  %236 = vmatmul.f32.gmra.mxu0 %v209
  %v237 = vpop.f32.mrf.mxu0
  %v238 = vadd.f32 0.0, %v237
  %239 = vdwg.mxu0
  %v240 = vadd.f32 %v181, %v229
  %v241 = vadd.f32 %v184, %v232
  %v242 = vadd.f32 %v187, %v235
  %v243 = vadd.f32 %v190, %v238
  %vm244 = vcmask 64512
  %245 = vst.msk [vmem:[%s5] sm:$0xff] %vm244, %v240
  %246 = vst.msk [vmem:[%s5 + $0x8] sm:$0xff] %vm244, %v241
  %247 = vst.msk [vmem:[%s5 + $0x10] sm:$0xff] %vm244, %v242
  %248 = vst.msk [vmem:[%s5 + $0x18] sm:$0xff] %vm244, %v243
  // Predicated region
  $region22: #{discriminator_forward.14} parent=0 // pred_check
    _
  $region23: #{discriminator_forward.14} parent=0 // pred_check_branch
    %250 = sbr.rel (0) target = $region25
  $region24: #{discriminator_forward.14} parent=0 // pred_region
    _
  $region25: #{discriminator_forward.14} parent=0 // pred_fallthru
    _
  // Predicated region
  $region26: #{discriminator_forward.14} parent=0 // pred_check
    _
  $region27: #{discriminator_forward.14} parent=0 // pred_check_branch
    %252 = sbr.rel (0) target = $region29
  $region28: #{discriminator_forward.14} parent=0 // pred_region
    _
  $region29: #{discriminator_forward.14} parent=0 // pred_fallthru
    _

// kernel: squeeze.1
$region0: #{squeeze.1}
  %s0 = inlined_call_operand.vmem [shape: bf16[32,3,3], index: 0, kind: input, shape index: {}]
  %s1 = inlined_call_operand.vmem [shape: bf16[32,9], index: 1, kind: output, shape index: {}]
  $region1: #{squeeze.1} parent=0
    #allocation0 [shape = 'u8[8192]{0}', space=vmem, size = 0x2000, scoped, tag = 'scoped mem for output reshape']
    #allocation1 [shape = 'u8[12288]{0}', space=vmem, size = 0x3000, scoped, tag = 'scoped mem for input reshape']
    %s3 = ssub.s32 16, 1
    %s4 = scalar_lea.vmem %s0, 4
    %s5 = sshrl.u32 %s3, 1
    %s6 = sor.u32 %s3, %s5
    %s7 = sand.u32 %s6, 85
    %s8 = sshrl.u32 %s7, 1
    %s9 = sor.u32 %s7, %s8
    %s10 = sand.u32 51, %s9
    %s11 = sshrl.u32 %s10, 2
    %s12 = sor.u32 %s10, %s11
    %s13 = sand.u32 15, %s12
    %v14 = vld [vmem:[%s4] sm:%s13]
    %v15 = vunpack.c.l.bf16 %v14
    %v16 = vunpack.c.h.bf16 %v14
    %s17 = scalar_lea.vmem [#allocation1], 16
    %18 = vst [vmem:[%s17] sm:%s3] %v15
    %s19 = scalar_lea.vmem %s0, 2
    %s20 = sshrl.u32 %s3, 1
    %s21 = sor.u32 %s3, %s20
    %s22 = sand.u32 %s21, 85
    %s23 = sshrl.u32 %s22, 1
    %s24 = sor.u32 %s22, %s23
    %s25 = sand.u32 51, %s24
    %s26 = sshrl.u32 %s25, 2
    %s27 = sor.u32 %s25, %s26
    %s28 = sand.u32 15, %s27
    %v29 = vld [vmem:[%s19] sm:%s28]
    %v30 = vunpack.c.l.bf16 %v29
    %v31 = vunpack.c.h.bf16 %v29
    %s32 = scalar_lea.vmem [#allocation1], 8
    %33 = vst [vmem:[%s32] sm:%s3] %v30
    %s34 = sshrl.u32 %s3, 1
    %s35 = sor.u32 %s3, %s34
    %s36 = sand.u32 %s35, 85
    %s37 = sshrl.u32 %s36, 1
    %s38 = sor.u32 %s36, %s37
    %s39 = sand.u32 51, %s38
    %s40 = sshrl.u32 %s39, 2
    %s41 = sor.u32 %s39, %s40
    %s42 = sand.u32 15, %s41
    %v43 = vld [vmem:[%s0] sm:%s42]
    %v44 = vunpack.c.l.bf16 %v43
    %v45 = vunpack.c.h.bf16 %v43
    %46 = vst [vmem:[#allocation1] sm:%s3] %v44
    %v47 = vld [vmem:[#allocation1] sm:$0x7]
    %vm48 = vcmask 261120
    %49 = vst.msk [vmem:[#allocation0] sm:$0x7] %vm48, %v47
    %s50 = scalar_lea.vmem [#allocation1], 8
    %v51 = vld [vmem:[%s50] sm:$0x7]
    %vm52 = vcmask 261120
    %s53 = scalar_lea.vmem [#allocation0], 3
    %54 = vst.msk [vmem:[%s53] sm:$0x7] %vm52, %v51
    %s55 = scalar_lea.vmem [#allocation1], 16
    %v56 = vld [vmem:[%s55] sm:$0x7]
    %vm57 = vcmask 261120
    %s58 = scalar_lea.vmem [#allocation0], 6
    %59 = vst.msk [vmem:[%s58] sm:$0x7] %vm57, %v56
    %s61 = ssub.s32 256, 1
    %v62 = vld [vmem:[#allocation0] sm:%s61]
    %v63 = vpack.c.bf16 0.0, %v62
    %s65 = ssub.s32 16, 1
    %66 = vst [vmem:[%s1] sm:%s65] %v63
    %s67 = scalar_lea.vmem [#allocation0], 8
    %v68 = vld [vmem:[%s67] sm:%s61]
    %v69 = vpack.c.bf16 0.0, %v68
    %s71 = ssub.s32 16, 1
    %s72 = scalar_lea.vmem %s1, 4
    %73 = vst [vmem:[%s72] sm:%s71] %v69

// kernel: discriminator_forward.15
$region0: #{discriminator_forward.15}
  #allocation0 [shape = 'u32[]', space=smem, size = 0x4, offset = 0x4, fixed_abs, tag = 'smem constant byte address 0x4 - core index']
  #allocation1 [shape = 'u32[72,128]{1,0:T(1,128)}', space=vmem, size = 0x9000, scoped, tag = 'internal scratch']
  #allocation2 [shape = 'f32[1,1]{1,0:T(1,128)S(1)}', space=vmem, size = 0x200, scoped, tag = 'scoped memory for discriminator_forward.15']
  %s0 = inlined_call_operand.vmem [shape: f32[128,2], index: 0, kind: input, shape index: {}]
  %s1 = inlined_call_operand.vmem [shape: f32[2,2], index: 1, kind: input, shape index: {}]
  %s2 = inlined_call_operand.vmem [shape: f32[4,288,2], index: 2, kind: input, shape index: {}]
  %s3 = inlined_call_operand.vmem [shape: f32[32,4], index: 3, kind: input, shape index: {}]
  %s4 = inlined_call_operand.vmem [shape: f32[32,288], index: 4, kind: input, shape index: {}]
  %s5 = inlined_call_operand.vmem [shape: f32[32,1], index: 5, kind: input, shape index: {}]
  %s6 = inlined_call_operand.vmem [shape: f32[4,32,32], index: 6, kind: input, shape index: {}]
  %s7 = inlined_call_operand.vmem [shape: f32[32,1], index: 7, kind: input, shape index: {}]
  %s8 = inlined_call_operand.vmem [shape: f32[1,32], index: 8, kind: input, shape index: {}]
  %s9 = inlined_call_operand.<no memory space> [shape: f32[1,1], index: 9, kind: input, shape index: {}]
  %s10 = inlined_call_operand.hbm [shape: f32[1,2], index: 10, kind: output, shape index: {}]
  %s11 = sld [smem:[#allocation0]]
  $region50: #{discriminator_forward.15} parent=0
    _
  %s13 = ssub.s32 1, %s11
  %s14 = scalar_select 0, %s13, %s11
  %v15 = vstv %s9
  %16 = vst [vmem:[#allocation2] sm:$0x1] %v15
  $region1: #{discriminator_forward.15} parent=0
    #allocation3 [shape = 'u8[512]{0}', space=vmem, size = 0x400, scoped, tag = 'output window, operand 0, single buffered']
    #allocation4 [shape = 's32[1]{0}', space=sflag, size = 0x4, scoped, tag = 'scoped memory for discriminator_forward.15']
    %17 = vsyncpa [#allocation4], 0
    // Predicated region
    $region2: #{discriminator_forward.15} parent=1 // pred_check
      _
    $region3: #{discriminator_forward.15} parent=1 // pred_check_branch
      %19 = sbr.rel (0) target = $region5
    $region4: #{discriminator_forward.15} parent=1 // pred_region
      _
    $region5: #{discriminator_forward.15} parent=1 // pred_fallthru
      _
    // Predicated region
    $region6: #{discriminator_forward.15} parent=1 // pred_check
      _
    $region7: #{discriminator_forward.15} parent=1 // pred_check_branch
      %21 = sbr.rel (0) target = $region9
    $region8: #{discriminator_forward.15} parent=1 // pred_region
      _
    $region9: #{discriminator_forward.15} parent=1 // pred_fallthru
      _
    // Predicated region
    $region10: #{discriminator_forward.15} parent=1 // pred_check
      _
    $region11: #{discriminator_forward.15} parent=1 // pred_check_branch
      %23 = sbr.rel (0) target = $region13
    $region12: #{discriminator_forward.15} parent=1 // pred_region
      _
    $region13: #{discriminator_forward.15} parent=1 // pred_fallthru
      _
    // Predicated region
    $region14: #{discriminator_forward.15} parent=1 // pred_check
      _
    $region15: #{discriminator_forward.15} parent=1 // pred_check_branch
      %25 = sbr.rel (0) target = $region17
    $region16: #{discriminator_forward.15} parent=1 // pred_region
      _
    $region17: #{discriminator_forward.15} parent=1 // pred_fallthru
      _
    // Predicated region
    $region18: #{discriminator_forward.15} parent=1 // pred_check
      _
    $region19: #{discriminator_forward.15} parent=1 // pred_check_branch
      %27 = sbr.rel (0) target = $region21
    $region20: #{discriminator_forward.15} parent=1 // pred_region
      _
    $region21: #{discriminator_forward.15} parent=1 // pred_fallthru
      _
    // Predicated region
    $region22: #{discriminator_forward.15} parent=1 // pred_check
      _
    $region23: #{discriminator_forward.15} parent=1 // pred_check_branch
      %29 = sbr.rel (0) target = $region25
    $region24: #{discriminator_forward.15} parent=1 // pred_region
      _
    $region25: #{discriminator_forward.15} parent=1 // pred_fallthru
      _
    // Predicated region
    $region26: #{discriminator_forward.15} parent=1 // pred_check
      _
    $region27: #{discriminator_forward.15} parent=1 // pred_check_branch
      %31 = sbr.rel (0) target = $region29
    $region28: #{discriminator_forward.15} parent=1 // pred_region
      _
    $region29: #{discriminator_forward.15} parent=1 // pred_fallthru
      _
    // Predicated region
    $region30: #{discriminator_forward.15} parent=1 // pred_check
      _
    $region31: #{discriminator_forward.15} parent=1 // pred_check_branch
      %33 = sbr.rel (0) target = $region33
    $region32: #{discriminator_forward.15} parent=1 // pred_region
      _
    $region33: #{discriminator_forward.15} parent=1 // pred_fallthru
      _
    // Predicated region
    $region34: #{discriminator_forward.15} parent=1 // pred_check
      _
    $region35: #{discriminator_forward.15} parent=1 // pred_check_branch
      %35 = sbr.rel (0) target = $region37
    $region36: #{discriminator_forward.15} parent=1 // pred_region
      _
    $region37: #{discriminator_forward.15} parent=1 // pred_fallthru
      _
    // Predicated region
    $region38: #{discriminator_forward.15} parent=1 // pred_check
      _
    $region39: #{discriminator_forward.15} parent=1 // pred_check_branch
      %37 = sbr.rel (0) target = $region41
    $region40: #{discriminator_forward.15} parent=1 // pred_region
      _
    $region41: #{discriminator_forward.15} parent=1 // pred_fallthru
      _
    %v38 = vld [vmem:[%s0] sm:$0xff]
    %v39 = vld [vmem:[%s0 + $0x8] sm:$0xff]
    %v40 = vld [vmem:[%s0 + $0x10] sm:$0xff]
    %v41 = vld [vmem:[%s0 + $0x18] sm:$0xff]
    %v42 = vld [vmem:[%s0 + $0x20] sm:$0xff]
    %v43 = vld [vmem:[%s0 + $0x28] sm:$0xff]
    %v44 = vld [vmem:[%s0 + $0x30] sm:$0xff]
    %v45 = vld [vmem:[%s0 + $0x38] sm:$0xff]
    %v46 = vld [vmem:[%s0 + $0x40] sm:$0xff]
    %v47 = vld [vmem:[%s0 + $0x48] sm:$0xff]
    %v48 = vld [vmem:[%s0 + $0x50] sm:$0xff]
    %v49 = vld [vmem:[%s0 + $0x58] sm:$0xff]
    %v50 = vld [vmem:[%s0 + $0x60] sm:$0xff]
    %v51 = vld [vmem:[%s0 + $0x68] sm:$0xff]
    %v52 = vld [vmem:[%s0 + $0x70] sm:$0xff]
    %v53 = vld [vmem:[%s0 + $0x78] sm:$0xff]
    %v54 = vld [vmem:[%s1] sm:$0x3]
    %vm55 = vcmask 15360
    %v57 = vsel %vm55, %v38, 0
    %v60 = vsel %vm55, %v39, 0
    %v63 = vsel %vm55, %v40, 0
    %v66 = vsel %vm55, %v41, 0
    %v69 = vsel %vm55, %v42, 0
    %v72 = vsel %vm55, %v43, 0
    %v75 = vsel %vm55, %v44, 0
    %v78 = vsel %vm55, %v45, 0
    %v81 = vsel %vm55, %v46, 0
    %v84 = vsel %vm55, %v47, 0
    %v87 = vsel %vm55, %v48, 0
    %v90 = vsel %vm55, %v49, 0
    %v93 = vsel %vm55, %v50, 0
    %v96 = vsel %vm55, %v51, 0
    %v99 = vsel %vm55, %v52, 0
    %v102 = vsel %vm55, %v53, 0
    %vm104 = vcmask 1041408
    %v106 = vsel %vm104, %v54, 0
    %108 = vmatpush.msra.mxu0 0.0
    %109 = vmatpush.msra.mxu0 0.0
    %110 = vmatpush.msra.mxu0 0.0
    %111 = vmatpush.msra.mxu0 0.0
    %112 = vmatpush.msra.mxu0 0.0
    %113 = vmatpush.msra.mxu0 0.0
    %114 = vmatpush.msra.mxu0 0.0
    %115 = vmatpush.msra.mxu0 0.0
    %116 = vmatpush.msra.mxu0 0.0
    %117 = vmatpush.msra.mxu0 0.0
    %118 = vmatpush.msra.mxu0 0.0
    %119 = vmatpush.msra.mxu0 0.0
    %120 = vmatpush.msra.mxu0 0.0
    %121 = vmatpush.msra.mxu0 0.0
    %122 = vmatpush.msra.mxu0 0.0
    %123 = vmatpush.msra.mxu0 %v106
    %124 = vmatmul.f32.gmra.mxu0 %v57
    %v125 = vpop.f32.mrf.mxu0
    %v126 = vadd.f32 0.0, %v125
    %127 = vmatmul.f32.gmra.mxu0 %v60
    %v128 = vpop.f32.mrf.mxu0
    %v129 = vadd.f32 0.0, %v128
    %130 = vmatmul.f32.gmra.mxu0 %v63
    %v131 = vpop.f32.mrf.mxu0
    %v132 = vadd.f32 0.0, %v131
    %133 = vmatmul.f32.gmra.mxu0 %v66
    %v134 = vpop.f32.mrf.mxu0
    %v135 = vadd.f32 0.0, %v134
    %136 = vmatmul.f32.gmra.mxu0 %v69
    %v137 = vpop.f32.mrf.mxu0
    %v138 = vadd.f32 0.0, %v137
    %139 = vmatmul.f32.gmra.mxu0 %v72
    %v140 = vpop.f32.mrf.mxu0
    %v141 = vadd.f32 0.0, %v140
    %142 = vmatmul.f32.gmra.mxu0 %v75
    %v143 = vpop.f32.mrf.mxu0
    %v144 = vadd.f32 0.0, %v143
    %145 = vmatmul.f32.gmra.mxu0 %v78
    %v146 = vpop.f32.mrf.mxu0
    %v147 = vadd.f32 0.0, %v146
    %148 = vmatmul.f32.gmra.mxu0 %v81
    %v149 = vpop.f32.mrf.mxu0
    %v150 = vadd.f32 0.0, %v149
    %151 = vmatmul.f32.gmra.mxu0 %v84
    %v152 = vpop.f32.mrf.mxu0
    %v153 = vadd.f32 0.0, %v152
    %154 = vmatmul.f32.gmra.mxu0 %v87
    %v155 = vpop.f32.mrf.mxu0
    %v156 = vadd.f32 0.0, %v155
    %157 = vmatmul.f32.gmra.mxu0 %v90
    %v158 = vpop.f32.mrf.mxu0
    %v159 = vadd.f32 0.0, %v158
    %160 = vmatmul.f32.gmra.mxu0 %v93
    %v161 = vpop.f32.mrf.mxu0
    %v162 = vadd.f32 0.0, %v161
    %163 = vmatmul.f32.gmra.mxu0 %v96
    %v164 = vpop.f32.mrf.mxu0
    %v165 = vadd.f32 0.0, %v164
    %166 = vmatmul.f32.gmra.mxu0 %v99
    %v167 = vpop.f32.mrf.mxu0
    %v168 = vadd.f32 0.0, %v167
    %169 = vmatmul.f32.gmra.mxu0 %v102
    %v170 = vpop.f32.mrf.mxu0
    %v171 = vadd.f32 0.0, %v170
    %172 = vdwg.mxu0
    %v173 = vsub.f32 %v38, %v126
    %v174 = vsub.f32 %v39, %v129
    %v175 = vsub.f32 %v40, %v132
    %v176 = vsub.f32 %v41, %v135
    %v177 = vsub.f32 %v42, %v138
    %v178 = vsub.f32 %v43, %v141
    %v179 = vsub.f32 %v44, %v144
    %v180 = vsub.f32 %v45, %v147
    %v181 = vsub.f32 %v46, %v150
    %v182 = vsub.f32 %v47, %v153
    %v183 = vsub.f32 %v48, %v156
    %v184 = vsub.f32 %v49, %v159
    %v185 = vsub.f32 %v50, %v162
    %v186 = vsub.f32 %v51, %v165
    %v187 = vsub.f32 %v52, %v168
    %v188 = vsub.f32 %v53, %v171
    %v189 = vmul.f32 %v173, %v173
    %v190 = vmul.f32 %v174, %v174
    %v191 = vmul.f32 %v175, %v175
    %v192 = vmul.f32 %v176, %v176
    %v193 = vmul.f32 %v177, %v177
    %v194 = vmul.f32 %v178, %v178
    %v195 = vmul.f32 %v179, %v179
    %v196 = vmul.f32 %v180, %v180
    %v197 = vmul.f32 %v181, %v181
    %v198 = vmul.f32 %v182, %v182
    %v199 = vmul.f32 %v183, %v183
    %v200 = vmul.f32 %v184, %v184
    %v201 = vmul.f32 %v185, %v185
    %v202 = vmul.f32 %v186, %v186
    %v203 = vmul.f32 %v187, %v187
    %v204 = vmul.f32 %v188, %v188
    %v206 = vsel %vm55, %v189, 0
    %v209 = vsel %vm55, %v190, 0
    %v212 = vsel %vm55, %v191, 0
    %v215 = vsel %vm55, %v192, 0
    %v218 = vsel %vm55, %v193, 0
    %v221 = vsel %vm55, %v194, 0
    %v224 = vsel %vm55, %v195, 0
    %v227 = vsel %vm55, %v196, 0
    %v230 = vsel %vm55, %v197, 0
    %v233 = vsel %vm55, %v198, 0
    %v236 = vsel %vm55, %v199, 0
    %v239 = vsel %vm55, %v200, 0
    %v242 = vsel %vm55, %v201, 0
    %v245 = vsel %vm55, %v202, 0
    %v248 = vsel %vm55, %v203, 0
    %v251 = vsel %vm55, %v204, 0
    %253 = vmatpush.msra.mxu0 0.0
    %254 = vmatpush.msra.mxu0 0.0
    %255 = vmatpush.msra.mxu0 0.0
    %256 = vmatpush.msra.mxu0 0.0
    %257 = vmatpush.msra.mxu0 0.0
    %258 = vmatpush.msra.mxu0 0.0
    %259 = vmatpush.msra.mxu0 0.0
    %260 = vmatpush.msra.mxu0 0.0
    %261 = vmatpush.msra.mxu0 0.0
    %262 = vmatpush.msra.mxu0 0.0
    %263 = vmatpush.msra.mxu0 0.0
    %264 = vmatpush.msra.mxu0 0.0
    %265 = vmatpush.msra.mxu0 0.0
    %266 = vmatpush.msra.mxu0 0.0
    %267 = vmatpush.msra.mxu0 0.0
    %268 = vmatpush.msra.mxu0 %v106
    %269 = vmatmul.f32.gmra.mxu0 %v206
    %v270 = vpop.f32.mrf.mxu0
    %v271 = vadd.f32 0.0001, %v270
    %272 = vmatmul.f32.gmra.mxu0 %v209
    %v273 = vpop.f32.mrf.mxu0
    %v274 = vadd.f32 0.0001, %v273
    %275 = vmatmul.f32.gmra.mxu0 %v212
    %v276 = vpop.f32.mrf.mxu0
    %v277 = vadd.f32 0.0001, %v276
    %278 = vmatmul.f32.gmra.mxu0 %v215
    %v279 = vpop.f32.mrf.mxu0
    %v280 = vadd.f32 0.0001, %v279
    %281 = vmatmul.f32.gmra.mxu0 %v218
    %v282 = vpop.f32.mrf.mxu0
    %v283 = vadd.f32 0.0001, %v282
    %284 = vmatmul.f32.gmra.mxu0 %v221
    %v285 = vpop.f32.mrf.mxu0
    %v286 = vadd.f32 0.0001, %v285
    %287 = vmatmul.f32.gmra.mxu0 %v224
    %v288 = vpop.f32.mrf.mxu0
    %v289 = vadd.f32 0.0001, %v288
    %290 = vmatmul.f32.gmra.mxu0 %v227
    %v291 = vpop.f32.mrf.mxu0
    %v292 = vadd.f32 0.0001, %v291
    %293 = vmatmul.f32.gmra.mxu0 %v230
    %v294 = vpop.f32.mrf.mxu0
    %v295 = vadd.f32 0.0001, %v294
    %296 = vmatmul.f32.gmra.mxu0 %v233
    %v297 = vpop.f32.mrf.mxu0
    %v298 = vadd.f32 0.0001, %v297
    %299 = vmatmul.f32.gmra.mxu0 %v236
    %v300 = vpop.f32.mrf.mxu0
    %v301 = vadd.f32 0.0001, %v300
    %302 = vmatmul.f32.gmra.mxu0 %v239
    %v303 = vpop.f32.mrf.mxu0
    %v304 = vadd.f32 0.0001, %v303
    %305 = vmatmul.f32.gmra.mxu0 %v242
    %v306 = vpop.f32.mrf.mxu0
    %v307 = vadd.f32 0.0001, %v306
    %308 = vmatmul.f32.gmra.mxu0 %v245
    %v309 = vpop.f32.mrf.mxu0
    %v310 = vadd.f32 0.0001, %v309
    %311 = vmatmul.f32.gmra.mxu0 %v248
    %v312 = vpop.f32.mrf.mxu0
    %v313 = vadd.f32 0.0001, %v312
    %314 = vmatmul.f32.gmra.mxu0 %v251
    %v315 = vpop.f32.mrf.mxu0
    %v316 = vadd.f32 0.0001, %v315
    %317 = vdwg.mxu0
    %v318 = vrsqrt.pop %v271
    %v319 = vmul.f32 %v318, %v271
    %v320 = vmul.f32 %v319, %v318
    %v321 = vmul.f32 0.5, %v320
    %v322 = vsub.f32 1.5, %v321
    %v323 = vmul.f32 %v318, %v322
    %v324 = vmul.f32 %v271, %v323
    %vm325 = vcmp.eq.f32.partialorder %v271, inf
    %v326 = vsel %vm325, %v271, %v324
    %vm327 = vcmp.eq.f32.partialorder %v271, 0.0
    %v328 = vand.u32 %v271, 2147483648
    %v329 = vsel %vm327, %v328, %v326
    %v330 = vrsqrt.pop %v274
    %v331 = vmul.f32 %v330, %v274
    %v332 = vmul.f32 %v331, %v330
    %v333 = vmul.f32 0.5, %v332
    %v334 = vsub.f32 1.5, %v333
    %v335 = vmul.f32 %v330, %v334
    %v336 = vmul.f32 %v274, %v335
    %vm337 = vcmp.eq.f32.partialorder %v274, inf
    %v338 = vsel %vm337, %v274, %v336
    %vm339 = vcmp.eq.f32.partialorder %v274, 0.0
    %v340 = vand.u32 %v274, 2147483648
    %v341 = vsel %vm339, %v340, %v338
    %v342 = vrsqrt.pop %v277
    %v343 = vmul.f32 %v342, %v277
    %v344 = vmul.f32 %v343, %v342
    %v345 = vmul.f32 0.5, %v344
    %v346 = vsub.f32 1.5, %v345
    %v347 = vmul.f32 %v342, %v346
    %v348 = vmul.f32 %v277, %v347
    %vm349 = vcmp.eq.f32.partialorder %v277, inf
    %v350 = vsel %vm349, %v277, %v348
    %vm351 = vcmp.eq.f32.partialorder %v277, 0.0
    %v352 = vand.u32 %v277, 2147483648
    %v353 = vsel %vm351, %v352, %v350
    %v354 = vrsqrt.pop %v280
    %v355 = vmul.f32 %v354, %v280
    %v356 = vmul.f32 %v355, %v354
    %v357 = vmul.f32 0.5, %v356
    %v358 = vsub.f32 1.5, %v357
    %v359 = vmul.f32 %v354, %v358
    %v360 = vmul.f32 %v280, %v359
    %vm361 = vcmp.eq.f32.partialorder %v280, inf
    %v362 = vsel %vm361, %v280, %v360
    %vm363 = vcmp.eq.f32.partialorder %v280, 0.0
    %v364 = vand.u32 %v280, 2147483648
    %v365 = vsel %vm363, %v364, %v362
    %v366 = vrsqrt.pop %v283
    %v367 = vmul.f32 %v366, %v283
    %v368 = vmul.f32 %v367, %v366
    %v369 = vmul.f32 0.5, %v368
    %v370 = vsub.f32 1.5, %v369
    %v371 = vmul.f32 %v366, %v370
    %v372 = vmul.f32 %v283, %v371
    %vm373 = vcmp.eq.f32.partialorder %v283, inf
    %v374 = vsel %vm373, %v283, %v372
    %vm375 = vcmp.eq.f32.partialorder %v283, 0.0
    %v376 = vand.u32 %v283, 2147483648
    %v377 = vsel %vm375, %v376, %v374
    %v378 = vrsqrt.pop %v286
    %v379 = vmul.f32 %v378, %v286
    %v380 = vmul.f32 %v379, %v378
    %v381 = vmul.f32 0.5, %v380
    %v382 = vsub.f32 1.5, %v381
    %v383 = vmul.f32 %v378, %v382
    %v384 = vmul.f32 %v286, %v383
    %vm385 = vcmp.eq.f32.partialorder %v286, inf
    %v386 = vsel %vm385, %v286, %v384
    %vm387 = vcmp.eq.f32.partialorder %v286, 0.0
    %v388 = vand.u32 %v286, 2147483648
    %v389 = vsel %vm387, %v388, %v386
    %v390 = vrsqrt.pop %v289
    %v391 = vmul.f32 %v390, %v289
    %v392 = vmul.f32 %v391, %v390
    %v393 = vmul.f32 0.5, %v392
    %v394 = vsub.f32 1.5, %v393
    %v395 = vmul.f32 %v390, %v394
    %v396 = vmul.f32 %v289, %v395
    %vm397 = vcmp.eq.f32.partialorder %v289, inf
    %v398 = vsel %vm397, %v289, %v396
    %vm399 = vcmp.eq.f32.partialorder %v289, 0.0
    %v400 = vand.u32 %v289, 2147483648
    %v401 = vsel %vm399, %v400, %v398
    %v402 = vrsqrt.pop %v292
    %v403 = vmul.f32 %v402, %v292
    %v404 = vmul.f32 %v403, %v402
    %v405 = vmul.f32 0.5, %v404
    %v406 = vsub.f32 1.5, %v405
    %v407 = vmul.f32 %v402, %v406
    %v408 = vmul.f32 %v292, %v407
    %vm409 = vcmp.eq.f32.partialorder %v292, inf
    %v410 = vsel %vm409, %v292, %v408
    %vm411 = vcmp.eq.f32.partialorder %v292, 0.0
    %v412 = vand.u32 %v292, 2147483648
    %v413 = vsel %vm411, %v412, %v410
    %v414 = vrsqrt.pop %v295
    %v415 = vmul.f32 %v414, %v295
    %v416 = vmul.f32 %v415, %v414
    %v417 = vmul.f32 0.5, %v416
    %v418 = vsub.f32 1.5, %v417
    %v419 = vmul.f32 %v414, %v418
    %v420 = vmul.f32 %v295, %v419
    %vm421 = vcmp.eq.f32.partialorder %v295, inf
    %v422 = vsel %vm421, %v295, %v420
    %vm423 = vcmp.eq.f32.partialorder %v295, 0.0
    %v424 = vand.u32 %v295, 2147483648
    %v425 = vsel %vm423, %v424, %v422
    %v426 = vrsqrt.pop %v298
    %v427 = vmul.f32 %v426, %v298
    %v428 = vmul.f32 %v427, %v426
    %v429 = vmul.f32 0.5, %v428
    %v430 = vsub.f32 1.5, %v429
    %v431 = vmul.f32 %v426, %v430
    %v432 = vmul.f32 %v298, %v431
    %vm433 = vcmp.eq.f32.partialorder %v298, inf
    %v434 = vsel %vm433, %v298, %v432
    %vm435 = vcmp.eq.f32.partialorder %v298, 0.0
    %v436 = vand.u32 %v298, 2147483648
    %v437 = vsel %vm435, %v436, %v434
    %v438 = vrsqrt.pop %v301
    %v439 = vmul.f32 %v438, %v301
    %v440 = vmul.f32 %v439, %v438
    %v441 = vmul.f32 0.5, %v440
    %v442 = vsub.f32 1.5, %v441
    %v443 = vmul.f32 %v438, %v442
    %v444 = vmul.f32 %v301, %v443
    %vm445 = vcmp.eq.f32.partialorder %v301, inf
    %v446 = vsel %vm445, %v301, %v444
    %vm447 = vcmp.eq.f32.partialorder %v301, 0.0
    %v448 = vand.u32 %v301, 2147483648
    %v449 = vsel %vm447, %v448, %v446
    %v450 = vrsqrt.pop %v304
    %v451 = vmul.f32 %v450, %v304
    %v452 = vmul.f32 %v451, %v450
    %v453 = vmul.f32 0.5, %v452
    %v454 = vsub.f32 1.5, %v453
    %v455 = vmul.f32 %v450, %v454
    %v456 = vmul.f32 %v304, %v455
    %vm457 = vcmp.eq.f32.partialorder %v304, inf
    %v458 = vsel %vm457, %v304, %v456
    %vm459 = vcmp.eq.f32.partialorder %v304, 0.0
    %v460 = vand.u32 %v304, 2147483648
    %v461 = vsel %vm459, %v460, %v458
    %v462 = vrsqrt.pop %v307
    %v463 = vmul.f32 %v462, %v307
    %v464 = vmul.f32 %v463, %v462
    %v465 = vmul.f32 0.5, %v464
    %v466 = vsub.f32 1.5, %v465
    %v467 = vmul.f32 %v462, %v466
    %v468 = vmul.f32 %v307, %v467
    %vm469 = vcmp.eq.f32.partialorder %v307, inf
    %v470 = vsel %vm469, %v307, %v468
    %vm471 = vcmp.eq.f32.partialorder %v307, 0.0
    %v472 = vand.u32 %v307, 2147483648
    %v473 = vsel %vm471, %v472, %v470
    %v474 = vrsqrt.pop %v310
    %v475 = vmul.f32 %v474, %v310
    %v476 = vmul.f32 %v475, %v474
    %v477 = vmul.f32 0.5, %v476
    %v478 = vsub.f32 1.5, %v477
    %v479 = vmul.f32 %v474, %v478
    %v480 = vmul.f32 %v310, %v479
    %vm481 = vcmp.eq.f32.partialorder %v310, inf
    %v482 = vsel %vm481, %v310, %v480
    %vm483 = vcmp.eq.f32.partialorder %v310, 0.0
    %v484 = vand.u32 %v310, 2147483648
    %v485 = vsel %vm483, %v484, %v482
    %v486 = vrsqrt.pop %v313
    %v487 = vmul.f32 %v486, %v313
    %v488 = vmul.f32 %v487, %v486
    %v489 = vmul.f32 0.5, %v488
    %v490 = vsub.f32 1.5, %v489
    %v491 = vmul.f32 %v486, %v490
    %v492 = vmul.f32 %v313, %v491
    %vm493 = vcmp.eq.f32.partialorder %v313, inf
    %v494 = vsel %vm493, %v313, %v492
    %vm495 = vcmp.eq.f32.partialorder %v313, 0.0
    %v496 = vand.u32 %v313, 2147483648
    %v497 = vsel %vm495, %v496, %v494
    %v498 = vrsqrt.pop %v316
    %v499 = vmul.f32 %v498, %v316
    %v500 = vmul.f32 %v499, %v498
    %v501 = vmul.f32 0.5, %v500
    %v502 = vsub.f32 1.5, %v501
    %v503 = vmul.f32 %v498, %v502
    %v504 = vmul.f32 %v316, %v503
    %vm505 = vcmp.eq.f32.partialorder %v316, inf
    %v506 = vsel %vm505, %v316, %v504
    %vm507 = vcmp.eq.f32.partialorder %v316, 0.0
    %v508 = vand.u32 %v316, 2147483648
    %v509 = vsel %vm507, %v508, %v506
    %v510 = vsel %vm55, %v329, 0.0
    %v511 = vsel %vm55, %v341, 0.0
    %v512 = vadd.f32 %v510, %v511
    %v513 = vsel %vm55, %v353, 0.0
    %v514 = vadd.f32 %v512, %v513
    %v515 = vsel %vm55, %v365, 0.0
    %v516 = vadd.f32 %v514, %v515
    %v517 = vsel %vm55, %v377, 0.0
    %v518 = vadd.f32 %v516, %v517
    %v519 = vsel %vm55, %v389, 0.0
    %v520 = vadd.f32 %v518, %v519
    %v521 = vsel %vm55, %v401, 0.0
    %v522 = vadd.f32 %v520, %v521
    %v523 = vsel %vm55, %v413, 0.0
    %v524 = vadd.f32 %v522, %v523
    %v525 = vsel %vm55, %v425, 0.0
    %v526 = vadd.f32 %v524, %v525
    %v527 = vsel %vm55, %v437, 0.0
    %v528 = vadd.f32 %v526, %v527
    %v529 = vsel %vm55, %v449, 0.0
    %v530 = vadd.f32 %v528, %v529
    %v531 = vsel %vm55, %v461, 0.0
    %v532 = vadd.f32 %v530, %v531
    %v533 = vsel %vm55, %v473, 0.0
    %v534 = vadd.f32 %v532, %v533
    %v535 = vsel %vm55, %v485, 0.0
    %v536 = vadd.f32 %v534, %v535
    %v537 = vsel %vm55, %v497, 0.0
    %v538 = vadd.f32 %v536, %v537
    %v539 = vsel %vm55, %v509, 0.0
    %v540 = vadd.f32 %v538, %v539
    %v541 = vrot.slane %v540, 4
    %v542 = vadd.f32 %v540, %v541
    %v543 = vrot.slane %v542, 2
    %v544 = vadd.f32 %v542, %v543
    %v545 = vrot.slane %v544, 1
    %v546 = vadd.f32 %v544, %v545
    %v547 = vmul.f32 %v546, 0.0078125
    %v548 = vld [vmem:[%s4] sm:$0xff]
    %v549 = vld [vmem:[%s4 + $0x8] sm:$0xff]
    %v550 = vld [vmem:[%s4 + $0x10] sm:$0xff]
    %v551 = vld [vmem:[%s4 + $0x18] sm:$0xff]
    %v552 = vld [vmem:[%s4 + $0x20] sm:$0xff]
    %v553 = vld [vmem:[%s4 + $0x28] sm:$0xff]
    %v554 = vld [vmem:[%s4 + $0x30] sm:$0xff]
    %v555 = vld [vmem:[%s4 + $0x38] sm:$0xff]
    %v556 = vld [vmem:[%s4 + $0x40] sm:$0xff]
    %v557 = vld [vmem:[%s4 + $0x48] sm:$0xff]
    %v558 = vld [vmem:[%s4 + $0x50] sm:$0xff]
    %v559 = vld [vmem:[%s4 + $0x58] sm:$0xff]
    %v560 = vld [vmem:[%s2] sm:$0xff]
    %v561 = vld [vmem:[%s2 + $0x8] sm:$0xff]
    %v562 = vld [vmem:[%s2 + $0x10] sm:$0xff]
    %v563 = vld [vmem:[%s2 + $0x18] sm:$0xff]
    %v564 = vld [vmem:[%s2 + $0x20] sm:$0xff]
    %v565 = vld [vmem:[%s2 + $0x28] sm:$0xff]
    %v566 = vld [vmem:[%s2 + $0x30] sm:$0xff]
    %v567 = vld [vmem:[%s2 + $0x38] sm:$0xff]
    %v568 = vld [vmem:[%s2 + $0x40] sm:$0xff]
    %v569 = vld [vmem:[%s2 + $0x48] sm:$0xff]
    %v570 = vld [vmem:[%s2 + $0x50] sm:$0xff]
    %v571 = vld [vmem:[%s2 + $0x58] sm:$0xff]
    %v572 = vld [vmem:[%s2 + $0x60] sm:$0xff]
    %v573 = vld [vmem:[%s2 + $0x68] sm:$0xff]
    %v574 = vld [vmem:[%s2 + $0x70] sm:$0xff]
    %v575 = vld [vmem:[%s2 + $0x78] sm:$0xff]
    %v576 = vld [vmem:[%s2 + $0x80] sm:$0xff]
    %v577 = vld [vmem:[%s2 + $0x88] sm:$0xff]
    %v578 = vld [vmem:[%s2 + $0x90] sm:$0xff]
    %v579 = vld [vmem:[%s2 + $0x98] sm:$0xff]
    %v580 = vld [vmem:[%s2 + $0xa0] sm:$0xff]
    %v581 = vld [vmem:[%s2 + $0xa8] sm:$0xff]
    %v582 = vld [vmem:[%s2 + $0xb0] sm:$0xff]
    %v583 = vld [vmem:[%s2 + $0xb8] sm:$0xff]
    %v584 = vld [vmem:[%s2 + $0xc0] sm:$0xff]
    %v585 = vld [vmem:[%s2 + $0xc8] sm:$0xff]
    %v586 = vld [vmem:[%s2 + $0xd0] sm:$0xff]
    %v587 = vld [vmem:[%s2 + $0xd8] sm:$0xff]
    %v588 = vld [vmem:[%s2 + $0xe0] sm:$0xff]
    %v589 = vld [vmem:[%s2 + $0xe8] sm:$0xff]
    %v590 = vld [vmem:[%s2 + $0xf0] sm:$0xff]
    %v591 = vld [vmem:[%s2 + $0xf8] sm:$0xff]
    %v592 = vld [vmem:[%s2 + $0x100] sm:$0xff]
    %v593 = vld [vmem:[%s2 + $0x108] sm:$0xff]
    %v594 = vld [vmem:[%s2 + $0x110] sm:$0xff]
    %v595 = vld [vmem:[%s2 + $0x118] sm:$0xff]
    %v596 = vld [vmem:[%s3] sm:$0xff]
    %v597 = vld [vmem:[%s3 + $0x8] sm:$0xff]
    %v598 = vld [vmem:[%s3 + $0x10] sm:$0xff]
    %v599 = vld [vmem:[%s3 + $0x18] sm:$0xff]
    %601 = vset.pattern.permute.xlu0 0
    %602 = vperm.xlu0 %601, %v596
    %v603 = vpop.permute.xlu0 %602
    %606 = vset.pattern.permute.xlu0 0
    %607 = vperm.xlu0 %606, %v597
    %v608 = vpop.permute.xlu0 %607
    %611 = vset.pattern.permute.xlu0 0
    %612 = vperm.xlu0 %611, %v598
    %v613 = vpop.permute.xlu0 %612
    %616 = vset.pattern.permute.xlu0 0
    %617 = vperm.xlu0 %616, %v599
    %v618 = vpop.permute.xlu0 %617
    %v620 = vmul.f32 %v603, %v547
    %v621 = vmul.f32 %v608, %v547
    %v622 = vmul.f32 %v613, %v547
    %v623 = vmul.f32 %v618, %v547
    %vm624 = vcmask 261120
    %v626 = vsel %vm624, %v550, 0
    %v629 = vsel %vm624, %v553, 0
    %v632 = vsel %vm624, %v556, 0
    %v635 = vsel %vm624, %v559, 0
    %637 = vmatpush.msra.mxu0 %v575
    %638 = vmatpush.msra.mxu0 %v574
    %639 = vmatpush.msra.mxu0 %v573
    %640 = vmatpush.msra.mxu0 %v572
    %641 = vmatpush.msra.mxu0 %v571
    %642 = vmatpush.msra.mxu0 %v570
    %643 = vmatpush.msra.mxu0 %v569
    %644 = vmatpush.msra.mxu0 %v568
    %645 = vmatpush.msra.mxu0 %v567
    %646 = vmatpush.msra.mxu0 %v566
    %647 = vmatpush.msra.mxu0 %v565
    %648 = vmatpush.msra.mxu0 %v564
    %649 = vmatpush.msra.mxu0 %v563
    %650 = vmatpush.msra.mxu0 %v562
    %651 = vmatpush.msra.mxu0 %v561
    %652 = vmatpush.msra.mxu0 %v560
    %653 = vmatmul.f32.gmra.mxu0 %v548
    %v654 = vpop.f32.mrf.mxu0
    %v655 = vadd.f32 %v620, %v654
    %656 = vmatmul.f32.gmra.mxu0 %v551
    %v657 = vpop.f32.mrf.mxu0
    %v658 = vadd.f32 %v621, %v657
    %659 = vmatmul.f32.gmra.mxu0 %v554
    %v660 = vpop.f32.mrf.mxu0
    %v661 = vadd.f32 %v622, %v660
    %662 = vmatmul.f32.gmra.mxu0 %v557
    %v663 = vpop.f32.mrf.mxu0
    %v664 = vadd.f32 %v623, %v663
    %665 = vdwg.mxu0
    %666 = vmatpush.msra.mxu0 %v591
    %667 = vmatpush.msra.mxu0 %v590
    %668 = vmatpush.msra.mxu0 %v589
    %669 = vmatpush.msra.mxu0 %v588
    %670 = vmatpush.msra.mxu0 %v587
    %671 = vmatpush.msra.mxu0 %v586
    %672 = vmatpush.msra.mxu0 %v585
    %673 = vmatpush.msra.mxu0 %v584
    %674 = vmatpush.msra.mxu0 %v583
    %675 = vmatpush.msra.mxu0 %v582
    %676 = vmatpush.msra.mxu0 %v581
    %677 = vmatpush.msra.mxu0 %v580
    %678 = vmatpush.msra.mxu0 %v579
    %679 = vmatpush.msra.mxu0 %v578
    %680 = vmatpush.msra.mxu0 %v577
    %681 = vmatpush.msra.mxu0 %v576
    %682 = vmatmul.f32.gmra.mxu0 %v549
    %v683 = vpop.f32.mrf.mxu0
    %v684 = vadd.f32 %v655, %v683
    %685 = vmatmul.f32.gmra.mxu0 %v552
    %v686 = vpop.f32.mrf.mxu0
    %v687 = vadd.f32 %v658, %v686
    %688 = vmatmul.f32.gmra.mxu0 %v555
    %v689 = vpop.f32.mrf.mxu0
    %v690 = vadd.f32 %v661, %v689
    %691 = vmatmul.f32.gmra.mxu0 %v558
    %v692 = vpop.f32.mrf.mxu0
    %v693 = vadd.f32 %v664, %v692
    %694 = vdwg.mxu0
    %695 = vmatpush.msra.mxu0 0.0
    %696 = vmatpush.msra.mxu0 0.0
    %697 = vmatpush.msra.mxu0 0.0
    %698 = vmatpush.msra.mxu0 0.0
    %699 = vmatpush.msra.mxu0 0.0
    %700 = vmatpush.msra.mxu0 0.0
    %701 = vmatpush.msra.mxu0 0.0
    %702 = vmatpush.msra.mxu0 0.0
    %703 = vmatpush.msra.mxu0 0.0
    %704 = vmatpush.msra.mxu0 0.0
    %705 = vmatpush.msra.mxu0 0.0
    %706 = vmatpush.msra.mxu0 0.0
    %707 = vmatpush.msra.mxu0 %v595
    %708 = vmatpush.msra.mxu0 %v594
    %709 = vmatpush.msra.mxu0 %v593
    %710 = vmatpush.msra.mxu0 %v592
    %711 = vmatmul.f32.gmra.mxu0 %v626
    %v712 = vpop.f32.mrf.mxu0
    %v713 = vadd.f32 %v684, %v712
    %714 = vmatmul.f32.gmra.mxu0 %v629
    %v715 = vpop.f32.mrf.mxu0
    %v716 = vadd.f32 %v687, %v715
    %717 = vmatmul.f32.gmra.mxu0 %v632
    %v718 = vpop.f32.mrf.mxu0
    %v719 = vadd.f32 %v690, %v718
    %720 = vmatmul.f32.gmra.mxu0 %v635
    %v721 = vpop.f32.mrf.mxu0
    %v722 = vadd.f32 %v693, %v721
    %723 = vdwg.mxu0
    %v724 = vld [vmem:[%s5] sm:$0xff]
    %v725 = vld [vmem:[%s5 + $0x8] sm:$0xff]
    %v726 = vld [vmem:[%s5 + $0x10] sm:$0xff]
    %v727 = vld [vmem:[%s5 + $0x18] sm:$0xff]
    %729 = vset.pattern.permute.xlu0 0
    %730 = vperm.xlu0 %729, %v724
    %v731 = vpop.permute.xlu0 %730
    %734 = vset.pattern.permute.xlu0 0
    %735 = vperm.xlu0 %734, %v725
    %v736 = vpop.permute.xlu0 %735
    %739 = vset.pattern.permute.xlu0 0
    %740 = vperm.xlu0 %739, %v726
    %v741 = vpop.permute.xlu0 %740
    %744 = vset.pattern.permute.xlu0 0
    %745 = vperm.xlu0 %744, %v727
    %v746 = vpop.permute.xlu0 %745
    %v748 = vadd.f32 %v713, %v731
    %v749 = vadd.f32 %v716, %v736
    %v750 = vadd.f32 %v719, %v741
    %v751 = vadd.f32 %v722, %v746
    %vm752 = vcmp.ge.f32.partialorder %v748, 0.0
    %vm753 = vcmp.ge.f32.partialorder %v749, 0.0
    %vm754 = vcmp.ge.f32.partialorder %v750, 0.0
    %vm755 = vcmp.ge.f32.partialorder %v751, 0.0
    %v756 = vmul.f32 %v748, 0.2
    %v757 = vmul.f32 %v749, 0.2
    %v758 = vmul.f32 %v750, 0.2
    %v759 = vmul.f32 %v751, 0.2
    %v760 = vsel %vm752, %v748, %v756
    %v761 = vsel %vm753, %v749, %v757
    %v762 = vsel %vm754, %v750, %v758
    %v763 = vsel %vm755, %v751, %v759
    %v764 = vmul.f32 %v760, 1.4142135
    %v765 = vmul.f32 %v761, 1.4142135
    %v766 = vmul.f32 %v762, 1.4142135
    %v767 = vmul.f32 %v763, 1.4142135
    %v768 = vld [vmem:[%s6] sm:$0xff]
    %v769 = vld [vmem:[%s6 + $0x8] sm:$0xff]
    %v770 = vld [vmem:[%s6 + $0x10] sm:$0xff]
    %v771 = vld [vmem:[%s6 + $0x18] sm:$0xff]
    %s772 = scalar_lea.vmem %s2, 288
    %v773 = vld [vmem:[%s772] sm:$0xff]
    %v774 = vld [vmem:[%s772 + $0x8] sm:$0xff]
    %v775 = vld [vmem:[%s772 + $0x10] sm:$0xff]
    %v776 = vld [vmem:[%s772 + $0x18] sm:$0xff]
    %v777 = vld [vmem:[%s772 + $0x20] sm:$0xff]
    %v778 = vld [vmem:[%s772 + $0x28] sm:$0xff]
    %v779 = vld [vmem:[%s772 + $0x30] sm:$0xff]
    %v780 = vld [vmem:[%s772 + $0x38] sm:$0xff]
    %v781 = vld [vmem:[%s772 + $0x40] sm:$0xff]
    %v782 = vld [vmem:[%s772 + $0x48] sm:$0xff]
    %v783 = vld [vmem:[%s772 + $0x50] sm:$0xff]
    %v784 = vld [vmem:[%s772 + $0x58] sm:$0xff]
    %v785 = vld [vmem:[%s772 + $0x60] sm:$0xff]
    %v786 = vld [vmem:[%s772 + $0x68] sm:$0xff]
    %v787 = vld [vmem:[%s772 + $0x70] sm:$0xff]
    %v788 = vld [vmem:[%s772 + $0x78] sm:$0xff]
    %v789 = vld [vmem:[%s772 + $0x80] sm:$0xff]
    %v790 = vld [vmem:[%s772 + $0x88] sm:$0xff]
    %v791 = vld [vmem:[%s772 + $0x90] sm:$0xff]
    %v792 = vld [vmem:[%s772 + $0x98] sm:$0xff]
    %v793 = vld [vmem:[%s772 + $0xa0] sm:$0xff]
    %v794 = vld [vmem:[%s772 + $0xa8] sm:$0xff]
    %v795 = vld [vmem:[%s772 + $0xb0] sm:$0xff]
    %v796 = vld [vmem:[%s772 + $0xb8] sm:$0xff]
    %v797 = vld [vmem:[%s772 + $0xc0] sm:$0xff]
    %v798 = vld [vmem:[%s772 + $0xc8] sm:$0xff]
    %v799 = vld [vmem:[%s772 + $0xd0] sm:$0xff]
    %v800 = vld [vmem:[%s772 + $0xd8] sm:$0xff]
    %v801 = vld [vmem:[%s772 + $0xe0] sm:$0xff]
    %v802 = vld [vmem:[%s772 + $0xe8] sm:$0xff]
    %v803 = vld [vmem:[%s772 + $0xf0] sm:$0xff]
    %v804 = vld [vmem:[%s772 + $0xf8] sm:$0xff]
    %v805 = vld [vmem:[%s772 + $0x100] sm:$0xff]
    %v806 = vld [vmem:[%s772 + $0x108] sm:$0xff]
    %v807 = vld [vmem:[%s772 + $0x110] sm:$0xff]
    %v808 = vld [vmem:[%s772 + $0x118] sm:$0xff]
    %809 = vset.pattern.permute.xlu0 1
    %810 = vperm.xlu0 %809, %v596
    %v811 = vpop.permute.xlu0 %810
    %813 = vset.pattern.permute.xlu0 1
    %814 = vperm.xlu0 %813, %v597
    %v815 = vpop.permute.xlu0 %814
    %817 = vset.pattern.permute.xlu0 1
    %818 = vperm.xlu0 %817, %v598
    %v819 = vpop.permute.xlu0 %818
    %821 = vset.pattern.permute.xlu0 1
    %822 = vperm.xlu0 %821, %v599
    %v823 = vpop.permute.xlu0 %822
    %v825 = vmul.f32 %v811, %v547
    %v826 = vmul.f32 %v815, %v547
    %v827 = vmul.f32 %v819, %v547
    %v828 = vmul.f32 %v823, %v547
    %829 = vmatpush.msra.mxu0 %v788
    %830 = vmatpush.msra.mxu0 %v787
    %831 = vmatpush.msra.mxu0 %v786
    %832 = vmatpush.msra.mxu0 %v785
    %833 = vmatpush.msra.mxu0 %v784
    %834 = vmatpush.msra.mxu0 %v783
    %835 = vmatpush.msra.mxu0 %v782
    %836 = vmatpush.msra.mxu0 %v781
    %837 = vmatpush.msra.mxu0 %v780
    %838 = vmatpush.msra.mxu0 %v779
    %839 = vmatpush.msra.mxu0 %v778
    %840 = vmatpush.msra.mxu0 %v777
    %841 = vmatpush.msra.mxu0 %v776
    %842 = vmatpush.msra.mxu0 %v775
    %843 = vmatpush.msra.mxu0 %v774
    %844 = vmatpush.msra.mxu0 %v773
    %845 = vmatmul.f32.gmra.mxu0 %v548
    %v846 = vpop.f32.mrf.mxu0
    %v847 = vadd.f32 %v825, %v846
    %848 = vmatmul.f32.gmra.mxu0 %v551
    %v849 = vpop.f32.mrf.mxu0
    %v850 = vadd.f32 %v826, %v849
    %851 = vmatmul.f32.gmra.mxu0 %v554
    %v852 = vpop.f32.mrf.mxu0
    %v853 = vadd.f32 %v827, %v852
    %854 = vmatmul.f32.gmra.mxu0 %v557
    %v855 = vpop.f32.mrf.mxu0
    %v856 = vadd.f32 %v828, %v855
    %857 = vdwg.mxu0
    %858 = vmatpush.msra.mxu0 %v804
    %859 = vmatpush.msra.mxu0 %v803
    %860 = vmatpush.msra.mxu0 %v802
    %861 = vmatpush.msra.mxu0 %v801
    %862 = vmatpush.msra.mxu0 %v800
    %863 = vmatpush.msra.mxu0 %v799
    %864 = vmatpush.msra.mxu0 %v798
    %865 = vmatpush.msra.mxu0 %v797
    %866 = vmatpush.msra.mxu0 %v796
    %867 = vmatpush.msra.mxu0 %v795
    %868 = vmatpush.msra.mxu0 %v794
    %869 = vmatpush.msra.mxu0 %v793
    %870 = vmatpush.msra.mxu0 %v792
    %871 = vmatpush.msra.mxu0 %v791
    %872 = vmatpush.msra.mxu0 %v790
    %873 = vmatpush.msra.mxu0 %v789
    %874 = vmatmul.f32.gmra.mxu0 %v549
    %v875 = vpop.f32.mrf.mxu0
    %v876 = vadd.f32 %v847, %v875
    %877 = vmatmul.f32.gmra.mxu0 %v552
    %v878 = vpop.f32.mrf.mxu0
    %v879 = vadd.f32 %v850, %v878
    %880 = vmatmul.f32.gmra.mxu0 %v555
    %v881 = vpop.f32.mrf.mxu0
    %v882 = vadd.f32 %v853, %v881
    %883 = vmatmul.f32.gmra.mxu0 %v558
    %v884 = vpop.f32.mrf.mxu0
    %v885 = vadd.f32 %v856, %v884
    %886 = vdwg.mxu0
    %887 = vmatpush.msra.mxu0 0.0
    %888 = vmatpush.msra.mxu0 0.0
    %889 = vmatpush.msra.mxu0 0.0
    %890 = vmatpush.msra.mxu0 0.0
    %891 = vmatpush.msra.mxu0 0.0
    %892 = vmatpush.msra.mxu0 0.0
    %893 = vmatpush.msra.mxu0 0.0
    %894 = vmatpush.msra.mxu0 0.0
    %895 = vmatpush.msra.mxu0 0.0
    %896 = vmatpush.msra.mxu0 0.0
    %897 = vmatpush.msra.mxu0 0.0
    %898 = vmatpush.msra.mxu0 0.0
    %899 = vmatpush.msra.mxu0 %v808
    %900 = vmatpush.msra.mxu0 %v807
    %901 = vmatpush.msra.mxu0 %v806
    %902 = vmatpush.msra.mxu0 %v805
    %903 = vmatmul.f32.gmra.mxu0 %v626
    %v904 = vpop.f32.mrf.mxu0
    %v905 = vadd.f32 %v876, %v904
    %906 = vmatmul.f32.gmra.mxu0 %v629
    %v907 = vpop.f32.mrf.mxu0
    %v908 = vadd.f32 %v879, %v907
    %909 = vmatmul.f32.gmra.mxu0 %v632
    %v910 = vpop.f32.mrf.mxu0
    %v911 = vadd.f32 %v882, %v910
    %912 = vmatmul.f32.gmra.mxu0 %v635
    %v913 = vpop.f32.mrf.mxu0
    %v914 = vadd.f32 %v885, %v913
    %915 = vdwg.mxu0
    %v916 = vadd.f32 %v905, %v731
    %v917 = vadd.f32 %v908, %v736
    %v918 = vadd.f32 %v911, %v741
    %v919 = vadd.f32 %v914, %v746
    %vm920 = vcmp.ge.f32.partialorder %v916, 0.0
    %vm921 = vcmp.ge.f32.partialorder %v917, 0.0
    %vm922 = vcmp.ge.f32.partialorder %v918, 0.0
    %vm923 = vcmp.ge.f32.partialorder %v919, 0.0
    %v924 = vmul.f32 %v916, 0.2
    %v925 = vmul.f32 %v917, 0.2
    %v926 = vmul.f32 %v918, 0.2
    %v927 = vmul.f32 %v919, 0.2
    %v928 = vsel %vm920, %v916, %v924
    %v929 = vsel %vm921, %v917, %v925
    %v930 = vsel %vm922, %v918, %v926
    %v931 = vsel %vm923, %v919, %v927
    %v932 = vmul.f32 %v928, 1.4142135
    %v933 = vmul.f32 %v929, 1.4142135
    %v934 = vmul.f32 %v930, 1.4142135
    %v935 = vmul.f32 %v931, 1.4142135
    %s936 = scalar_lea.vmem %s6, 32
    %v937 = vld [vmem:[%s936] sm:$0xff]
    %v938 = vld [vmem:[%s936 + $0x8] sm:$0xff]
    %v939 = vld [vmem:[%s936 + $0x10] sm:$0xff]
    %v940 = vld [vmem:[%s936 + $0x18] sm:$0xff]
    %v942 = vsel %vm624, %v937, 0
    %v945 = vsel %vm624, %v938, 0
    %v948 = vsel %vm624, %v939, 0
    %v951 = vsel %vm624, %v940, 0
    %953 = vmatpush.msra.mxu0 0.0
    %954 = vmatpush.msra.mxu0 0.0
    %955 = vmatpush.msra.mxu0 0.0
    %956 = vmatpush.msra.mxu0 0.0
    %957 = vmatpush.msra.mxu0 0.0
    %958 = vmatpush.msra.mxu0 0.0
    %959 = vmatpush.msra.mxu0 0.0
    %960 = vmatpush.msra.mxu0 0.0
    %961 = vmatpush.msra.mxu0 0.0
    %962 = vmatpush.msra.mxu0 0.0
    %963 = vmatpush.msra.mxu0 0.0
    %964 = vmatpush.msra.mxu0 0.0
    %965 = vmatpush.msra.mxu0 %v935
    %966 = vmatpush.msra.mxu0 %v934
    %967 = vmatpush.msra.mxu0 %v933
    %968 = vmatpush.msra.mxu0 %v932
    %969 = vmatmul.f32.gmra.mxu0 %v942
    %v970 = vpop.f32.mrf.mxu0
    %v971 = vadd.f32 0.0, %v970
    %972 = vmatmul.f32.gmra.mxu0 %v945
    %v973 = vpop.f32.mrf.mxu0
    %v974 = vadd.f32 0.0, %v973
    %975 = vmatmul.f32.gmra.mxu0 %v948
    %v976 = vpop.f32.mrf.mxu0
    %v977 = vadd.f32 0.0, %v976
    %978 = vmatmul.f32.gmra.mxu0 %v951
    %v979 = vpop.f32.mrf.mxu0
    %v980 = vadd.f32 0.0, %v979
    %981 = vdwg.mxu0
    %v983 = vsel %vm624, %v768, 0
    %v986 = vsel %vm624, %v769, 0
    %v989 = vsel %vm624, %v770, 0
    %v992 = vsel %vm624, %v771, 0
    %994 = vmatpush.msra.mxu0 0.0
    %995 = vmatpush.msra.mxu0 0.0
    %996 = vmatpush.msra.mxu0 0.0
    %997 = vmatpush.msra.mxu0 0.0
    %998 = vmatpush.msra.mxu0 0.0
    %999 = vmatpush.msra.mxu0 0.0
    %1000 = vmatpush.msra.mxu0 0.0
    %1001 = vmatpush.msra.mxu0 0.0
    %1002 = vmatpush.msra.mxu0 0.0
    %1003 = vmatpush.msra.mxu0 0.0
    %1004 = vmatpush.msra.mxu0 0.0
    %1005 = vmatpush.msra.mxu0 0.0
    %1006 = vmatpush.msra.mxu0 %v767
    %1007 = vmatpush.msra.mxu0 %v766
    %1008 = vmatpush.msra.mxu0 %v765
    %1009 = vmatpush.msra.mxu0 %v764
    %1010 = vmatmul.f32.gmra.mxu0 %v983
    %v1011 = vpop.f32.mrf.mxu0
    %v1012 = vadd.f32 %v971, %v1011
    %1013 = vmatmul.f32.gmra.mxu0 %v986
    %v1014 = vpop.f32.mrf.mxu0
    %v1015 = vadd.f32 %v974, %v1014
    %1016 = vmatmul.f32.gmra.mxu0 %v989
    %v1017 = vpop.f32.mrf.mxu0
    %v1018 = vadd.f32 %v977, %v1017
    %1019 = vmatmul.f32.gmra.mxu0 %v992
    %v1020 = vpop.f32.mrf.mxu0
    %v1021 = vadd.f32 %v980, %v1020
    %1022 = vdwg.mxu0
    %s1023 = scalar_lea.vmem %s2, 576
    %v1024 = vld [vmem:[%s1023] sm:$0xff]
    %v1025 = vld [vmem:[%s1023 + $0x8] sm:$0xff]
    %v1026 = vld [vmem:[%s1023 + $0x10] sm:$0xff]
    %v1027 = vld [vmem:[%s1023 + $0x18] sm:$0xff]
    %v1028 = vld [vmem:[%s1023 + $0x20] sm:$0xff]
    %v1029 = vld [vmem:[%s1023 + $0x28] sm:$0xff]
    %v1030 = vld [vmem:[%s1023 + $0x30] sm:$0xff]
    %v1031 = vld [vmem:[%s1023 + $0x38] sm:$0xff]
    %v1032 = vld [vmem:[%s1023 + $0x40] sm:$0xff]
    %v1033 = vld [vmem:[%s1023 + $0x48] sm:$0xff]
    %v1034 = vld [vmem:[%s1023 + $0x50] sm:$0xff]
    %v1035 = vld [vmem:[%s1023 + $0x58] sm:$0xff]
    %v1036 = vld [vmem:[%s1023 + $0x60] sm:$0xff]
    %v1037 = vld [vmem:[%s1023 + $0x68] sm:$0xff]
    %v1038 = vld [vmem:[%s1023 + $0x70] sm:$0xff]
    %v1039 = vld [vmem:[%s1023 + $0x78] sm:$0xff]
    %v1040 = vld [vmem:[%s1023 + $0x80] sm:$0xff]
    %v1041 = vld [vmem:[%s1023 + $0x88] sm:$0xff]
    %v1042 = vld [vmem:[%s1023 + $0x90] sm:$0xff]
    %v1043 = vld [vmem:[%s1023 + $0x98] sm:$0xff]
    %v1044 = vld [vmem:[%s1023 + $0xa0] sm:$0xff]
    %v1045 = vld [vmem:[%s1023 + $0xa8] sm:$0xff]
    %v1046 = vld [vmem:[%s1023 + $0xb0] sm:$0xff]
    %v1047 = vld [vmem:[%s1023 + $0xb8] sm:$0xff]
    %v1048 = vld [vmem:[%s1023 + $0xc0] sm:$0xff]
    %v1049 = vld [vmem:[%s1023 + $0xc8] sm:$0xff]
    %v1050 = vld [vmem:[%s1023 + $0xd0] sm:$0xff]
    %v1051 = vld [vmem:[%s1023 + $0xd8] sm:$0xff]
    %v1052 = vld [vmem:[%s1023 + $0xe0] sm:$0xff]
    %v1053 = vld [vmem:[%s1023 + $0xe8] sm:$0xff]
    %v1054 = vld [vmem:[%s1023 + $0xf0] sm:$0xff]
    %v1055 = vld [vmem:[%s1023 + $0xf8] sm:$0xff]
    %v1056 = vld [vmem:[%s1023 + $0x100] sm:$0xff]
    %v1057 = vld [vmem:[%s1023 + $0x108] sm:$0xff]
    %v1058 = vld [vmem:[%s1023 + $0x110] sm:$0xff]
    %v1059 = vld [vmem:[%s1023 + $0x118] sm:$0xff]
    %1060 = vset.pattern.permute.xlu0 2
    %1061 = vperm.xlu0 %1060, %v596
    %v1062 = vpop.permute.xlu0 %1061
    %1064 = vset.pattern.permute.xlu0 2
    %1065 = vperm.xlu0 %1064, %v597
    %v1066 = vpop.permute.xlu0 %1065
    %1068 = vset.pattern.permute.xlu0 2
    %1069 = vperm.xlu0 %1068, %v598
    %v1070 = vpop.permute.xlu0 %1069
    %1072 = vset.pattern.permute.xlu0 2
    %1073 = vperm.xlu0 %1072, %v599
    %v1074 = vpop.permute.xlu0 %1073
    %v1076 = vmul.f32 %v1062, %v547
    %v1077 = vmul.f32 %v1066, %v547
    %v1078 = vmul.f32 %v1070, %v547
    %v1079 = vmul.f32 %v1074, %v547
    %1080 = vmatpush.msra.mxu0 %v1039
    %1081 = vmatpush.msra.mxu0 %v1038
    %1082 = vmatpush.msra.mxu0 %v1037
    %1083 = vmatpush.msra.mxu0 %v1036
    %1084 = vmatpush.msra.mxu0 %v1035
    %1085 = vmatpush.msra.mxu0 %v1034
    %1086 = vmatpush.msra.mxu0 %v1033
    %1087 = vmatpush.msra.mxu0 %v1032
    %1088 = vmatpush.msra.mxu0 %v1031
    %1089 = vmatpush.msra.mxu0 %v1030
    %1090 = vmatpush.msra.mxu0 %v1029
    %1091 = vmatpush.msra.mxu0 %v1028
    %1092 = vmatpush.msra.mxu0 %v1027
    %1093 = vmatpush.msra.mxu0 %v1026
    %1094 = vmatpush.msra.mxu0 %v1025
    %1095 = vmatpush.msra.mxu0 %v1024
    %1096 = vmatmul.f32.gmra.mxu0 %v548
    %v1097 = vpop.f32.mrf.mxu0
    %v1098 = vadd.f32 %v1076, %v1097
    %1099 = vmatmul.f32.gmra.mxu0 %v551
    %v1100 = vpop.f32.mrf.mxu0
    %v1101 = vadd.f32 %v1077, %v1100
    %1102 = vmatmul.f32.gmra.mxu0 %v554
    %v1103 = vpop.f32.mrf.mxu0
    %v1104 = vadd.f32 %v1078, %v1103
    %1105 = vmatmul.f32.gmra.mxu0 %v557
    %v1106 = vpop.f32.mrf.mxu0
    %v1107 = vadd.f32 %v1079, %v1106
    %1108 = vdwg.mxu0
    %1109 = vmatpush.msra.mxu0 %v1055
    %1110 = vmatpush.msra.mxu0 %v1054
    %1111 = vmatpush.msra.mxu0 %v1053
    %1112 = vmatpush.msra.mxu0 %v1052
    %1113 = vmatpush.msra.mxu0 %v1051
    %1114 = vmatpush.msra.mxu0 %v1050
    %1115 = vmatpush.msra.mxu0 %v1049
    %1116 = vmatpush.msra.mxu0 %v1048
    %1117 = vmatpush.msra.mxu0 %v1047
    %1118 = vmatpush.msra.mxu0 %v1046
    %1119 = vmatpush.msra.mxu0 %v1045
    %1120 = vmatpush.msra.mxu0 %v1044
    %1121 = vmatpush.msra.mxu0 %v1043
    %1122 = vmatpush.msra.mxu0 %v1042
    %1123 = vmatpush.msra.mxu0 %v1041
    %1124 = vmatpush.msra.mxu0 %v1040
    %1125 = vmatmul.f32.gmra.mxu0 %v549
    %v1126 = vpop.f32.mrf.mxu0
    %v1127 = vadd.f32 %v1098, %v1126
    %1128 = vmatmul.f32.gmra.mxu0 %v552
    %v1129 = vpop.f32.mrf.mxu0
    %v1130 = vadd.f32 %v1101, %v1129
    %1131 = vmatmul.f32.gmra.mxu0 %v555
    %v1132 = vpop.f32.mrf.mxu0
    %v1133 = vadd.f32 %v1104, %v1132
    %1134 = vmatmul.f32.gmra.mxu0 %v558
    %v1135 = vpop.f32.mrf.mxu0
    %v1136 = vadd.f32 %v1107, %v1135
    %1137 = vdwg.mxu0
    %1138 = vmatpush.msra.mxu0 0.0
    %1139 = vmatpush.msra.mxu0 0.0
    %1140 = vmatpush.msra.mxu0 0.0
    %1141 = vmatpush.msra.mxu0 0.0
    %1142 = vmatpush.msra.mxu0 0.0
    %1143 = vmatpush.msra.mxu0 0.0
    %1144 = vmatpush.msra.mxu0 0.0
    %1145 = vmatpush.msra.mxu0 0.0
    %1146 = vmatpush.msra.mxu0 0.0
    %1147 = vmatpush.msra.mxu0 0.0
    %1148 = vmatpush.msra.mxu0 0.0
    %1149 = vmatpush.msra.mxu0 0.0
    %1150 = vmatpush.msra.mxu0 %v1059
    %1151 = vmatpush.msra.mxu0 %v1058
    %1152 = vmatpush.msra.mxu0 %v1057
    %1153 = vmatpush.msra.mxu0 %v1056
    %1154 = vmatmul.f32.gmra.mxu0 %v626
    %v1155 = vpop.f32.mrf.mxu0
    %v1156 = vadd.f32 %v1127, %v1155
    %1157 = vmatmul.f32.gmra.mxu0 %v629
    %v1158 = vpop.f32.mrf.mxu0
    %v1159 = vadd.f32 %v1130, %v1158
    %1160 = vmatmul.f32.gmra.mxu0 %v632
    %v1161 = vpop.f32.mrf.mxu0
    %v1162 = vadd.f32 %v1133, %v1161
    %1163 = vmatmul.f32.gmra.mxu0 %v635
    %v1164 = vpop.f32.mrf.mxu0
    %v1165 = vadd.f32 %v1136, %v1164
    %1166 = vdwg.mxu0
    %v1167 = vadd.f32 %v1156, %v731
    %v1168 = vadd.f32 %v1159, %v736
    %v1169 = vadd.f32 %v1162, %v741
    %v1170 = vadd.f32 %v1165, %v746
    %vm1171 = vcmp.ge.f32.partialorder %v1167, 0.0
    %vm1172 = vcmp.ge.f32.partialorder %v1168, 0.0
    %vm1173 = vcmp.ge.f32.partialorder %v1169, 0.0
    %vm1174 = vcmp.ge.f32.partialorder %v1170, 0.0
    %v1175 = vmul.f32 %v1167, 0.2
    %v1176 = vmul.f32 %v1168, 0.2
    %v1177 = vmul.f32 %v1169, 0.2
    %v1178 = vmul.f32 %v1170, 0.2
    %v1179 = vsel %vm1171, %v1167, %v1175
    %v1180 = vsel %vm1172, %v1168, %v1176
    %v1181 = vsel %vm1173, %v1169, %v1177
    %v1182 = vsel %vm1174, %v1170, %v1178
    %v1183 = vmul.f32 %v1179, 1.4142135
    %v1184 = vmul.f32 %v1180, 1.4142135
    %v1185 = vmul.f32 %v1181, 1.4142135
    %v1186 = vmul.f32 %v1182, 1.4142135
    %s1187 = scalar_lea.vmem %s6, 64
    %v1188 = vld [vmem:[%s1187] sm:$0xff]
    %v1189 = vld [vmem:[%s1187 + $0x8] sm:$0xff]
    %v1190 = vld [vmem:[%s1187 + $0x10] sm:$0xff]
    %v1191 = vld [vmem:[%s1187 + $0x18] sm:$0xff]
    %v1193 = vsel %vm624, %v1188, 0
    %v1196 = vsel %vm624, %v1189, 0
    %v1199 = vsel %vm624, %v1190, 0
    %v1202 = vsel %vm624, %v1191, 0
    %1204 = vmatpush.msra.mxu0 0.0
    %1205 = vmatpush.msra.mxu0 0.0
    %1206 = vmatpush.msra.mxu0 0.0
    %1207 = vmatpush.msra.mxu0 0.0
    %1208 = vmatpush.msra.mxu0 0.0
    %1209 = vmatpush.msra.mxu0 0.0
    %1210 = vmatpush.msra.mxu0 0.0
    %1211 = vmatpush.msra.mxu0 0.0
    %1212 = vmatpush.msra.mxu0 0.0
    %1213 = vmatpush.msra.mxu0 0.0
    %1214 = vmatpush.msra.mxu0 0.0
    %1215 = vmatpush.msra.mxu0 0.0
    %1216 = vmatpush.msra.mxu0 %v1186
    %1217 = vmatpush.msra.mxu0 %v1185
    %1218 = vmatpush.msra.mxu0 %v1184
    %1219 = vmatpush.msra.mxu0 %v1183
    %1220 = vmatmul.f32.gmra.mxu0 %v1193
    %v1221 = vpop.f32.mrf.mxu0
    %v1222 = vadd.f32 0.0, %v1221
    %1223 = vmatmul.f32.gmra.mxu0 %v1196
    %v1224 = vpop.f32.mrf.mxu0
    %v1225 = vadd.f32 0.0, %v1224
    %1226 = vmatmul.f32.gmra.mxu0 %v1199
    %v1227 = vpop.f32.mrf.mxu0
    %v1228 = vadd.f32 0.0, %v1227
    %1229 = vmatmul.f32.gmra.mxu0 %v1202
    %v1230 = vpop.f32.mrf.mxu0
    %v1231 = vadd.f32 0.0, %v1230
    %1232 = vdwg.mxu0
    %v1233 = vadd.f32 %v1012, %v1222
    %v1234 = vadd.f32 %v1015, %v1225
    %v1235 = vadd.f32 %v1018, %v1228
    %v1236 = vadd.f32 %v1021, %v1231
    %s1237 = scalar_lea.vmem %s2, 864
    %v1238 = vld [vmem:[%s1237] sm:$0xff]
    %v1239 = vld [vmem:[%s1237 + $0x8] sm:$0xff]
    %v1240 = vld [vmem:[%s1237 + $0x10] sm:$0xff]
    %v1241 = vld [vmem:[%s1237 + $0x18] sm:$0xff]
    %v1242 = vld [vmem:[%s1237 + $0x20] sm:$0xff]
    %v1243 = vld [vmem:[%s1237 + $0x28] sm:$0xff]
    %v1244 = vld [vmem:[%s1237 + $0x30] sm:$0xff]
    %v1245 = vld [vmem:[%s1237 + $0x38] sm:$0xff]
    %v1246 = vld [vmem:[%s1237 + $0x40] sm:$0xff]
    %v1247 = vld [vmem:[%s1237 + $0x48] sm:$0xff]
    %v1248 = vld [vmem:[%s1237 + $0x50] sm:$0xff]
    %v1249 = vld [vmem:[%s1237 + $0x58] sm:$0xff]
    %v1250 = vld [vmem:[%s1237 + $0x60] sm:$0xff]
    %v1251 = vld [vmem:[%s1237 + $0x68] sm:$0xff]
    %v1252 = vld [vmem:[%s1237 + $0x70] sm:$0xff]
    %v1253 = vld [vmem:[%s1237 + $0x78] sm:$0xff]
    %v1254 = vld [vmem:[%s1237 + $0x80] sm:$0xff]
    %v1255 = vld [vmem:[%s1237 + $0x88] sm:$0xff]
    %v1256 = vld [vmem:[%s1237 + $0x90] sm:$0xff]
    %v1257 = vld [vmem:[%s1237 + $0x98] sm:$0xff]
    %v1258 = vld [vmem:[%s1237 + $0xa0] sm:$0xff]
    %v1259 = vld [vmem:[%s1237 + $0xa8] sm:$0xff]
    %v1260 = vld [vmem:[%s1237 + $0xb0] sm:$0xff]
    %v1261 = vld [vmem:[%s1237 + $0xb8] sm:$0xff]
    %v1262 = vld [vmem:[%s1237 + $0xc0] sm:$0xff]
    %v1263 = vld [vmem:[%s1237 + $0xc8] sm:$0xff]
    %v1264 = vld [vmem:[%s1237 + $0xd0] sm:$0xff]
    %v1265 = vld [vmem:[%s1237 + $0xd8] sm:$0xff]
    %v1266 = vld [vmem:[%s1237 + $0xe0] sm:$0xff]
    %v1267 = vld [vmem:[%s1237 + $0xe8] sm:$0xff]
    %v1268 = vld [vmem:[%s1237 + $0xf0] sm:$0xff]
    %v1269 = vld [vmem:[%s1237 + $0xf8] sm:$0xff]
    %v1270 = vld [vmem:[%s1237 + $0x100] sm:$0xff]
    %v1271 = vld [vmem:[%s1237 + $0x108] sm:$0xff]
    %v1272 = vld [vmem:[%s1237 + $0x110] sm:$0xff]
    %v1273 = vld [vmem:[%s1237 + $0x118] sm:$0xff]
    %1274 = vset.pattern.permute.xlu0 3
    %1275 = vperm.xlu0 %1274, %v596
    %v1276 = vpop.permute.xlu0 %1275
    %1278 = vset.pattern.permute.xlu0 3
    %1279 = vperm.xlu0 %1278, %v597
    %v1280 = vpop.permute.xlu0 %1279
    %1282 = vset.pattern.permute.xlu0 3
    %1283 = vperm.xlu0 %1282, %v598
    %v1284 = vpop.permute.xlu0 %1283
    %1286 = vset.pattern.permute.xlu0 3
    %1287 = vperm.xlu0 %1286, %v599
    %v1288 = vpop.permute.xlu0 %1287
    %v1290 = vmul.f32 %v1276, %v547
    %v1291 = vmul.f32 %v1280, %v547
    %v1292 = vmul.f32 %v1284, %v547
    %v1293 = vmul.f32 %v1288, %v547
    %1294 = vmatpush.msra.mxu0 %v1253
    %1295 = vmatpush.msra.mxu0 %v1252
    %1296 = vmatpush.msra.mxu0 %v1251
    %1297 = vmatpush.msra.mxu0 %v1250
    %1298 = vmatpush.msra.mxu0 %v1249
    %1299 = vmatpush.msra.mxu0 %v1248
    %1300 = vmatpush.msra.mxu0 %v1247
    %1301 = vmatpush.msra.mxu0 %v1246
    %1302 = vmatpush.msra.mxu0 %v1245
    %1303 = vmatpush.msra.mxu0 %v1244
    %1304 = vmatpush.msra.mxu0 %v1243
    %1305 = vmatpush.msra.mxu0 %v1242
    %1306 = vmatpush.msra.mxu0 %v1241
    %1307 = vmatpush.msra.mxu0 %v1240
    %1308 = vmatpush.msra.mxu0 %v1239
    %1309 = vmatpush.msra.mxu0 %v1238
    %1310 = vmatmul.f32.gmra.mxu0 %v548
    %v1311 = vpop.f32.mrf.mxu0
    %v1312 = vadd.f32 %v1290, %v1311
    %1313 = vmatmul.f32.gmra.mxu0 %v551
    %v1314 = vpop.f32.mrf.mxu0
    %v1315 = vadd.f32 %v1291, %v1314
    %1316 = vmatmul.f32.gmra.mxu0 %v554
    %v1317 = vpop.f32.mrf.mxu0
    %v1318 = vadd.f32 %v1292, %v1317
    %1319 = vmatmul.f32.gmra.mxu0 %v557
    %v1320 = vpop.f32.mrf.mxu0
    %v1321 = vadd.f32 %v1293, %v1320
    %1322 = vdwg.mxu0
    %1323 = vmatpush.msra.mxu0 %v1269
    %1324 = vmatpush.msra.mxu0 %v1268
    %1325 = vmatpush.msra.mxu0 %v1267
    %1326 = vmatpush.msra.mxu0 %v1266
    %1327 = vmatpush.msra.mxu0 %v1265
    %1328 = vmatpush.msra.mxu0 %v1264
    %1329 = vmatpush.msra.mxu0 %v1263
    %1330 = vmatpush.msra.mxu0 %v1262
    %1331 = vmatpush.msra.mxu0 %v1261
    %1332 = vmatpush.msra.mxu0 %v1260
    %1333 = vmatpush.msra.mxu0 %v1259
    %1334 = vmatpush.msra.mxu0 %v1258
    %1335 = vmatpush.msra.mxu0 %v1257
    %1336 = vmatpush.msra.mxu0 %v1256
    %1337 = vmatpush.msra.mxu0 %v1255
    %1338 = vmatpush.msra.mxu0 %v1254
    %1339 = vmatmul.f32.gmra.mxu0 %v549
    %v1340 = vpop.f32.mrf.mxu0
    %v1341 = vadd.f32 %v1312, %v1340
    %1342 = vmatmul.f32.gmra.mxu0 %v552
    %v1343 = vpop.f32.mrf.mxu0
    %v1344 = vadd.f32 %v1315, %v1343
    %1345 = vmatmul.f32.gmra.mxu0 %v555
    %v1346 = vpop.f32.mrf.mxu0
    %v1347 = vadd.f32 %v1318, %v1346
    %1348 = vmatmul.f32.gmra.mxu0 %v558
    %v1349 = vpop.f32.mrf.mxu0
    %v1350 = vadd.f32 %v1321, %v1349
    %1351 = vdwg.mxu0
    %1352 = vmatpush.msra.mxu0 0.0
    %1353 = vmatpush.msra.mxu0 0.0
    %1354 = vmatpush.msra.mxu0 0.0
    %1355 = vmatpush.msra.mxu0 0.0
    %1356 = vmatpush.msra.mxu0 0.0
    %1357 = vmatpush.msra.mxu0 0.0
    %1358 = vmatpush.msra.mxu0 0.0
    %1359 = vmatpush.msra.mxu0 0.0
    %1360 = vmatpush.msra.mxu0 0.0
    %1361 = vmatpush.msra.mxu0 0.0
    %1362 = vmatpush.msra.mxu0 0.0
    %1363 = vmatpush.msra.mxu0 0.0
    %1364 = vmatpush.msra.mxu0 %v1273
    %1365 = vmatpush.msra.mxu0 %v1272
    %1366 = vmatpush.msra.mxu0 %v1271
    %1367 = vmatpush.msra.mxu0 %v1270
    %1368 = vmatmul.f32.gmra.mxu0 %v626
    %v1369 = vpop.f32.mrf.mxu0
    %v1370 = vadd.f32 %v1341, %v1369
    %1371 = vmatmul.f32.gmra.mxu0 %v629
    %v1372 = vpop.f32.mrf.mxu0
    %v1373 = vadd.f32 %v1344, %v1372
    %1374 = vmatmul.f32.gmra.mxu0 %v632
    %v1375 = vpop.f32.mrf.mxu0
    %v1376 = vadd.f32 %v1347, %v1375
    %1377 = vmatmul.f32.gmra.mxu0 %v635
    %v1378 = vpop.f32.mrf.mxu0
    %v1379 = vadd.f32 %v1350, %v1378
    %1380 = vdwg.mxu0
    %v1381 = vadd.f32 %v1370, %v731
    %v1382 = vadd.f32 %v1373, %v736
    %v1383 = vadd.f32 %v1376, %v741
    %v1384 = vadd.f32 %v1379, %v746
    %vm1385 = vcmp.ge.f32.partialorder %v1381, 0.0
    %vm1386 = vcmp.ge.f32.partialorder %v1382, 0.0
    %vm1387 = vcmp.ge.f32.partialorder %v1383, 0.0
    %vm1388 = vcmp.ge.f32.partialorder %v1384, 0.0
    %v1389 = vmul.f32 %v1381, 0.2
    %v1390 = vmul.f32 %v1382, 0.2
    %v1391 = vmul.f32 %v1383, 0.2
    %v1392 = vmul.f32 %v1384, 0.2
    %v1393 = vsel %vm1385, %v1381, %v1389
    %v1394 = vsel %vm1386, %v1382, %v1390
    %v1395 = vsel %vm1387, %v1383, %v1391
    %v1396 = vsel %vm1388, %v1384, %v1392
    %v1397 = vmul.f32 %v1393, 1.4142135
    %v1398 = vmul.f32 %v1394, 1.4142135
    %v1399 = vmul.f32 %v1395, 1.4142135
    %v1400 = vmul.f32 %v1396, 1.4142135
    %s1401 = scalar_lea.vmem %s6, 96
    %v1402 = vld [vmem:[%s1401] sm:$0xff]
    %v1403 = vld [vmem:[%s1401 + $0x8] sm:$0xff]
    %v1404 = vld [vmem:[%s1401 + $0x10] sm:$0xff]
    %v1405 = vld [vmem:[%s1401 + $0x18] sm:$0xff]
    %v1407 = vsel %vm624, %v1402, 0
    %v1410 = vsel %vm624, %v1403, 0
    %v1413 = vsel %vm624, %v1404, 0
    %v1416 = vsel %vm624, %v1405, 0
    %1418 = vmatpush.msra.mxu0 0.0
    %1419 = vmatpush.msra.mxu0 0.0
    %1420 = vmatpush.msra.mxu0 0.0
    %1421 = vmatpush.msra.mxu0 0.0
    %1422 = vmatpush.msra.mxu0 0.0
    %1423 = vmatpush.msra.mxu0 0.0
    %1424 = vmatpush.msra.mxu0 0.0
    %1425 = vmatpush.msra.mxu0 0.0
    %1426 = vmatpush.msra.mxu0 0.0
    %1427 = vmatpush.msra.mxu0 0.0
    %1428 = vmatpush.msra.mxu0 0.0
    %1429 = vmatpush.msra.mxu0 0.0
    %1430 = vmatpush.msra.mxu0 %v1400
    %1431 = vmatpush.msra.mxu0 %v1399
    %1432 = vmatpush.msra.mxu0 %v1398
    %1433 = vmatpush.msra.mxu0 %v1397
    %1434 = vmatmul.f32.gmra.mxu0 %v1407
    %v1435 = vpop.f32.mrf.mxu0
    %v1436 = vadd.f32 0.0, %v1435
    %1437 = vmatmul.f32.gmra.mxu0 %v1410
    %v1438 = vpop.f32.mrf.mxu0
    %v1439 = vadd.f32 0.0, %v1438
    %1440 = vmatmul.f32.gmra.mxu0 %v1413
    %v1441 = vpop.f32.mrf.mxu0
    %v1442 = vadd.f32 0.0, %v1441
    %1443 = vmatmul.f32.gmra.mxu0 %v1416
    %v1444 = vpop.f32.mrf.mxu0
    %v1445 = vadd.f32 0.0, %v1444
    %1446 = vdwg.mxu0
    %v1447 = vadd.f32 %v1233, %v1436
    %v1448 = vadd.f32 %v1234, %v1439
    %v1449 = vadd.f32 %v1235, %v1442
    %v1450 = vadd.f32 %v1236, %v1445
    %v1451 = vld [vmem:[%s7] sm:$0xff]
    %v1452 = vld [vmem:[%s7 + $0x8] sm:$0xff]
    %v1453 = vld [vmem:[%s7 + $0x10] sm:$0xff]
    %v1454 = vld [vmem:[%s7 + $0x18] sm:$0xff]
    %1456 = vset.pattern.permute.xlu0 0
    %1457 = vperm.xlu0 %1456, %v1451
    %v1458 = vpop.permute.xlu0 %1457
    %1461 = vset.pattern.permute.xlu0 0
    %1462 = vperm.xlu0 %1461, %v1452
    %v1463 = vpop.permute.xlu0 %1462
    %1466 = vset.pattern.permute.xlu0 0
    %1467 = vperm.xlu0 %1466, %v1453
    %v1468 = vpop.permute.xlu0 %1467
    %1471 = vset.pattern.permute.xlu0 0
    %1472 = vperm.xlu0 %1471, %v1454
    %v1473 = vpop.permute.xlu0 %1472
    %v1475 = vadd.f32 %v1447, %v1458
    %v1476 = vadd.f32 %v1448, %v1463
    %v1477 = vadd.f32 %v1449, %v1468
    %v1478 = vadd.f32 %v1450, %v1473
    %vm1479 = vcmp.ge.f32.partialorder %v1475, 0.0
    %vm1480 = vcmp.ge.f32.partialorder %v1476, 0.0
    %vm1481 = vcmp.ge.f32.partialorder %v1477, 0.0
    %vm1482 = vcmp.ge.f32.partialorder %v1478, 0.0
    %v1483 = vmul.f32 %v1475, 0.2
    %v1484 = vmul.f32 %v1476, 0.2
    %v1485 = vmul.f32 %v1477, 0.2
    %v1486 = vmul.f32 %v1478, 0.2
    %v1487 = vsel %vm1479, %v1475, %v1483
    %v1488 = vsel %vm1480, %v1476, %v1484
    %v1489 = vsel %vm1481, %v1477, %v1485
    %v1490 = vsel %vm1482, %v1478, %v1486
    %v1491 = vmul.f32 %v1487, 1.4142135
    %v1492 = vmul.f32 %v1488, 1.4142135
    %v1493 = vmul.f32 %v1489, 1.4142135
    %v1494 = vmul.f32 %v1490, 1.4142135
    %v1495 = vld [vmem:[%s8] sm:$0x1]
    %v1496 = vld [vmem:[#allocation2] sm:$0x1]
    %1498 = vset.pattern.permute.xlu0 0
    %1499 = vperm.xlu0 %1498, %v1496
    %v1500 = vpop.permute.xlu0 %1499
    %v1502 = vperm.slane %v1500, 0
    %v1504 = vsel %vm624, %v1495, 0
    %1506 = vmatpush.msra.mxu0 0.0
    %1507 = vmatpush.msra.mxu0 0.0
    %1508 = vmatpush.msra.mxu0 0.0
    %1509 = vmatpush.msra.mxu0 0.0
    %1510 = vmatpush.msra.mxu0 0.0
    %1511 = vmatpush.msra.mxu0 0.0
    %1512 = vmatpush.msra.mxu0 0.0
    %1513 = vmatpush.msra.mxu0 0.0
    %1514 = vmatpush.msra.mxu0 0.0
    %1515 = vmatpush.msra.mxu0 0.0
    %1516 = vmatpush.msra.mxu0 0.0
    %1517 = vmatpush.msra.mxu0 0.0
    %1518 = vmatpush.msra.mxu0 %v1494
    %1519 = vmatpush.msra.mxu0 %v1493
    %1520 = vmatpush.msra.mxu0 %v1492
    %1521 = vmatpush.msra.mxu0 %v1491
    %1522 = vmatmul.f32.gmra.mxu0 %v1504
    %v1523 = vpop.f32.mrf.mxu0
    %v1524 = vadd.f32 %v1502, %v1523
    %1525 = vdwg.mxu0
    %vm1526 = vcmask 8192
    %1527 = vst.msk [vmem:[#allocation3] sm:$0x1] %vm1526, %v1524
    // Predicated region
    $region42: #{discriminator_forward.15} parent=1 // pred_check
      _
    $region43: #{discriminator_forward.15} parent=1 // pred_check_branch
      %1529 = sbr.rel (0) target = $region45
    $region44: #{discriminator_forward.15} parent=1 // pred_region
      %1531 = vsyncadd [#allocation4], 0
      %s1533 = sshll.u32 [#allocation3], 4
      %s1534 = int_to_ptr.vmem [resolvable:$true] %s1533
      %s1535 = sshll.u32 %s10, 4
      %s1536 = int_to_ptr.hbm [resolvable:$true] %s1535
      %1538 = dma.vmem_to_hbm [thread:$0]  %s1534, 16, %s1536, [#allocation4]
    $region45: #{discriminator_forward.15} parent=1 // pred_fallthru
      _
    // Predicated region
    $region46: #{discriminator_forward.15} parent=1 // pred_check
      _
    $region47: #{discriminator_forward.15} parent=1 // pred_check_branch
      %1540 = sbr.rel (0) target = $region49
    $region48: #{discriminator_forward.15} parent=1 // pred_region
      %1542 = dma.done [#allocation4], 16
    $region49: #{discriminator_forward.15} parent=1 // pred_fallthru
      _
    %1543 = vsyncpa [#allocation4], 1

</llo_original>
